<compile_context>
chip_gen: v5e
topology: v5e:2x2
jax: 0.10.0
libtpu: 0.0.40
codegen_flags: <defaults>
</compile_context>

<pallas_src>
import functools

import jax
import jax.numpy as jnp
from jax import lax
from jax.experimental import pallas as pl
from jax.experimental.pallas import tpu as pltpu
from jax.scipy.special import erf as _jax_erf

# config dict referenced by the PyTorch module
CONFIG = dict(rand_feat_dim_ratio=2, lam=0.1, num_step=3)


# ----------------------------- small math helpers -----------------------------
def _sign(x):
    one = jnp.ones_like(x)
    return jnp.where(x > 0, one, jnp.where(x < 0, -one, jnp.zeros_like(x)))


def _gelu_tanh(z):
    # tanh-form GELU (|err| vs exact erf-GELU ~1e-3, well inside test tolerance);
    # tanh runs on the EUP slot, keeping the VALU free.
    c = 0.7978845608028654  # sqrt(2/pi)
    return 0.5 * z * (1.0 + jnp.tanh(c * (z + 0.044715 * z * z * z)))


def _soft_threshold_gelu(x, thresh):
    # sign(x) * gelu(|x| - thresh)
    return _sign(x) * _gelu_tanh(jnp.abs(x) - thresh)


def _round_up(x, mult):
    return ((x + mult - 1) // mult) * mult


def _vmem_limit_bytes():
    # Size the scoped-VMEM limit per generation (64 MiB / TC on v7x, 128 MiB on
    # v5e/v6e) with headroom for compiler scratch.
    cap = 64 * 1024 * 1024
    try:
        info = pltpu.get_tpu_info()
        cap = int(getattr(info, "vmem_capacity_bytes", cap))
    except Exception:
        pass
    return max(32 * 1024 * 1024, int(cap * 0.7))


# ----------------------------- tiled linear (matmul) ---------------------------
def _matmul_kernel(*refs, add_bias):
    if add_bias:
        x_ref, w_ref, b_ref, o_ref, acc_ref = refs
    else:
        x_ref, w_ref, o_ref, acc_ref = refs
        b_ref = None
    k = pl.program_id(2)

    @pl.when(k == 0)
    def _init():
        acc_ref[...] = jnp.zeros_like(acc_ref)

    # inputs are already bf16 (cast once in the wrapper); f32 accumulation
    acc_ref[...] += jnp.dot(x_ref[...], w_ref[...],
                            preferred_element_type=jnp.float32)

    @pl.when(k == pl.num_programs(2) - 1)
    def _store():
        out = acc_ref[...]
        if add_bias:
            out = out + b_ref[...]
        o_ref[...] = out.astype(o_ref.dtype)


def linear_pallas(x2d, w, b=None, *, out_dtype=jnp.float32, vmem_limit=None):
    """y = x2d @ w (+ b). Tiled & pipelined, bf16 MXU inputs, f32 accumulation."""
    M, K = x2d.shape
    N = w.shape[1]

    # cast once in the wrapper (halves A/W HBM traffic and VMEM footprint)
    a = x2d if x2d.dtype == jnp.bfloat16 else x2d.astype(jnp.bfloat16)
    w_bf = w if w.dtype == jnp.bfloat16 else w.astype(jnp.bfloat16)

    # Tile choice: full dim if small (full-dim blocks are always legal), else a
    # fixed (8,128)-aligned cap; pad the operands so the tiles always divide.
    tm = M if M <= 256 else 256
    tn = N if N <= 256 else 256
    tk = K if K <= 512 else 512
    Mp, Np, Kp = _round_up(M, tm), _round_up(N, tn), _round_up(K, tk)

    if (Mp, Kp) != (M, K):
        a = jnp.pad(a, ((0, Mp - M), (0, Kp - K)))
    if (Kp, Np) != (K, N):
        w_bf = jnp.pad(w_bf, ((0, Kp - K), (0, Np - N)))

    add_bias = b is not None
    in_specs = [
        pl.BlockSpec((tm, tk), lambda i, j, k: (i, k)),
        pl.BlockSpec((tk, tn), lambda i, j, k: (k, j)),
    ]
    args = [a, w_bf]
    if add_bias:
        bb = b.reshape(1, N).astype(jnp.float32)
        if Np != N:
            bb = jnp.pad(bb, ((0, 0), (0, Np - N)))
        in_specs.append(pl.BlockSpec((1, tn), lambda i, j, k: (0, j)))
        args.append(bb)

    flops = 2 * Mp * Kp * Np
    bytes_accessed = (Mp * Kp * 2 + Kp * Np * 2
                      + Mp * Np * jnp.dtype(out_dtype).itemsize
                      + (Np * 4 if add_bias else 0))

    out = pl.pallas_call(
        functools.partial(_matmul_kernel, add_bias=add_bias),
        out_shape=jax.ShapeDtypeStruct((Mp, Np), out_dtype),
        grid=(Mp // tm, Np // tn, Kp // tk),
        in_specs=in_specs,
        out_specs=pl.BlockSpec((tm, tn), lambda i, j, k: (i, j)),
        scratch_shapes=[pltpu.VMEM((tm, tn), jnp.float32)],
        compiler_params=pltpu.CompilerParams(
            dimension_semantics=("parallel", "parallel", "arbitrary"),
            vmem_limit_bytes=vmem_limit),
        cost_estimate=pl.CostEstimate(flops=int(flops), transcendentals=0,
                                      bytes_accessed=int(bytes_accessed)),
    )(*args)

    if (Mp, Np) != (M, N):
        out = out[:M, :N]
    return out


# ----------------------------- VARS attention core -----------------------------
def _attn_heads(scal_ref, q_ref, v_ref, rand_ref, lk_ref, *, hpb, head_dim,
                q_base, v_base, scale_sqrt, m_feat, num_step):
    """Process `hpb` heads; returns (N, hpb*head_dim) f32 to be stored once."""
    learned_lam = scal_ref[0]
    learned_L_param = scal_ref[1]
    lam = scal_ref[2]
    lam_learned = learned_lam * lam
    inv_sqrt_m = 1.0 / (m_feat ** 0.5)

    lk_bf = lk_ref[...]                          # (m, m) bf16, hoisted

    outs = []
    for hh in range(hpb):
        q = q_ref[:, q_base + hh * head_dim:
                  q_base + (hh + 1) * head_dim].astype(jnp.float32)
        v_bf = v_ref[:, v_base + hh * head_dim:
                     v_base + (hh + 1) * head_dim]                # (N, hd) bf16
        rand_bf = rand_ref[hh]                                    # (hd, m) bf16

        # ---- to_random_feature(q * scale**0.5, m, rand_matrix) ----
        xq = q * scale_sqrt
        sumsq = jnp.sum(xq * xq, axis=-1, keepdims=True)
        inv_nrm = lax.rsqrt(jnp.maximum(sumsq, 1e-24))   # == 1/max(||x||, 1e-12)
        xn = xq * inv_nrm                                # F.normalize(dim=-1)
        nrm2 = sumsq * (inv_nrm * inv_nrm)               # ||xn||^2 (reuses sumsq)
        projf = jnp.dot(xn.astype(jnp.bfloat16), rand_bf,
                        preferred_element_type=jnp.float32)       # (N, m)
        feat = jnp.exp(projf - nrm2 * 0.5) * inv_sqrt_m

        # ---- F.normalize(q, p=2, dim=-2): normalize over the sequence axis ----
        col_sumsq = jnp.sum(feat * feat, axis=0, keepdims=True)
        qf = feat * lax.rsqrt(jnp.maximum(col_sumsq, 1e-24))      # (N, m)
        qf_bf = qf.astype(jnp.bfloat16)

        # ---- kk = q^T k ; input = k^T v ----
        kk = lax.dot_general(qf_bf, qf_bf, (((0,), (0,)), ((), ())),
                             preferred_element_type=jnp.float32)  # (m, m)
        inp = lax.dot_general(qf_bf, v_bf, (((0,), (0,)), ((), ())),
                              preferred_element_type=jnp.float32)  # (m, hd)

        # ---- att_func ----
        row_l1 = jnp.sum(jnp.abs(kk), axis=-1, keepdims=True)
        L = jnp.max(row_l1) + 1.0
        learned_L = L / learned_L_param
        inv_L = 1.0 / learned_L                  # hoisted scalar reciprocal
        thresh = lam_learned * inv_L             # hoisted loop threshold

        kk_half = jnp.dot(lk_bf, kk.astype(jnp.bfloat16),
                          preferred_element_type=jnp.float32)
        kk_l = jnp.dot(kk_half.astype(jnp.bfloat16), lk_bf,
                       preferred_element_type=jnp.float32)        # (m, m)
        # fold 1/L into the operands: xs <- xs - (kk_l/L) @ xs + inp/L
        kk_l_scaled_bf = (kk_l * inv_L).astype(jnp.bfloat16)
        inp_scaled = inp * inv_L

        xs = _soft_threshold_gelu(inp, lam_learned)
        for _ in range(num_step):
            xs = xs - jnp.dot(kk_l_scaled_bf, xs.astype(jnp.bfloat16),
                              preferred_element_type=jnp.float32) + inp_scaled
            xs = _soft_threshold_gelu(xs, thresh)

        # ---- x = q @ sparse_recon ----
        out_h = jnp.dot(qf_bf, xs.astype(jnp.bfloat16),
                        preferred_element_type=jnp.float32)       # (N, hd)
        outs.append(out_h)

    if len(outs) == 1:
        return outs[0]
    return jnp.concatenate(outs, axis=-1)        # single lane-dense slab


def _vars_attn_kernel_blocked(scal_ref, q_ref, v_ref, rand_ref, lk_ref, o_ref, *,
                              hpb, head_dim, scale_sqrt, m_feat, num_step):
    out = _attn_heads(scal_ref, q_ref, v_ref, rand_ref, lk_ref,
                      hpb=hpb, head_dim=head_dim, q_base=0, v_base=0,
                      scale_sqrt=scale_sqrt, m_feat=m_feat, num_step=num_step)
    o_ref[...] = out.astype(o_ref.dtype)         # one lane-dense store


def _vars_attn_kernel_full(scal_ref, qkv_ref, rand_ref, lk_ref, o_ref, *,
                           num_heads, head_dim, dim, scale_sqrt, m_feat,
                           num_step):
    out = _attn_heads(scal_ref, qkv_ref, qkv_ref, rand_ref, lk_ref,
                      hpb=num_heads, head_dim=head_dim, q_base=0, v_base=dim,
                      scale_sqrt=scale_sqrt, m_feat=m_feat, num_step=num_step)
    o_ref[...] = out.astype(o_ref.dtype)         # one lane-dense (N, C) store


def _pick_head_block(H, hd):
    # smallest divisor hpb of H whose channel block (hpb*hd) is lane-dense
    for hpb in range(1, H + 1):
        if H % hpb == 0 and (hpb * hd) % 128 == 0:
            return hpb
    return None


# ----------------------------- full forward ------------------------------------
def vars_d_forward(x, params, num_heads, config=CONFIG):
    B, N, C = x.shape
    H = num_heads
    hd = C // H
    m = params["rand_matrix"].shape[-1]
    scale = hd ** (-0.5)            # qk_scale default
    num_step = int(config["num_step"])
    vmem_limit = _vmem_limit_bytes()

    # qkv linear (no bias); bf16 output halves the attention-input DMA.
    qkv = linear_pallas(x.reshape(B * N, C), params["w_qkv"], None,
                        out_dtype=jnp.bfloat16, vmem_limit=vmem_limit)
    qkv = qkv.reshape(B, N, 2 * C)               # free reshape, no transpose

    scalars = jnp.concatenate([
        params["learned_lam"].reshape(-1),
        params["learned_L"].reshape(-1),
        jnp.array([config["lam"]], jnp.float32),
    ]).astype(jnp.float32)

    rand_bf = params["rand_matrix"].astype(jnp.bfloat16)   # cast once
    lk_bf = params["learned_k"].astype(jnp.bfloat16)       # cast once

    scale_sqrt = float(scale ** 0.5)
    flops = 2 * B * H * (N * hd * m + N * m * m + N * m * hd
                         + 2 * m * m * m + num_step * m * m * hd + N * m * hd)
    transcendentals = B * H * (N * m + (1 + num_step) * m * hd + 2 * N)
    bytes_accessed = (B * N * 2 * C * 2           # qkv (bf16)
                      + B * N * C * 2             # output (bf16)
                      + H * hd * m * 2 + m * m * 2 + 3 * 4)
    cost = pl.CostEstimate(flops=int(flops), transcendentals=int(transcendentals),
                           bytes_accessed=int(bytes_accessed))

    hpb = _pick_head_block(H, hd)
    if hpb is not None:
        # Head-group grid: lane-dense per-group blocks, both axes parallel
        # (finer granularity for the v7x megacore sharder).
        HB = H // hpb
        cw = hpb * hd
        kern = functools.partial(
            _vars_attn_kernel_blocked, hpb=hpb, head_dim=hd,
            scale_sqrt=scale_sqrt, m_feat=float(m), num_step=num_step)
        attn = pl.pallas_call(
            kern,
            out_shape=jax.ShapeDtypeStruct((B, N, C), jnp.bfloat16),
            grid=(B, HB),
            in_specs=[
                pl.BlockSpec(memory_space=pltpu.MemorySpace.SMEM),       # scalars
                pl.BlockSpec((None, N, cw), lambda b, g: (b, 0, g)),     # q group
                pl.BlockSpec((None, N, cw), lambda b, g: (b, 0, HB + g)),  # v group
                pl.BlockSpec((hpb, hd, m), lambda b, g: (g, 0, 0)),      # rand
                pl.BlockSpec((m, m), lambda b, g: (0, 0)),               # learned_k
            ],
            out_specs=pl.BlockSpec((None, N, cw), lambda b, g: (b, 0, g)),
            compiler_params=pltpu.CompilerParams(
                dimension_semantics=("parallel", "parallel"),
                vmem_limit_bytes=vmem_limit),
            cost_estimate=cost,
        )(scalars, qkv, qkv, rand_bf, lk_bf)
    else:
        # Fallback (tiny C): full (N, 2C) slab per batch, single (N, C) store.
        kern = functools.partial(
            _vars_attn_kernel_full, num_heads=H, head_dim=hd, dim=C,
            scale_sqrt=scale_sqrt, m_feat=float(m), num_step=num_step)
        attn = pl.pallas_call(
            kern,
            out_shape=jax.ShapeDtypeStruct((B, N, C), jnp.bfloat16),
            grid=(B,),
            in_specs=[
                pl.BlockSpec(memory_space=pltpu.MemorySpace.SMEM),       # scalars
                pl.BlockSpec((None, N, 2 * C), lambda b: (b, 0, 0)),     # qkv
                pl.BlockSpec((H, hd, m), lambda b: (0, 0, 0)),           # rand
                pl.BlockSpec((m, m), lambda b: (0, 0)),                  # learned_k
            ],
            out_specs=pl.BlockSpec((None, N, C), lambda b: (b, 0, 0)),
            compiler_params=pltpu.CompilerParams(
                dimension_semantics=("parallel",),
                vmem_limit_bytes=vmem_limit),
            cost_estimate=cost,
        )(scalars, qkv, rand_bf, lk_bf)

    out = attn.reshape(B * N, C)                 # free reshape, no transpose
    out = linear_pallas(out, params["w_proj"], params["b_proj"],
                        out_dtype=jnp.float32, vmem_limit=vmem_limit)
    return out.reshape(B, N, C)


# ----------------------------- pure-JAX reference ------------------------------
def ref_forward(x, params, num_heads, config=CONFIG):
    B, N, C = x.shape
    H = num_heads
    hd = C // H
    m = params["rand_matrix"].shape[-1]
    scale = hd ** (-0.5)

    qkv = x.reshape(B * N, C) @ params["w_qkv"]
    qkv = qkv.reshape(B, N, 2, H, hd).transpose(2, 0, 3, 1, 4)
    q, v = qkv[0], qkv[1]

    xq = q * scale ** 0.5
    nrm = jnp.sqrt(jnp.sum(xq * xq, -1, keepdims=True))
    xn = xq / jnp.maximum(nrm, 1e-12)
    projf = jnp.einsum("bhnd,hdm->bhnm", xn, params["rand_matrix"])
    feat = jnp.exp(projf - jnp.sum(xn * xn, -1, keepdims=True) / 2) / m ** 0.5
    coln = jnp.sqrt(jnp.sum(feat * feat, -2, keepdims=True))
    qf = feat / jnp.maximum(coln, 1e-12)

    kk = jnp.einsum("bhnm,bhnk->bhmk", qf, qf)
    inp = jnp.einsum("bhnm,bhnd->bhmd", qf, v)

    L = jnp.max(jnp.sum(jnp.abs(kk), -1), -1)[..., None, None] + 1.0
    lam_learned = params["learned_lam"] * config["lam"]
    learned_L = L / params["learned_L"]
    lk = params["learned_k"]
    kk_l = jnp.einsum("ij,bhjk->bhik", lk, kk)
    kk_l = jnp.einsum("bhik,kl->bhil", kk_l, lk)

    gelu = lambda z: 0.5 * z * (1.0 + _jax_erf(z / jnp.sqrt(jnp.float32(2.0))))
    xs = _sign(inp) * gelu(jnp.abs(inp) - lam_learned)
    for _ in range(config["num_step"]):
        xs = xs - (jnp.einsum("bhij,bhjd->bhid", kk_l, xs) - inp) / learned_L
        xs = _sign(xs) * gelu(jnp.abs(xs) - lam_learned / learned_L)

    out = jnp.einsum("bhnm,bhmd->bhnd", qf, xs)
    out = out.transpose(0, 2, 1, 3).reshape(B, N, C)
    return out @ params["w_proj"] + params["b_proj"]


# ----------------------------- main ---------------------------------------------
if __name__ == "__main__":
    B, N, C = 2, 8, 32
    H = 4
    hd = C // H
    m = hd * CONFIG["rand_feat_dim_ratio"]

    key = jax.random.PRNGKey(0)
    k1, k2, k3, k4, kx = jax.random.split(key, 5)

    params = dict(
        w_qkv=jax.random.normal(k1, (C, 2 * C), jnp.float32) / (C ** 0.5),
        w_proj=jax.random.normal(k2, (C, C), jnp.float32) / (C ** 0.5),
        b_proj=jax.random.normal(k3, (C,), jnp.float32) * 0.01,
        rand_matrix=jax.random.normal(k4, (H, hd, m), jnp.float32),
        learned_k=jnp.eye(m, dtype=jnp.float32),
        learned_lam=jnp.ones((1,), jnp.float32),
        learned_L=jnp.ones((1,), jnp.float32),
    )
    x = jax.random.normal(kx, (B, N, C), jnp.float32)

    fwd = jax.jit(functools.partial(vars_d_forward, num_heads=H))
    out = jax.block_until_ready(fwd(x, params))

    ref = ref_forward(x, params, H)
    assert out.shape == (B, N, C)
    assert bool(jnp.all(jnp.isfinite(out)))
    # Normalized max-error check: kernel uses bf16 MXU inputs + bf16 attention
    # output + tanh-GELU; the reference is full f32 with exact erf-GELU.
    err = float(jnp.max(jnp.abs(out - ref)))
    ref_scale = float(jnp.max(jnp.abs(ref)))
    assert err <= 5e-2 * ref_scale + 5e-3, (err, ref_scale)

    print("KERNEL_OK")
</pallas_src>

<mosaic_0001>
module attributes {stable_mosaic.version = 11 : i64} {
  func.func @_matmul_kernel(%arg0: i32, %arg1: i32, %arg2: i32, %arg3: memref<16x32xbf16, #tpu.memory_space<vmem>>, %arg4: memref<32x64xbf16, #tpu.memory_space<vmem>>, %arg5: memref<16x64xbf16, #tpu.memory_space<vmem>>, %arg6: memref<16x64xf32, #tpu.memory_space<vmem>>) attributes {dimension_semantics = [#tpu.dimension_semantics<parallel>, #tpu.dimension_semantics<parallel>, #tpu.dimension_semantics<arbitrary>], iteration_bounds = array<i64: 1, 1, 1>, scalar_prefetch = 0 : i64, scratch_operands = 1 : i64, tpu.core_type = #tpu.core_type<tc>, window_params = [{transform_indices = @transform_0, window_bounds = array<i64: 16, 32>}, {transform_indices = @transform_1, window_bounds = array<i64: 32, 64>}, {transform_indices = @transform_2, window_bounds = array<i64: 16, 64>}]} {
    %c0_i32 = arith.constant 0 : i32
    %0 = arith.cmpi eq, %arg2, %c0_i32 : i32
    %1 = arith.extui %0 : i1 to i32
    %c0_i32_0 = arith.constant 0 : i32
    %2 = arith.cmpi ne, %1, %c0_i32_0 : i32
    scf.if %2 {
      %cst_10 = arith.constant 0.000000e+00 : f32
      %12 = vector.broadcast %cst_10 : f32 to vector<16x64xf32>
      %c0_11 = arith.constant 0 : index
      %c0_12 = arith.constant 0 : index
      %13 = vector.load %arg6[%c0_11, %c0_12] : memref<16x64xf32, #tpu.memory_space<vmem>>, vector<16x64xf32>
      tpu.vector_store %arg6[%c0_11, %c0_12], %12 {strides = array<i32>} : memref<16x64xf32, #tpu.memory_space<vmem>>, vector<16x64xf32>,
    } else {
    }
    %c0 = arith.constant 0 : index
    %c0_1 = arith.constant 0 : index
    %3 = vector.load %arg6[%c0, %c0_1] : memref<16x64xf32, #tpu.memory_space<vmem>>, vector<16x64xf32>
    %c0_2 = arith.constant 0 : index
    %c0_3 = arith.constant 0 : index
    %4 = vector.load %arg3[%c0_2, %c0_3] : memref<16x32xbf16, #tpu.memory_space<vmem>>, vector<16x32xbf16>
    %c0_4 = arith.constant 0 : index
    %c0_5 = arith.constant 0 : index
    %5 = vector.load %arg4[%c0_4, %c0_5] : memref<32x64xbf16, #tpu.memory_space<vmem>>, vector<32x64xbf16>
    %cst = arith.constant dense<0.000000e+00> : vector<16x64xf32>
    %6 = tpu.matmul %4, %5, %cst {dimension_numbers = #tpu.dot_dimension_numbers<[1], [0], [0], [1], [0, 0, 1, 1], [], []>} : vector<16x32xbf16>, vector<32x64xbf16>, vector<16x64xf32> -> vector<16x64xf32>
    %7 = arith.addf %3, %6 : vector<16x64xf32>
    %c0_6 = arith.constant 0 : index
    %c0_7 = arith.constant 0 : index
    %8 = vector.load %arg6[%c0_6, %c0_7] : memref<16x64xf32, #tpu.memory_space<vmem>>, vector<16x64xf32>
    tpu.vector_store %arg6[%c0_6, %c0_7], %7 {strides = array<i32>} : memref<16x64xf32, #tpu.memory_space<vmem>>, vector<16x64xf32>,
    %c0_i32_8 = arith.constant 0 : i32
    %9 = arith.cmpi eq, %arg2, %c0_i32_8 : i32
    %10 = arith.extui %9 : i1 to i32
    %c0_i32_9 = arith.constant 0 : i32
    %11 = arith.cmpi ne, %10, %c0_i32_9 : i32
    scf.if %11 {
      %c0_10 = arith.constant 0 : index
      %c0_11 = arith.constant 0 : index
      %12 = vector.load %arg6[%c0_10, %c0_11] : memref<16x64xf32, #tpu.memory_space<vmem>>, vector<16x64xf32>
      %13 = arith.truncf %12 : vector<16x64xf32> to vector<16x64xbf16>
      %c0_12 = arith.constant 0 : index
      %c0_13 = arith.constant 0 : index
      %14 = vector.load %arg5[%c0_12, %c0_13] : memref<16x64xbf16, #tpu.memory_space<vmem>>, vector<16x64xbf16>
      tpu.vector_store %arg5[%c0_12, %c0_13], %13 {strides = array<i32>} : memref<16x64xbf16, #tpu.memory_space<vmem>>, vector<16x64xbf16>,
    } else {
    }
    return
  }
  func.func @transform_0(%arg0: i32, %arg1: i32, %arg2: i32) -> (i32, i32) {
    %c0_i32 = arith.constant 0 : i32
    return %arg0, %arg2 : i32, i32
  }
  func.func @transform_1(%arg0: i32, %arg1: i32, %arg2: i32) -> (i32, i32) {
    %c0_i32 = arith.constant 0 : i32
    return %arg2, %arg1 : i32, i32
  }
  func.func @transform_2(%arg0: i32, %arg1: i32, %arg2: i32) -> (i32, i32) {
    %c0_i32 = arith.constant 0 : i32
    return %arg0, %arg1 : i32, i32
  }
}

module attributes {stable_mosaic.version = 11 : i64} {
  func.func @_matmul_kernel(%arg0: i32, %arg1: i32, %arg2: i32, %arg3: memref<16x32xbf16, #tpu.memory_space<vmem>>, %arg4: memref<32x32xbf16, #tpu.memory_space<vmem>>, %arg5: memref<1x32xf32, #tpu.memory_space<vmem>>, %arg6: memref<16x32xf32, #tpu.memory_space<vmem>>, %arg7: memref<16x32xf32, #tpu.memory_space<vmem>>) attributes {dimension_semantics = [#tpu.dimension_semantics<parallel>, #tpu.dimension_semantics<parallel>, #tpu.dimension_semantics<arbitrary>], iteration_bounds = array<i64: 1, 1, 1>, scalar_prefetch = 0 : i64, scratch_operands = 1 : i64, tpu.core_type = #tpu.core_type<tc>, window_params = [{transform_indices = @transform_0, window_bounds = array<i64: 16, 32>}, {transform_indices = @transform_1, window_bounds = array<i64: 32, 32>}, {transform_indices = @transform_2, window_bounds = array<i64: 1, 32>}, {transform_indices = @transform_3, window_bounds = array<i64: 16, 32>}]} {
    %c0_i32 = arith.constant 0 : i32
    %0 = arith.cmpi eq, %arg2, %c0_i32 : i32
    %1 = arith.extui %0 : i1 to i32
    %c0_i32_0 = arith.constant 0 : i32
    %2 = arith.cmpi ne, %1, %c0_i32_0 : i32
    scf.if %2 {
      %cst_10 = arith.constant 0.000000e+00 : f32
      %12 = vector.broadcast %cst_10 : f32 to vector<16x32xf32>
      %c0_11 = arith.constant 0 : index
      %c0_12 = arith.constant 0 : index
      %13 = vector.load %arg7[%c0_11, %c0_12] : memref<16x32xf32, #tpu.memory_space<vmem>>, vector<16x32xf32>
      tpu.vector_store %arg7[%c0_11, %c0_12], %12 {strides = array<i32>} : memref<16x32xf32, #tpu.memory_space<vmem>>, vector<16x32xf32>,
    } else {
    }
    %c0 = arith.constant 0 : index
    %c0_1 = arith.constant 0 : index
    %3 = vector.load %arg7[%c0, %c0_1] : memref<16x32xf32, #tpu.memory_space<vmem>>, vector<16x32xf32>
    %c0_2 = arith.constant 0 : index
    %c0_3 = arith.constant 0 : index
    %4 = vector.load %arg3[%c0_2, %c0_3] : memref<16x32xbf16, #tpu.memory_space<vmem>>, vector<16x32xbf16>
    %c0_4 = arith.constant 0 : index
    %c0_5 = arith.constant 0 : index
    %5 = vector.load %arg4[%c0_4, %c0_5] : memref<32x32xbf16, #tpu.memory_space<vmem>>, vector<32x32xbf16>
    %cst = arith.constant dense<0.000000e+00> : vector<16x32xf32>
    %6 = tpu.matmul %4, %5, %cst {dimension_numbers = #tpu.dot_dimension_numbers<[1], [0], [0], [1], [0, 0, 1, 1], [], []>} : vector<16x32xbf16>, vector<32x32xbf16>, vector<16x32xf32> -> vector<16x32xf32>
    %7 = arith.addf %3, %6 : vector<16x32xf32>
    %c0_6 = arith.constant 0 : index
    %c0_7 = arith.constant 0 : index
    %8 = vector.load %arg7[%c0_6, %c0_7] : memref<16x32xf32, #tpu.memory_space<vmem>>, vector<16x32xf32>
    tpu.vector_store %arg7[%c0_6, %c0_7], %7 {strides = array<i32>} : memref<16x32xf32, #tpu.memory_space<vmem>>, vector<16x32xf32>,
    %c0_i32_8 = arith.constant 0 : i32
    %9 = arith.cmpi eq, %arg2, %c0_i32_8 : i32
    %10 = arith.extui %9 : i1 to i32
    %c0_i32_9 = arith.constant 0 : i32
    %11 = arith.cmpi ne, %10, %c0_i32_9 : i32
    scf.if %11 {
      %c0_10 = arith.constant 0 : index
      %c0_11 = arith.constant 0 : index
      %12 = vector.load %arg7[%c0_10, %c0_11] : memref<16x32xf32, #tpu.memory_space<vmem>>, vector<16x32xf32>
      %c0_12 = arith.constant 0 : index
      %c0_13 = arith.constant 0 : index
      %13 = vector.load %arg5[%c0_12, %c0_13] : memref<1x32xf32, #tpu.memory_space<vmem>>, vector<1x32xf32>
      %14 = vector.broadcast %13 : vector<1x32xf32> to vector<16x32xf32>
      %15 = arith.addf %12, %14 : vector<16x32xf32>
      %c0_14 = arith.constant 0 : index
      %c0_15 = arith.constant 0 : index
      %16 = vector.load %arg6[%c0_14, %c0_15] : memref<16x32xf32, #tpu.memory_space<vmem>>, vector<16x32xf32>
      tpu.vector_store %arg6[%c0_14, %c0_15], %15 {strides = array<i32>} : memref<16x32xf32, #tpu.memory_space<vmem>>, vector<16x32xf32>,
    } else {
    }
    return
  }
  func.func @transform_0(%arg0: i32, %arg1: i32, %arg2: i32) -> (i32, i32) {
    %c0_i32 = arith.constant 0 : i32
    return %arg0, %arg2 : i32, i32
  }
  func.func @transform_1(%arg0: i32, %arg1: i32, %arg2: i32) -> (i32, i32) {
    %c0_i32 = arith.constant 0 : i32
    return %arg2, %arg1 : i32, i32
  }
  func.func @transform_2(%arg0: i32, %arg1: i32, %arg2: i32) -> (i32, i32) {
    %c0_i32 = arith.constant 0 : i32
    %c0_i32_0 = arith.constant 0 : i32
    return %c0_i32, %arg1 : i32, i32
  }
  func.func @transform_3(%arg0: i32, %arg1: i32, %arg2: i32) -> (i32, i32) {
    %c0_i32 = arith.constant 0 : i32
    return %arg0, %arg1 : i32, i32
  }
}

module attributes {stable_mosaic.version = 11 : i64} {
  func.func @_vars_attn_kernel_full(%arg0: i32, %arg1: memref<3xf32, #tpu.memory_space<smem>>, %arg2: memref<1x8x64xbf16, #tpu.memory_space<vmem>>, %arg3: memref<4x8x16xbf16, #tpu.memory_space<vmem>>, %arg4: memref<16x16xbf16, #tpu.memory_space<vmem>>, %arg5: memref<1x8x32xbf16, #tpu.memory_space<vmem>>) attributes {dimension_semantics = [#tpu.dimension_semantics<parallel>], iteration_bounds = array<i64: 2>, scalar_prefetch = 0 : i64, scratch_operands = 0 : i64, tpu.core_type = #tpu.core_type<tc>, window_params = [{transform_indices = @transform_0, window_bounds = array<i64: 3>}, {transform_indices = @transform_1, window_bounds = array<i64: 1, 8, 64>}, {pipeline_mode = #tpu.pipeline_mode<synchronous>, transform_indices = @transform_2, window_bounds = array<i64: 4, 8, 16>}, {pipeline_mode = #tpu.pipeline_mode<synchronous>, transform_indices = @transform_3, window_bounds = array<i64: 16, 16>}, {transform_indices = @transform_4, window_bounds = array<i64: 1, 8, 32>}]} {
    %c0 = arith.constant 0 : index
    %0 = memref.load %arg1[%c0] : memref<3xf32, #tpu.memory_space<smem>>
    %c1 = arith.constant 1 : index
    %1 = memref.load %arg1[%c1] : memref<3xf32, #tpu.memory_space<smem>>
    %c2 = arith.constant 2 : index
    %2 = memref.load %arg1[%c2] : memref<3xf32, #tpu.memory_space<smem>>
    %3 = arith.mulf %0, %2 : f32
    %c0_0 = arith.constant 0 : index
    %c0_1 = arith.constant 0 : index
    %4 = vector.load %arg4[%c0_0, %c0_1] : memref<16x16xbf16, #tpu.memory_space<vmem>>, vector<16x16xbf16>
    %c0_2 = arith.constant 0 : index
    %c0_3 = arith.constant 0 : index
    %c0_4 = arith.constant 0 : index
    %5 = vector.load %arg2[%c0_2, %c0_3, %c0_4] : memref<1x8x64xbf16, #tpu.memory_space<vmem>>, vector<1x8x8xbf16>
    %6 = vector.shape_cast %5 : vector<1x8x8xbf16> to vector<8x8xbf16>
    %7 = arith.extf %6 : vector<8x8xbf16> to vector<8x8xf32>
    %c0_5 = arith.constant 0 : index
    %c0_6 = arith.constant 0 : index
    %c32 = arith.constant 32 : index
    %8 = vector.load %arg2[%c0_5, %c0_6, %c32] : memref<1x8x64xbf16, #tpu.memory_space<vmem>>, vector<1x8x8xbf16>
    %9 = vector.shape_cast %8 : vector<1x8x8xbf16> to vector<8x8xbf16>
    %c0_7 = arith.constant 0 : index
    %c0_8 = arith.constant 0 : index
    %c0_9 = arith.constant 0 : index
    %10 = vector.load %arg3[%c0_7, %c0_8, %c0_9] : memref<4x8x16xbf16, #tpu.memory_space<vmem>>, vector<1x8x16xbf16>
    %11 = vector.shape_cast %10 : vector<1x8x16xbf16> to vector<8x16xbf16>
    %cst = arith.constant 0.594603539 : f32
    %12 = vector.broadcast %cst : f32 to vector<8x8xf32>
    %13 = arith.mulf %7, %12 : vector<8x8xf32>
    %14 = arith.mulf %13, %13 : vector<8x8xf32>
    %cst_10 = arith.constant dense<0.000000e+00> : vector<8xf32>
    %15 = vector.multi_reduction <add>, %14, %cst_10 [1] : vector<8x8xf32> to vector<8xf32>
    %16 = vector.shape_cast %15 : vector<8xf32> to vector<8x1xf32>
    %cst_11 = arith.constant 1.000000e-24 : f32
    %17 = vector.broadcast %cst_11 : f32 to vector<8x1xf32>
    %18 = arith.maximumf %16, %17 : vector<8x1xf32>
    %19 = math.rsqrt %18 : vector<8x1xf32>
    %20 = vector.broadcast %19 : vector<8x1xf32> to vector<8x8xf32>
    %21 = arith.mulf %13, %20 : vector<8x8xf32>
    %22 = arith.mulf %19, %19 : vector<8x1xf32>
    %23 = arith.mulf %16, %22 : vector<8x1xf32>
    %24 = arith.truncf %21 : vector<8x8xf32> to vector<8x8xbf16>
    %cst_12 = arith.constant dense<0.000000e+00> : vector<8x16xf32>
    %25 = tpu.matmul %24, %11, %cst_12 {dimension_numbers = #tpu.dot_dimension_numbers<[1], [0], [0], [1], [0, 0, 1, 1], [], []>} : vector<8x8xbf16>, vector<8x16xbf16>, vector<8x16xf32> -> vector<8x16xf32>
    %cst_13 = arith.constant 5.000000e-01 : f32
    %26 = vector.broadcast %cst_13 : f32 to vector<8x1xf32>
    %27 = arith.mulf %23, %26 : vector<8x1xf32>
    %28 = vector.broadcast %27 : vector<8x1xf32> to vector<8x16xf32>
    %29 = arith.subf %25, %28 : vector<8x16xf32>
    %30 = math.exp %29 : vector<8x16xf32>
    %cst_14 = arith.constant 2.500000e-01 : f32
    %31 = vector.broadcast %cst_14 : f32 to vector<8x16xf32>
    %32 = arith.mulf %30, %31 : vector<8x16xf32>
    %33 = arith.mulf %32, %32 : vector<8x16xf32>
    %cst_15 = arith.constant dense<0.000000e+00> : vector<16xf32>
    %34 = vector.multi_reduction <add>, %33, %cst_15 [0] : vector<8x16xf32> to vector<16xf32>
    %35 = vector.shape_cast %34 : vector<16xf32> to vector<1x16xf32>
    %cst_16 = arith.constant 1.000000e-24 : f32
    %36 = vector.broadcast %cst_16 : f32 to vector<1x16xf32>
    %37 = arith.maximumf %35, %36 : vector<1x16xf32>
    %38 = math.rsqrt %37 : vector<1x16xf32>
    %39 = vector.broadcast %38 : vector<1x16xf32> to vector<8x16xf32>
    %40 = arith.mulf %32, %39 : vector<8x16xf32>
    %41 = arith.truncf %40 : vector<8x16xf32> to vector<8x16xbf16>
    %cst_17 = arith.constant dense<0.000000e+00> : vector<16x16xf32>
    %42 = tpu.matmul %41, %41, %cst_17 {dimension_numbers = #tpu.dot_dimension_numbers<[0], [0], [1], [1], [0, 1, 1, 1], [], []>} : vector<8x16xbf16>, vector<8x16xbf16>, vector<16x16xf32> -> vector<16x16xf32>
    %cst_18 = arith.constant dense<0.000000e+00> : vector<16x8xf32>
    %43 = tpu.matmul %41, %9, %cst_18 {dimension_numbers = #tpu.dot_dimension_numbers<[0], [0], [1], [1], [0, 1, 1, 1], [], []>} : vector<8x16xbf16>, vector<8x8xbf16>, vector<16x8xf32> -> vector<16x8xf32>
    %44 = math.absf %42 : vector<16x16xf32>
    %cst_19 = arith.constant dense<0.000000e+00> : vector<16xf32>
    %45 = vector.multi_reduction <add>, %44, %cst_19 [1] : vector<16x16xf32> to vector<16xf32>
    %46 = vector.shape_cast %45 : vector<16xf32> to vector<16x1xf32>
    %47 = vector.shape_cast %46 : vector<16x1xf32> to vector<1x16x1xf32>
    %cst_20 = arith.constant dense<0xFF800000> : vector<1xf32>
    %48 = vector.multi_reduction <maximumf>, %47, %cst_20 [1, 2] : vector<1x16x1xf32> to vector<1xf32>
    %49 = vector.shape_cast %48 : vector<1xf32> to vector<1x1x1xf32>
    %50 = vector.extract %49[0, 0, 0] : f32 from vector<1x1x1xf32>
    %cst_21 = arith.constant 1.000000e+00 : f32
    %51 = arith.addf %50, %cst_21 : f32
    %52 = arith.divf %51, %1 : f32
    %cst_22 = arith.constant 1.000000e+00 : f32
    %53 = arith.divf %cst_22, %52 : f32
    %54 = arith.mulf %3, %53 : f32
    %55 = arith.truncf %42 : vector<16x16xf32> to vector<16x16xbf16>
    %cst_23 = arith.constant dense<0.000000e+00> : vector<16x16xf32>
    %56 = tpu.matmul %4, %55, %cst_23 {dimension_numbers = #tpu.dot_dimension_numbers<[1], [0], [0], [1], [0, 0, 1, 1], [], []>} : vector<16x16xbf16>, vector<16x16xbf16>, vector<16x16xf32> -> vector<16x16xf32>
    %57 = arith.truncf %56 : vector<16x16xf32> to vector<16x16xbf16>
    %cst_24 = arith.constant dense<0.000000e+00> : vector<16x16xf32>
    %58 = tpu.matmul %57, %4, %cst_24 {dimension_numbers = #tpu.dot_dimension_numbers<[1], [0], [0], [1], [0, 0, 1, 1], [], []>} : vector<16x16xbf16>, vector<16x16xbf16>, vector<16x16xf32> -> vector<16x16xf32>
    %59 = vector.broadcast %53 : f32 to vector<16x16xf32>
    %60 = arith.mulf %58, %59 : vector<16x16xf32>
    %61 = arith.truncf %60 : vector<16x16xf32> to vector<16x16xbf16>
    %62 = vector.broadcast %53 : f32 to vector<16x8xf32>
    %63 = arith.mulf %43, %62 : vector<16x8xf32>
    %cst_25 = arith.constant 1.000000e+00 : f32
    %64 = vector.broadcast %cst_25 : f32 to vector<16x8xf32>
    %cst_26 = arith.constant 0.000000e+00 : f32
    %65 = vector.broadcast %cst_26 : f32 to vector<16x8xf32>
    %66 = arith.cmpf ogt, %43, %65 : vector<16x8xf32>
    %cst_27 = arith.constant 0.000000e+00 : f32
    %67 = vector.broadcast %cst_27 : f32 to vector<16x8xf32>
    %68 = arith.cmpf olt, %43, %67 : vector<16x8xf32>
    %cst_28 = arith.constant 0.000000e+00 : f32
    %69 = vector.broadcast %cst_28 : f32 to vector<16x8xf32>
    %70 = arith.subf %69, %64 : vector<16x8xf32>
    %cst_29 = arith.constant 0.000000e+00 : f32
    %71 = vector.broadcast %cst_29 : f32 to vector<16x8xf32>
    %72 = arith.select %68, %70, %71 : vector<16x8xi1>, vector<16x8xf32>
    %73 = arith.select %66, %64, %72 : vector<16x8xi1>, vector<16x8xf32>
    %74 = math.absf %43 : vector<16x8xf32>
    %75 = vector.broadcast %3 : f32 to vector<16x8xf32>
    %76 = arith.subf %74, %75 : vector<16x8xf32>
    %cst_30 = arith.constant 5.000000e-01 : f32
    %77 = vector.broadcast %cst_30 : f32 to vector<16x8xf32>
    %78 = arith.mulf %77, %76 : vector<16x8xf32>
    %cst_31 = arith.constant 4.471500e-02 : f32
    %79 = vector.broadcast %cst_31 : f32 to vector<16x8xf32>
    %80 = arith.mulf %79, %76 : vector<16x8xf32>
    %81 = arith.mulf %80, %76 : vector<16x8xf32>
    %82 = arith.mulf %81, %76 : vector<16x8xf32>
    %83 = arith.addf %76, %82 : vector<16x8xf32>
    %cst_32 = arith.constant 0.797884583 : f32
    %84 = vector.broadcast %cst_32 : f32 to vector<16x8xf32>
    %85 = arith.mulf %84, %83 : vector<16x8xf32>
    %86 = math.tanh %85 : vector<16x8xf32>
    %cst_33 = arith.constant 1.000000e+00 : f32
    %87 = vector.broadcast %cst_33 : f32 to vector<16x8xf32>
    %88 = arith.addf %87, %86 : vector<16x8xf32>
    %89 = arith.mulf %78, %88 : vector<16x8xf32>
    %90 = arith.mulf %73, %89 : vector<16x8xf32>
    %91 = arith.truncf %90 : vector<16x8xf32> to vector<16x8xbf16>
    %cst_34 = arith.constant dense<0.000000e+00> : vector<16x8xf32>
    %92 = tpu.matmul %61, %91, %cst_34 {dimension_numbers = #tpu.dot_dimension_numbers<[1], [0], [0], [1], [0, 0, 1, 1], [], []>} : vector<16x16xbf16>, vector<16x8xbf16>, vector<16x8xf32> -> vector<16x8xf32>
    %93 = arith.subf %90, %92 : vector<16x8xf32>
    %94 = arith.addf %93, %63 : vector<16x8xf32>
    %cst_35 = arith.constant 1.000000e+00 : f32
    %95 = vector.broadcast %cst_35 : f32 to vector<16x8xf32>
    %cst_36 = arith.constant 0.000000e+00 : f32
    %96 = vector.broadcast %cst_36 : f32 to vector<16x8xf32>
    %97 = arith.cmpf ogt, %94, %96 : vector<16x8xf32>
    %cst_37 = arith.constant 0.000000e+00 : f32
    %98 = vector.broadcast %cst_37 : f32 to vector<16x8xf32>
    %99 = arith.cmpf olt, %94, %98 : vector<16x8xf32>
    %cst_38 = arith.constant 0.000000e+00 : f32
    %100 = vector.broadcast %cst_38 : f32 to vector<16x8xf32>
    %101 = arith.subf %100, %95 : vector<16x8xf32>
    %cst_39 = arith.constant 0.000000e+00 : f32
    %102 = vector.broadcast %cst_39 : f32 to vector<16x8xf32>
    %103 = arith.select %99, %101, %102 : vector<16x8xi1>, vector<16x8xf32>
    %104 = arith.select %97, %95, %103 : vector<16x8xi1>, vector<16x8xf32>
    %105 = math.absf %94 : vector<16x8xf32>
    %106 = vector.broadcast %54 : f32 to vector<16x8xf32>
    %107 = arith.subf %105, %106 : vector<16x8xf32>
    %cst_40 = arith.constant 5.000000e-01 : f32
    %108 = vector.broadcast %cst_40 : f32 to vector<16x8xf32>
    %109 = arith.mulf %108, %107 : vector<16x8xf32>
    %cst_41 = arith.constant 4.471500e-02 : f32
    %110 = vector.broadcast %cst_41 : f32 to vector<16x8xf32>
    %111 = arith.mulf %110, %107 : vector<16x8xf32>
    %112 = arith.mulf %111, %107 : vector<16x8xf32>
    %113 = arith.mulf %112, %107 : vector<16x8xf32>
    %114 = arith.addf %107, %113 : vector<16x8xf32>
    %cst_42 = arith.constant 0.797884583 : f32
    %115 = vector.broadcast %cst_42 : f32 to vector<16x8xf32>
    %116 = arith.mulf %115, %114 : vector<16x8xf32>
    %117 = math.tanh %116 : vector<16x8xf32>
    %cst_43 = arith.constant 1.000000e+00 : f32
    %118 = vector.broadcast %cst_43 : f32 to vector<16x8xf32>
    %119 = arith.addf %118, %117 : vector<16x8xf32>
    %120 = arith.mulf %109, %119 : vector<16x8xf32>
    %121 = arith.mulf %104, %120 : vector<16x8xf32>
    %122 = arith.truncf %121 : vector<16x8xf32> to vector<16x8xbf16>
    %cst_44 = arith.constant dense<0.000000e+00> : vector<16x8xf32>
    %123 = tpu.matmul %61, %122, %cst_44 {dimension_numbers = #tpu.dot_dimension_numbers<[1], [0], [0], [1], [0, 0, 1, 1], [], []>} : vector<16x16xbf16>, vector<16x8xbf16>, vector<16x8xf32> -> vector<16x8xf32>
    %124 = arith.subf %121, %123 : vector<16x8xf32>
    %125 = arith.addf %124, %63 : vector<16x8xf32>
    %cst_45 = arith.constant 1.000000e+00 : f32
    %126 = vector.broadcast %cst_45 : f32 to vector<16x8xf32>
    %cst_46 = arith.constant 0.000000e+00 : f32
    %127 = vector.broadcast %cst_46 : f32 to vector<16x8xf32>
    %128 = arith.cmpf ogt, %125, %127 : vector<16x8xf32>
    %cst_47 = arith.constant 0.000000e+00 : f32
    %129 = vector.broadcast %cst_47 : f32 to vector<16x8xf32>
    %130 = arith.cmpf olt, %125, %129 : vector<16x8xf32>
    %cst_48 = arith.constant 0.000000e+00 : f32
    %131 = vector.broadcast %cst_48 : f32 to vector<16x8xf32>
    %132 = arith.subf %131, %126 : vector<16x8xf32>
    %cst_49 = arith.constant 0.000000e+00 : f32
    %133 = vector.broadcast %cst_49 : f32 to vector<16x8xf32>
    %134 = arith.select %130, %132, %133 : vector<16x8xi1>, vector<16x8xf32>
    %135 = arith.select %128, %126, %134 : vector<16x8xi1>, vector<16x8xf32>
    %136 = math.absf %125 : vector<16x8xf32>
    %137 = vector.broadcast %54 : f32 to vector<16x8xf32>
    %138 = arith.subf %136, %137 : vector<16x8xf32>
    %cst_50 = arith.constant 5.000000e-01 : f32
    %139 = vector.broadcast %cst_50 : f32 to vector<16x8xf32>
    %140 = arith.mulf %139, %138 : vector<16x8xf32>
    %cst_51 = arith.constant 4.471500e-02 : f32
    %141 = vector.broadcast %cst_51 : f32 to vector<16x8xf32>
    %142 = arith.mulf %141, %138 : vector<16x8xf32>
    %143 = arith.mulf %142, %138 : vector<16x8xf32>
    %144 = arith.mulf %143, %138 : vector<16x8xf32>
    %145 = arith.addf %138, %144 : vector<16x8xf32>
    %cst_52 = arith.constant 0.797884583 : f32
    %146 = vector.broadcast %cst_52 : f32 to vector<16x8xf32>
    %147 = arith.mulf %146, %145 : vector<16x8xf32>
    %148 = math.tanh %147 : vector<16x8xf32>
    %cst_53 = arith.constant 1.000000e+00 : f32
    %149 = vector.broadcast %cst_53 : f32 to vector<16x8xf32>
    %150 = arith.addf %149, %148 : vector<16x8xf32>
    %151 = arith.mulf %140, %150 : vector<16x8xf32>
    %152 = arith.mulf %135, %151 : vector<16x8xf32>
    %153 = arith.truncf %152 : vector<16x8xf32> to vector<16x8xbf16>
    %cst_54 = arith.constant dense<0.000000e+00> : vector<16x8xf32>
    %154 = tpu.matmul %61, %153, %cst_54 {dimension_numbers = #tpu.dot_dimension_numbers<[1], [0], [0], [1], [0, 0, 1, 1], [], []>} : vector<16x16xbf16>, vector<16x8xbf16>, vector<16x8xf32> -> vector<16x8xf32>
    %155 = arith.subf %152, %154 : vector<16x8xf32>
    %156 = arith.addf %155, %63 : vector<16x8xf32>
    %cst_55 = arith.constant 1.000000e+00 : f32
    %157 = vector.broadcast %cst_55 : f32 to vector<16x8xf32>
    %cst_56 = arith.constant 0.000000e+00 : f32
    %158 = vector.broadcast %cst_56 : f32 to vector<16x8xf32>
    %159 = arith.cmpf ogt, %156, %158 : vector<16x8xf32>
    %cst_57 = arith.constant 0.000000e+00 : f32
    %160 = vector.broadcast %cst_57 : f32 to vector<16x8xf32>
    %161 = arith.cmpf olt, %156, %160 : vector<16x8xf32>
    %cst_58 = arith.constant 0.000000e+00 : f32
    %162 = vector.broadcast %cst_58 : f32 to vector<16x8xf32>
    %163 = arith.subf %162, %157 : vector<16x8xf32>
    %cst_59 = arith.constant 0.000000e+00 : f32
    %164 = vector.broadcast %cst_59 : f32 to vector<16x8xf32>
    %165 = arith.select %161, %163, %164 : vector<16x8xi1>, vector<16x8xf32>
    %166 = arith.select %159, %157, %165 : vector<16x8xi1>, vector<16x8xf32>
    %167 = math.absf %156 : vector<16x8xf32>
    %168 = vector.broadcast %54 : f32 to vector<16x8xf32>
    %169 = arith.subf %167, %168 : vector<16x8xf32>
    %cst_60 = arith.constant 5.000000e-01 : f32
    %170 = vector.broadcast %cst_60 : f32 to vector<16x8xf32>
    %171 = arith.mulf %170, %169 : vector<16x8xf32>
    %cst_61 = arith.constant 4.471500e-02 : f32
    %172 = vector.broadcast %cst_61 : f32 to vector<16x8xf32>
    %173 = arith.mulf %172, %169 : vector<16x8xf32>
    %174 = arith.mulf %173, %169 : vector<16x8xf32>
    %175 = arith.mulf %174, %169 : vector<16x8xf32>
    %176 = arith.addf %169, %175 : vector<16x8xf32>
    %cst_62 = arith.constant 0.797884583 : f32
    %177 = vector.broadcast %cst_62 : f32 to vector<16x8xf32>
    %178 = arith.mulf %177, %176 : vector<16x8xf32>
    %179 = math.tanh %178 : vector<16x8xf32>
    %cst_63 = arith.constant 1.000000e+00 : f32
    %180 = vector.broadcast %cst_63 : f32 to vector<16x8xf32>
    %181 = arith.addf %180, %179 : vector<16x8xf32>
    %182 = arith.mulf %171, %181 : vector<16x8xf32>
    %183 = arith.mulf %166, %182 : vector<16x8xf32>
    %184 = arith.truncf %183 : vector<16x8xf32> to vector<16x8xbf16>
    %cst_64 = arith.constant dense<0.000000e+00> : vector<8x8xf32>
    %185 = tpu.matmul %41, %184, %cst_64 {dimension_numbers = #tpu.dot_dimension_numbers<[1], [0], [0], [1], [0, 0, 1, 1], [], []>} : vector<8x16xbf16>, vector<16x8xbf16>, vector<8x8xf32> -> vector<8x8xf32>
    %c0_65 = arith.constant 0 : index
    %c0_66 = arith.constant 0 : index
    %c8 = arith.constant 8 : index
    %186 = vector.load %arg2[%c0_65, %c0_66, %c8] : memref<1x8x64xbf16, #tpu.memory_space<vmem>>, vector<1x8x8xbf16>
    %187 = vector.shape_cast %186 : vector<1x8x8xbf16> to vector<8x8xbf16>
    %188 = arith.extf %187 : vector<8x8xbf16> to vector<8x8xf32>
    %c0_67 = arith.constant 0 : index
    %c0_68 = arith.constant 0 : index
    %c40 = arith.constant 40 : index
    %189 = vector.load %arg2[%c0_67, %c0_68, %c40] : memref<1x8x64xbf16, #tpu.memory_space<vmem>>, vector<1x8x8xbf16>
    %190 = vector.shape_cast %189 : vector<1x8x8xbf16> to vector<8x8xbf16>
    %c1_69 = arith.constant 1 : index
    %c0_70 = arith.constant 0 : index
    %c0_71 = arith.constant 0 : index
    %191 = vector.load %arg3[%c1_69, %c0_70, %c0_71] : memref<4x8x16xbf16, #tpu.memory_space<vmem>>, vector<1x8x16xbf16>
    %192 = vector.shape_cast %191 : vector<1x8x16xbf16> to vector<8x16xbf16>
    %cst_72 = arith.constant 0.594603539 : f32
    %193 = vector.broadcast %cst_72 : f32 to vector<8x8xf32>
    %194 = arith.mulf %188, %193 : vector<8x8xf32>
    %195 = arith.mulf %194, %194 : vector<8x8xf32>
    %cst_73 = arith.constant dense<0.000000e+00> : vector<8xf32>
    %196 = vector.multi_reduction <add>, %195, %cst_73 [1] : vector<8x8xf32> to vector<8xf32>
    %197 = vector.shape_cast %196 : vector<8xf32> to vector<8x1xf32>
    %cst_74 = arith.constant 1.000000e-24 : f32
    %198 = vector.broadcast %cst_74 : f32 to vector<8x1xf32>
    %199 = arith.maximumf %197, %198 : vector<8x1xf32>
    %200 = math.rsqrt %199 : vector<8x1xf32>
    %201 = vector.broadcast %200 : vector<8x1xf32> to vector<8x8xf32>
    %202 = arith.mulf %194, %201 : vector<8x8xf32>
    %203 = arith.mulf %200, %200 : vector<8x1xf32>
    %204 = arith.mulf %197, %203 : vector<8x1xf32>
    %205 = arith.truncf %202 : vector<8x8xf32> to vector<8x8xbf16>
    %cst_75 = arith.constant dense<0.000000e+00> : vector<8x16xf32>
    %206 = tpu.matmul %205, %192, %cst_75 {dimension_numbers = #tpu.dot_dimension_numbers<[1], [0], [0], [1], [0, 0, 1, 1], [], []>} : vector<8x8xbf16>, vector<8x16xbf16>, vector<8x16xf32> -> vector<8x16xf32>
    %cst_76 = arith.constant 5.000000e-01 : f32
    %207 = vector.broadcast %cst_76 : f32 to vector<8x1xf32>
    %208 = arith.mulf %204, %207 : vector<8x1xf32>
    %209 = vector.broadcast %208 : vector<8x1xf32> to vector<8x16xf32>
    %210 = arith.subf %206, %209 : vector<8x16xf32>
    %211 = math.exp %210 : vector<8x16xf32>
    %cst_77 = arith.constant 2.500000e-01 : f32
    %212 = vector.broadcast %cst_77 : f32 to vector<8x16xf32>
    %213 = arith.mulf %211, %212 : vector<8x16xf32>
    %214 = arith.mulf %213, %213 : vector<8x16xf32>
    %cst_78 = arith.constant dense<0.000000e+00> : vector<16xf32>
    %215 = vector.multi_reduction <add>, %214, %cst_78 [0] : vector<8x16xf32> to vector<16xf32>
    %216 = vector.shape_cast %215 : vector<16xf32> to vector<1x16xf32>
    %cst_79 = arith.constant 1.000000e-24 : f32
    %217 = vector.broadcast %cst_79 : f32 to vector<1x16xf32>
    %218 = arith.maximumf %216, %217 : vector<1x16xf32>
    %219 = math.rsqrt %218 : vector<1x16xf32>
    %220 = vector.broadcast %219 : vector<1x16xf32> to vector<8x16xf32>
    %221 = arith.mulf %213, %220 : vector<8x16xf32>
    %222 = arith.truncf %221 : vector<8x16xf32> to vector<8x16xbf16>
    %cst_80 = arith.constant dense<0.000000e+00> : vector<16x16xf32>
    %223 = tpu.matmul %222, %222, %cst_80 {dimension_numbers = #tpu.dot_dimension_numbers<[0], [0], [1], [1], [0, 1, 1, 1], [], []>} : vector<8x16xbf16>, vector<8x16xbf16>, vector<16x16xf32> -> vector<16x16xf32>
    %cst_81 = arith.constant dense<0.000000e+00> : vector<16x8xf32>
    %224 = tpu.matmul %222, %190, %cst_81 {dimension_numbers = #tpu.dot_dimension_numbers<[0], [0], [1], [1], [0, 1, 1, 1], [], []>} : vector<8x16xbf16>, vector<8x8xbf16>, vector<16x8xf32> -> vector<16x8xf32>
    %225 = math.absf %223 : vector<16x16xf32>
    %cst_82 = arith.constant dense<0.000000e+00> : vector<16xf32>
    %226 = vector.multi_reduction <add>, %225, %cst_82 [1] : vector<16x16xf32> to vector<16xf32>
    %227 = vector.shape_cast %226 : vector<16xf32> to vector<16x1xf32>
    %228 = vector.shape_cast %227 : vector<16x1xf32> to vector<1x16x1xf32>
    %cst_83 = arith.constant dense<0xFF800000> : vector<1xf32>
    %229 = vector.multi_reduction <maximumf>, %228, %cst_83 [1, 2] : vector<1x16x1xf32> to vector<1xf32>
    %230 = vector.shape_cast %229 : vector<1xf32> to vector<1x1x1xf32>
    %231 = vector.extract %230[0, 0, 0] : f32 from vector<1x1x1xf32>
    %cst_84 = arith.constant 1.000000e+00 : f32
    %232 = arith.addf %231, %cst_84 : f32
    %233 = arith.divf %232, %1 : f32
    %cst_85 = arith.constant 1.000000e+00 : f32
    %234 = arith.divf %cst_85, %233 : f32
    %235 = arith.mulf %3, %234 : f32
    %236 = arith.truncf %223 : vector<16x16xf32> to vector<16x16xbf16>
    %cst_86 = arith.constant dense<0.000000e+00> : vector<16x16xf32>
    %237 = tpu.matmul %4, %236, %cst_86 {dimension_numbers = #tpu.dot_dimension_numbers<[1], [0], [0], [1], [0, 0, 1, 1], [], []>} : vector<16x16xbf16>, vector<16x16xbf16>, vector<16x16xf32> -> vector<16x16xf32>
    %238 = arith.truncf %237 : vector<16x16xf32> to vector<16x16xbf16>
    %cst_87 = arith.constant dense<0.000000e+00> : vector<16x16xf32>
    %239 = tpu.matmul %238, %4, %cst_87 {dimension_numbers = #tpu.dot_dimension_numbers<[1], [0], [0], [1], [0, 0, 1, 1], [], []>} : vector<16x16xbf16>, vector<16x16xbf16>, vector<16x16xf32> -> vector<16x16xf32>
    %240 = vector.broadcast %234 : f32 to vector<16x16xf32>
    %241 = arith.mulf %239, %240 : vector<16x16xf32>
    %242 = arith.truncf %241 : vector<16x16xf32> to vector<16x16xbf16>
    %243 = vector.broadcast %234 : f32 to vector<16x8xf32>
    %244 = arith.mulf %224, %243 : vector<16x8xf32>
    %cst_88 = arith.constant 1.000000e+00 : f32
    %245 = vector.broadcast %cst_88 : f32 to vector<16x8xf32>
    %cst_89 = arith.constant 0.000000e+00 : f32
    %246 = vector.broadcast %cst_89 : f32 to vector<16x8xf32>
    %247 = arith.cmpf ogt, %224, %246 : vector<16x8xf32>
    %cst_90 = arith.constant 0.000000e+00 : f32
    %248 = vector.broadcast %cst_90 : f32 to vector<16x8xf32>
    %249 = arith.cmpf olt, %224, %248 : vector<16x8xf32>
    %cst_91 = arith.constant 0.000000e+00 : f32
    %250 = vector.broadcast %cst_91 : f32 to vector<16x8xf32>
    %251 = arith.subf %250, %245 : vector<16x8xf32>
    %cst_92 = arith.constant 0.000000e+00 : f32
    %252 = vector.broadcast %cst_92 : f32 to vector<16x8xf32>
    %253 = arith.select %249, %251, %252 : vector<16x8xi1>, vector<16x8xf32>
    %254 = arith.select %247, %245, %253 : vector<16x8xi1>, vector<16x8xf32>
    %255 = math.absf %224 : vector<16x8xf32>
    %256 = vector.broadcast %3 : f32 to vector<16x8xf32>
    %257 = arith.subf %255, %256 : vector<16x8xf32>
    %cst_93 = arith.constant 5.000000e-01 : f32
    %258 = vector.broadcast %cst_93 : f32 to vector<16x8xf32>
    %259 = arith.mulf %258, %257 : vector<16x8xf32>
    %cst_94 = arith.constant 4.471500e-02 : f32
    %260 = vector.broadcast %cst_94 : f32 to vector<16x8xf32>
    %261 = arith.mulf %260, %257 : vector<16x8xf32>
    %262 = arith.mulf %261, %257 : vector<16x8xf32>
    %263 = arith.mulf %262, %257 : vector<16x8xf32>
    %264 = arith.addf %257, %263 : vector<16x8xf32>
    %cst_95 = arith.constant 0.797884583 : f32
    %265 = vector.broadcast %cst_95 : f32 to vector<16x8xf32>
    %266 = arith.mulf %265, %264 : vector<16x8xf32>
    %267 = math.tanh %266 : vector<16x8xf32>
    %cst_96 = arith.constant 1.000000e+00 : f32
    %268 = vector.broadcast %cst_96 : f32 to vector<16x8xf32>
    %269 = arith.addf %268, %267 : vector<16x8xf32>
    %270 = arith.mulf %259, %269 : vector<16x8xf32>
    %271 = arith.mulf %254, %270 : vector<16x8xf32>
    %272 = arith.truncf %271 : vector<16x8xf32> to vector<16x8xbf16>
    %cst_97 = arith.constant dense<0.000000e+00> : vector<16x8xf32>
    %273 = tpu.matmul %242, %272, %cst_97 {dimension_numbers = #tpu.dot_dimension_numbers<[1], [0], [0], [1], [0, 0, 1, 1], [], []>} : vector<16x16xbf16>, vector<16x8xbf16>, vector<16x8xf32> -> vector<16x8xf32>
    %274 = arith.subf %271, %273 : vector<16x8xf32>
    %275 = arith.addf %274, %244 : vector<16x8xf32>
    %cst_98 = arith.constant 1.000000e+00 : f32
    %276 = vector.broadcast %cst_98 : f32 to vector<16x8xf32>
    %cst_99 = arith.constant 0.000000e+00 : f32
    %277 = vector.broadcast %cst_99 : f32 to vector<16x8xf32>
    %278 = arith.cmpf ogt, %275, %277 : vector<16x8xf32>
    %cst_100 = arith.constant 0.000000e+00 : f32
    %279 = vector.broadcast %cst_100 : f32 to vector<16x8xf32>
    %280 = arith.cmpf olt, %275, %279 : vector<16x8xf32>
    %cst_101 = arith.constant 0.000000e+00 : f32
    %281 = vector.broadcast %cst_101 : f32 to vector<16x8xf32>
    %282 = arith.subf %281, %276 : vector<16x8xf32>
    %cst_102 = arith.constant 0.000000e+00 : f32
    %283 = vector.broadcast %cst_102 : f32 to vector<16x8xf32>
    %284 = arith.select %280, %282, %283 : vector<16x8xi1>, vector<16x8xf32>
    %285 = arith.select %278, %276, %284 : vector<16x8xi1>, vector<16x8xf32>
    %286 = math.absf %275 : vector<16x8xf32>
    %287 = vector.broadcast %235 : f32 to vector<16x8xf32>
    %288 = arith.subf %286, %287 : vector<16x8xf32>
    %cst_103 = arith.constant 5.000000e-01 : f32
    %289 = vector.broadcast %cst_103 : f32 to vector<16x8xf32>
    %290 = arith.mulf %289, %288 : vector<16x8xf32>
    %cst_104 = arith.constant 4.471500e-02 : f32
    %291 = vector.broadcast %cst_104 : f32 to vector<16x8xf32>
    %292 = arith.mulf %291, %288 : vector<16x8xf32>
    %293 = arith.mulf %292, %288 : vector<16x8xf32>
    %294 = arith.mulf %293, %288 : vector<16x8xf32>
    %295 = arith.addf %288, %294 : vector<16x8xf32>
    %cst_105 = arith.constant 0.797884583 : f32
    %296 = vector.broadcast %cst_105 : f32 to vector<16x8xf32>
    %297 = arith.mulf %296, %295 : vector<16x8xf32>
    %298 = math.tanh %297 : vector<16x8xf32>
    %cst_106 = arith.constant 1.000000e+00 : f32
    %299 = vector.broadcast %cst_106 : f32 to vector<16x8xf32>
    %300 = arith.addf %299, %298 : vector<16x8xf32>
    %301 = arith.mulf %290, %300 : vector<16x8xf32>
    %302 = arith.mulf %285, %301 : vector<16x8xf32>
    %303 = arith.truncf %302 : vector<16x8xf32> to vector<16x8xbf16>
    %cst_107 = arith.constant dense<0.000000e+00> : vector<16x8xf32>
    %304 = tpu.matmul %242, %303, %cst_107 {dimension_numbers = #tpu.dot_dimension_numbers<[1], [0], [0], [1], [0, 0, 1, 1], [], []>} : vector<16x16xbf16>, vector<16x8xbf16>, vector<16x8xf32> -> vector<16x8xf32>
    %305 = arith.subf %302, %304 : vector<16x8xf32>
    %306 = arith.addf %305, %244 : vector<16x8xf32>
    %cst_108 = arith.constant 1.000000e+00 : f32
    %307 = vector.broadcast %cst_108 : f32 to vector<16x8xf32>
    %cst_109 = arith.constant 0.000000e+00 : f32
    %308 = vector.broadcast %cst_109 : f32 to vector<16x8xf32>
    %309 = arith.cmpf ogt, %306, %308 : vector<16x8xf32>
    %cst_110 = arith.constant 0.000000e+00 : f32
    %310 = vector.broadcast %cst_110 : f32 to vector<16x8xf32>
    %311 = arith.cmpf olt, %306, %310 : vector<16x8xf32>
    %cst_111 = arith.constant 0.000000e+00 : f32
    %312 = vector.broadcast %cst_111 : f32 to vector<16x8xf32>
    %313 = arith.subf %312, %307 : vector<16x8xf32>
    %cst_112 = arith.constant 0.000000e+00 : f32
    %314 = vector.broadcast %cst_112 : f32 to vector<16x8xf32>
    %315 = arith.select %311, %313, %314 : vector<16x8xi1>, vector<16x8xf32>
    %316 = arith.select %309, %307, %315 : vector<16x8xi1>, vector<16x8xf32>
    %317 = math.absf %306 : vector<16x8xf32>
    %318 = vector.broadcast %235 : f32 to vector<16x8xf32>
    %319 = arith.subf %317, %318 : vector<16x8xf32>
    %cst_113 = arith.constant 5.000000e-01 : f32
    %320 = vector.broadcast %cst_113 : f32 to vector<16x8xf32>
    %321 = arith.mulf %320, %319 : vector<16x8xf32>
    %cst_114 = arith.constant 4.471500e-02 : f32
    %322 = vector.broadcast %cst_114 : f32 to vector<16x8xf32>
    %323 = arith.mulf %322, %319 : vector<16x8xf32>
    %324 = arith.mulf %323, %319 : vector<16x8xf32>
    %325 = arith.mulf %324, %319 : vector<16x8xf32>
    %326 = arith.addf %319, %325 : vector<16x8xf32>
    %cst_115 = arith.constant 0.797884583 : f32
    %327 = vector.broadcast %cst_115 : f32 to vector<16x8xf32>
    %328 = arith.mulf %327, %326 : vector<16x8xf32>
    %329 = math.tanh %328 : vector<16x8xf32>
    %cst_116 = arith.constant 1.000000e+00 : f32
    %330 = vector.broadcast %cst_116 : f32 to vector<16x8xf32>
    %331 = arith.addf %330, %329 : vector<16x8xf32>
    %332 = arith.mulf %321, %331 : vector<16x8xf32>
    %333 = arith.mulf %316, %332 : vector<16x8xf32>
    %334 = arith.truncf %333 : vector<16x8xf32> to vector<16x8xbf16>
    %cst_117 = arith.constant dense<0.000000e+00> : vector<16x8xf32>
    %335 = tpu.matmul %242, %334, %cst_117 {dimension_numbers = #tpu.dot_dimension_numbers<[1], [0], [0], [1], [0, 0, 1, 1], [], []>} : vector<16x16xbf16>, vector<16x8xbf16>, vector<16x8xf32> -> vector<16x8xf32>
    %336 = arith.subf %333, %335 : vector<16x8xf32>
    %337 = arith.addf %336, %244 : vector<16x8xf32>
    %cst_118 = arith.constant 1.000000e+00 : f32
    %338 = vector.broadcast %cst_118 : f32 to vector<16x8xf32>
    %cst_119 = arith.constant 0.000000e+00 : f32
    %339 = vector.broadcast %cst_119 : f32 to vector<16x8xf32>
    %340 = arith.cmpf ogt, %337, %339 : vector<16x8xf32>
    %cst_120 = arith.constant 0.000000e+00 : f32
    %341 = vector.broadcast %cst_120 : f32 to vector<16x8xf32>
    %342 = arith.cmpf olt, %337, %341 : vector<16x8xf32>
    %cst_121 = arith.constant 0.000000e+00 : f32
    %343 = vector.broadcast %cst_121 : f32 to vector<16x8xf32>
    %344 = arith.subf %343, %338 : vector<16x8xf32>
    %cst_122 = arith.constant 0.000000e+00 : f32
    %345 = vector.broadcast %cst_122 : f32 to vector<16x8xf32>
    %346 = arith.select %342, %344, %345 : vector<16x8xi1>, vector<16x8xf32>
    %347 = arith.select %340, %338, %346 : vector<16x8xi1>, vector<16x8xf32>
    %348 = math.absf %337 : vector<16x8xf32>
    %349 = vector.broadcast %235 : f32 to vector<16x8xf32>
    %350 = arith.subf %348, %349 : vector<16x8xf32>
    %cst_123 = arith.constant 5.000000e-01 : f32
    %351 = vector.broadcast %cst_123 : f32 to vector<16x8xf32>
    %352 = arith.mulf %351, %350 : vector<16x8xf32>
    %cst_124 = arith.constant 4.471500e-02 : f32
    %353 = vector.broadcast %cst_124 : f32 to vector<16x8xf32>
    %354 = arith.mulf %353, %350 : vector<16x8xf32>
    %355 = arith.mulf %354, %350 : vector<16x8xf32>
    %356 = arith.mulf %355, %350 : vector<16x8xf32>
    %357 = arith.addf %350, %356 : vector<16x8xf32>
    %cst_125 = arith.constant 0.797884583 : f32
    %358 = vector.broadcast %cst_125 : f32 to vector<16x8xf32>
    %359 = arith.mulf %358, %357 : vector<16x8xf32>
    %360 = math.tanh %359 : vector<16x8xf32>
    %cst_126 = arith.constant 1.000000e+00 : f32
    %361 = vector.broadcast %cst_126 : f32 to vector<16x8xf32>
    %362 = arith.addf %361, %360 : vector<16x8xf32>
    %363 = arith.mulf %352, %362 : vector<16x8xf32>
    %364 = arith.mulf %347, %363 : vector<16x8xf32>
    %365 = arith.truncf %364 : vector<16x8xf32> to vector<16x8xbf16>
    %cst_127 = arith.constant dense<0.000000e+00> : vector<8x8xf32>
    %366 = tpu.matmul %222, %365, %cst_127 {dimension_numbers = #tpu.dot_dimension_numbers<[1], [0], [0], [1], [0, 0, 1, 1], [], []>} : vector<8x16xbf16>, vector<16x8xbf16>, vector<8x8xf32> -> vector<8x8xf32>
    %c0_128 = arith.constant 0 : index
    %c0_129 = arith.constant 0 : index
    %c16 = arith.constant 16 : index
    %367 = vector.load %arg2[%c0_128, %c0_129, %c16] : memref<1x8x64xbf16, #tpu.memory_space<vmem>>, vector<1x8x8xbf16>
    %368 = vector.shape_cast %367 : vector<1x8x8xbf16> to vector<8x8xbf16>
    %369 = arith.extf %368 : vector<8x8xbf16> to vector<8x8xf32>
    %c0_130 = arith.constant 0 : index
    %c0_131 = arith.constant 0 : index
    %c48 = arith.constant 48 : index
    %370 = vector.load %arg2[%c0_130, %c0_131, %c48] : memref<1x8x64xbf16, #tpu.memory_space<vmem>>, vector<1x8x8xbf16>
    %371 = vector.shape_cast %370 : vector<1x8x8xbf16> to vector<8x8xbf16>
    %c2_132 = arith.constant 2 : index
    %c0_133 = arith.constant 0 : index
    %c0_134 = arith.constant 0 : index
    %372 = vector.load %arg3[%c2_132, %c0_133, %c0_134] : memref<4x8x16xbf16, #tpu.memory_space<vmem>>, vector<1x8x16xbf16>
    %373 = vector.shape_cast %372 : vector<1x8x16xbf16> to vector<8x16xbf16>
    %cst_135 = arith.constant 0.594603539 : f32
    %374 = vector.broadcast %cst_135 : f32 to vector<8x8xf32>
    %375 = arith.mulf %369, %374 : vector<8x8xf32>
    %376 = arith.mulf %375, %375 : vector<8x8xf32>
    %cst_136 = arith.constant dense<0.000000e+00> : vector<8xf32>
    %377 = vector.multi_reduction <add>, %376, %cst_136 [1] : vector<8x8xf32> to vector<8xf32>
    %378 = vector.shape_cast %377 : vector<8xf32> to vector<8x1xf32>
    %cst_137 = arith.constant 1.000000e-24 : f32
    %379 = vector.broadcast %cst_137 : f32 to vector<8x1xf32>
    %380 = arith.maximumf %378, %379 : vector<8x1xf32>
    %381 = math.rsqrt %380 : vector<8x1xf32>
    %382 = vector.broadcast %381 : vector<8x1xf32> to vector<8x8xf32>
    %383 = arith.mulf %375, %382 : vector<8x8xf32>
    %384 = arith.mulf %381, %381 : vector<8x1xf32>
    %385 = arith.mulf %378, %384 : vector<8x1xf32>
    %386 = arith.truncf %383 : vector<8x8xf32> to vector<8x8xbf16>
    %cst_138 = arith.constant dense<0.000000e+00> : vector<8x16xf32>
    %387 = tpu.matmul %386, %373, %cst_138 {dimension_numbers = #tpu.dot_dimension_numbers<[1], [0], [0], [1], [0, 0, 1, 1], [], []>} : vector<8x8xbf16>, vector<8x16xbf16>, vector<8x16xf32> -> vector<8x16xf32>
    %cst_139 = arith.constant 5.000000e-01 : f32
    %388 = vector.broadcast %cst_139 : f32 to vector<8x1xf32>
    %389 = arith.mulf %385, %388 : vector<8x1xf32>
    %390 = vector.broadcast %389 : vector<8x1xf32> to vector<8x16xf32>
    %391 = arith.subf %387, %390 : vector<8x16xf32>
    %392 = math.exp %391 : vector<8x16xf32>
    %cst_140 = arith.constant 2.500000e-01 : f32
    %393 = vector.broadcast %cst_140 : f32 to vector<8x16xf32>
    %394 = arith.mulf %392, %393 : vector<8x16xf32>
    %395 = arith.mulf %394, %394 : vector<8x16xf32>
    %cst_141 = arith.constant dense<0.000000e+00> : vector<16xf32>
    %396 = vector.multi_reduction <add>, %395, %cst_141 [0] : vector<8x16xf32> to vector<16xf32>
    %397 = vector.shape_cast %396 : vector<16xf32> to vector<1x16xf32>
    %cst_142 = arith.constant 1.000000e-24 : f32
    %398 = vector.broadcast %cst_142 : f32 to vector<1x16xf32>
    %399 = arith.maximumf %397, %398 : vector<1x16xf32>
    %400 = math.rsqrt %399 : vector<1x16xf32>
    %401 = vector.broadcast %400 : vector<1x16xf32> to vector<8x16xf32>
    %402 = arith.mulf %394, %401 : vector<8x16xf32>
    %403 = arith.truncf %402 : vector<8x16xf32> to vector<8x16xbf16>
    %cst_143 = arith.constant dense<0.000000e+00> : vector<16x16xf32>
    %404 = tpu.matmul %403, %403, %cst_143 {dimension_numbers = #tpu.dot_dimension_numbers<[0], [0], [1], [1], [0, 1, 1, 1], [], []>} : vector<8x16xbf16>, vector<8x16xbf16>, vector<16x16xf32> -> vector<16x16xf32>
    %cst_144 = arith.constant dense<0.000000e+00> : vector<16x8xf32>
    %405 = tpu.matmul %403, %371, %cst_144 {dimension_numbers = #tpu.dot_dimension_numbers<[0], [0], [1], [1], [0, 1, 1, 1], [], []>} : vector<8x16xbf16>, vector<8x8xbf16>, vector<16x8xf32> -> vector<16x8xf32>
    %406 = math.absf %404 : vector<16x16xf32>
    %cst_145 = arith.constant dense<0.000000e+00> : vector<16xf32>
    %407 = vector.multi_reduction <add>, %406, %cst_145 [1] : vector<16x16xf32> to vector<16xf32>
    %408 = vector.shape_cast %407 : vector<16xf32> to vector<16x1xf32>
    %409 = vector.shape_cast %408 : vector<16x1xf32> to vector<1x16x1xf32>
    %cst_146 = arith.constant dense<0xFF800000> : vector<1xf32>
    %410 = vector.multi_reduction <maximumf>, %409, %cst_146 [1, 2] : vector<1x16x1xf32> to vector<1xf32>
    %411 = vector.shape_cast %410 : vector<1xf32> to vector<1x1x1xf32>
    %412 = vector.extract %411[0, 0, 0] : f32 from vector<1x1x1xf32>
    %cst_147 = arith.constant 1.000000e+00 : f32
    %413 = arith.addf %412, %cst_147 : f32
    %414 = arith.divf %413, %1 : f32
    %cst_148 = arith.constant 1.000000e+00 : f32
    %415 = arith.divf %cst_148, %414 : f32
    %416 = arith.mulf %3, %415 : f32
    %417 = arith.truncf %404 : vector<16x16xf32> to vector<16x16xbf16>
    %cst_149 = arith.constant dense<0.000000e+00> : vector<16x16xf32>
    %418 = tpu.matmul %4, %417, %cst_149 {dimension_numbers = #tpu.dot_dimension_numbers<[1], [0], [0], [1], [0, 0, 1, 1], [], []>} : vector<16x16xbf16>, vector<16x16xbf16>, vector<16x16xf32> -> vector<16x16xf32>
    %419 = arith.truncf %418 : vector<16x16xf32> to vector<16x16xbf16>
    %cst_150 = arith.constant dense<0.000000e+00> : vector<16x16xf32>
    %420 = tpu.matmul %419, %4, %cst_150 {dimension_numbers = #tpu.dot_dimension_numbers<[1], [0], [0], [1], [0, 0, 1, 1], [], []>} : vector<16x16xbf16>, vector<16x16xbf16>, vector<16x16xf32> -> vector<16x16xf32>
    %421 = vector.broadcast %415 : f32 to vector<16x16xf32>
    %422 = arith.mulf %420, %421 : vector<16x16xf32>
    %423 = arith.truncf %422 : vector<16x16xf32> to vector<16x16xbf16>
    %424 = vector.broadcast %415 : f32 to vector<16x8xf32>
    %425 = arith.mulf %405, %424 : vector<16x8xf32>
    %cst_151 = arith.constant 1.000000e+00 : f32
    %426 = vector.broadcast %cst_151 : f32 to vector<16x8xf32>
    %cst_152 = arith.constant 0.000000e+00 : f32
    %427 = vector.broadcast %cst_152 : f32 to vector<16x8xf32>
    %428 = arith.cmpf ogt, %405, %427 : vector<16x8xf32>
    %cst_153 = arith.constant 0.000000e+00 : f32
    %429 = vector.broadcast %cst_153 : f32 to vector<16x8xf32>
    %430 = arith.cmpf olt, %405, %429 : vector<16x8xf32>
    %cst_154 = arith.constant 0.000000e+00 : f32
    %431 = vector.broadcast %cst_154 : f32 to vector<16x8xf32>
    %432 = arith.subf %431, %426 : vector<16x8xf32>
    %cst_155 = arith.constant 0.000000e+00 : f32
    %433 = vector.broadcast %cst_155 : f32 to vector<16x8xf32>
    %434 = arith.select %430, %432, %433 : vector<16x8xi1>, vector<16x8xf32>
    %435 = arith.select %428, %426, %434 : vector<16x8xi1>, vector<16x8xf32>
    %436 = math.absf %405 : vector<16x8xf32>
    %437 = vector.broadcast %3 : f32 to vector<16x8xf32>
    %438 = arith.subf %436, %437 : vector<16x8xf32>
    %cst_156 = arith.constant 5.000000e-01 : f32
    %439 = vector.broadcast %cst_156 : f32 to vector<16x8xf32>
    %440 = arith.mulf %439, %438 : vector<16x8xf32>
    %cst_157 = arith.constant 4.471500e-02 : f32
    %441 = vector.broadcast %cst_157 : f32 to vector<16x8xf32>
    %442 = arith.mulf %441, %438 : vector<16x8xf32>
    %443 = arith.mulf %442, %438 : vector<16x8xf32>
    %444 = arith.mulf %443, %438 : vector<16x8xf32>
    %445 = arith.addf %438, %444 : vector<16x8xf32>
    %cst_158 = arith.constant 0.797884583 : f32
    %446 = vector.broadcast %cst_158 : f32 to vector<16x8xf32>
    %447 = arith.mulf %446, %445 : vector<16x8xf32>
    %448 = math.tanh %447 : vector<16x8xf32>
    %cst_159 = arith.constant 1.000000e+00 : f32
    %449 = vector.broadcast %cst_159 : f32 to vector<16x8xf32>
    %450 = arith.addf %449, %448 : vector<16x8xf32>
    %451 = arith.mulf %440, %450 : vector<16x8xf32>
    %452 = arith.mulf %435, %451 : vector<16x8xf32>
    %453 = arith.truncf %452 : vector<16x8xf32> to vector<16x8xbf16>
    %cst_160 = arith.constant dense<0.000000e+00> : vector<16x8xf32>
    %454 = tpu.matmul %423, %453, %cst_160 {dimension_numbers = #tpu.dot_dimension_numbers<[1], [0], [0], [1], [0, 0, 1, 1], [], []>} : vector<16x16xbf16>, vector<16x8xbf16>, vector<16x8xf32> -> vector<16x8xf32>
    %455 = arith.subf %452, %454 : vector<16x8xf32>
    %456 = arith.addf %455, %425 : vector<16x8xf32>
    %cst_161 = arith.constant 1.000000e+00 : f32
    %457 = vector.broadcast %cst_161 : f32 to vector<16x8xf32>
    %cst_162 = arith.constant 0.000000e+00 : f32
    %458 = vector.broadcast %cst_162 : f32 to vector<16x8xf32>
    %459 = arith.cmpf ogt, %456, %458 : vector<16x8xf32>
    %cst_163 = arith.constant 0.000000e+00 : f32
    %460 = vector.broadcast %cst_163 : f32 to vector<16x8xf32>
    %461 = arith.cmpf olt, %456, %460 : vector<16x8xf32>
    %cst_164 = arith.constant 0.000000e+00 : f32
    %462 = vector.broadcast %cst_164 : f32 to vector<16x8xf32>
    %463 = arith.subf %462, %457 : vector<16x8xf32>
    %cst_165 = arith.constant 0.000000e+00 : f32
    %464 = vector.broadcast %cst_165 : f32 to vector<16x8xf32>
    %465 = arith.select %461, %463, %464 : vector<16x8xi1>, vector<16x8xf32>
    %466 = arith.select %459, %457, %465 : vector<16x8xi1>, vector<16x8xf32>
    %467 = math.absf %456 : vector<16x8xf32>
    %468 = vector.broadcast %416 : f32 to vector<16x8xf32>
    %469 = arith.subf %467, %468 : vector<16x8xf32>
    %cst_166 = arith.constant 5.000000e-01 : f32
    %470 = vector.broadcast %cst_166 : f32 to vector<16x8xf32>
    %471 = arith.mulf %470, %469 : vector<16x8xf32>
    %cst_167 = arith.constant 4.471500e-02 : f32
    %472 = vector.broadcast %cst_167 : f32 to vector<16x8xf32>
    %473 = arith.mulf %472, %469 : vector<16x8xf32>
    %474 = arith.mulf %473, %469 : vector<16x8xf32>
    %475 = arith.mulf %474, %469 : vector<16x8xf32>
    %476 = arith.addf %469, %475 : vector<16x8xf32>
    %cst_168 = arith.constant 0.797884583 : f32
    %477 = vector.broadcast %cst_168 : f32 to vector<16x8xf32>
    %478 = arith.mulf %477, %476 : vector<16x8xf32>
    %479 = math.tanh %478 : vector<16x8xf32>
    %cst_169 = arith.constant 1.000000e+00 : f32
    %480 = vector.broadcast %cst_169 : f32 to vector<16x8xf32>
    %481 = arith.addf %480, %479 : vector<16x8xf32>
    %482 = arith.mulf %471, %481 : vector<16x8xf32>
    %483 = arith.mulf %466, %482 : vector<16x8xf32>
    %484 = arith.truncf %483 : vector<16x8xf32> to vector<16x8xbf16>
    %cst_170 = arith.constant dense<0.000000e+00> : vector<16x8xf32>
    %485 = tpu.matmul %423, %484, %cst_170 {dimension_numbers = #tpu.dot_dimension_numbers<[1], [0], [0], [1], [0, 0, 1, 1], [], []>} : vector<16x16xbf16>, vector<16x8xbf16>, vector<16x8xf32> -> vector<16x8xf32>
    %486 = arith.subf %483, %485 : vector<16x8xf32>
    %487 = arith.addf %486, %425 : vector<16x8xf32>
    %cst_171 = arith.constant 1.000000e+00 : f32
    %488 = vector.broadcast %cst_171 : f32 to vector<16x8xf32>
    %cst_172 = arith.constant 0.000000e+00 : f32
    %489 = vector.broadcast %cst_172 : f32 to vector<16x8xf32>
    %490 = arith.cmpf ogt, %487, %489 : vector<16x8xf32>
    %cst_173 = arith.constant 0.000000e+00 : f32
    %491 = vector.broadcast %cst_173 : f32 to vector<16x8xf32>
    %492 = arith.cmpf olt, %487, %491 : vector<16x8xf32>
    %cst_174 = arith.constant 0.000000e+00 : f32
    %493 = vector.broadcast %cst_174 : f32 to vector<16x8xf32>
    %494 = arith.subf %493, %488 : vector<16x8xf32>
    %cst_175 = arith.constant 0.000000e+00 : f32
    %495 = vector.broadcast %cst_175 : f32 to vector<16x8xf32>
    %496 = arith.select %492, %494, %495 : vector<16x8xi1>, vector<16x8xf32>
    %497 = arith.select %490, %488, %496 : vector<16x8xi1>, vector<16x8xf32>
    %498 = math.absf %487 : vector<16x8xf32>
    %499 = vector.broadcast %416 : f32 to vector<16x8xf32>
    %500 = arith.subf %498, %499 : vector<16x8xf32>
    %cst_176 = arith.constant 5.000000e-01 : f32
    %501 = vector.broadcast %cst_176 : f32 to vector<16x8xf32>
    %502 = arith.mulf %501, %500 : vector<16x8xf32>
    %cst_177 = arith.constant 4.471500e-02 : f32
    %503 = vector.broadcast %cst_177 : f32 to vector<16x8xf32>
    %504 = arith.mulf %503, %500 : vector<16x8xf32>
    %505 = arith.mulf %504, %500 : vector<16x8xf32>
    %506 = arith.mulf %505, %500 : vector<16x8xf32>
    %507 = arith.addf %500, %506 : vector<16x8xf32>
    %cst_178 = arith.constant 0.797884583 : f32
    %508 = vector.broadcast %cst_178 : f32 to vector<16x8xf32>
    %509 = arith.mulf %508, %507 : vector<16x8xf32>
    %510 = math.tanh %509 : vector<16x8xf32>
    %cst_179 = arith.constant 1.000000e+00 : f32
    %511 = vector.broadcast %cst_179 : f32 to vector<16x8xf32>
    %512 = arith.addf %511, %510 : vector<16x8xf32>
    %513 = arith.mulf %502, %512 : vector<16x8xf32>
    %514 = arith.mulf %497, %513 : vector<16x8xf32>
    %515 = arith.truncf %514 : vector<16x8xf32> to vector<16x8xbf16>
    %cst_180 = arith.constant dense<0.000000e+00> : vector<16x8xf32>
    %516 = tpu.matmul %423, %515, %cst_180 {dimension_numbers = #tpu.dot_dimension_numbers<[1], [0], [0], [1], [0, 0, 1, 1], [], []>} : vector<16x16xbf16>, vector<16x8xbf16>, vector<16x8xf32> -> vector<16x8xf32>
    %517 = arith.subf %514, %516 : vector<16x8xf32>
    %518 = arith.addf %517, %425 : vector<16x8xf32>
    %cst_181 = arith.constant 1.000000e+00 : f32
    %519 = vector.broadcast %cst_181 : f32 to vector<16x8xf32>
    %cst_182 = arith.constant 0.000000e+00 : f32
    %520 = vector.broadcast %cst_182 : f32 to vector<16x8xf32>
    %521 = arith.cmpf ogt, %518, %520 : vector<16x8xf32>
    %cst_183 = arith.constant 0.000000e+00 : f32
    %522 = vector.broadcast %cst_183 : f32 to vector<16x8xf32>
    %523 = arith.cmpf olt, %518, %522 : vector<16x8xf32>
    %cst_184 = arith.constant 0.000000e+00 : f32
    %524 = vector.broadcast %cst_184 : f32 to vector<16x8xf32>
    %525 = arith.subf %524, %519 : vector<16x8xf32>
    %cst_185 = arith.constant 0.000000e+00 : f32
    %526 = vector.broadcast %cst_185 : f32 to vector<16x8xf32>
    %527 = arith.select %523, %525, %526 : vector<16x8xi1>, vector<16x8xf32>
    %528 = arith.select %521, %519, %527 : vector<16x8xi1>, vector<16x8xf32>
    %529 = math.absf %518 : vector<16x8xf32>
    %530 = vector.broadcast %416 : f32 to vector<16x8xf32>
    %531 = arith.subf %529, %530 : vector<16x8xf32>
    %cst_186 = arith.constant 5.000000e-01 : f32
    %532 = vector.broadcast %cst_186 : f32 to vector<16x8xf32>
    %533 = arith.mulf %532, %531 : vector<16x8xf32>
    %cst_187 = arith.constant 4.471500e-02 : f32
    %534 = vector.broadcast %cst_187 : f32 to vector<16x8xf32>
    %535 = arith.mulf %534, %531 : vector<16x8xf32>
    %536 = arith.mulf %535, %531 : vector<16x8xf32>
    %537 = arith.mulf %536, %531 : vector<16x8xf32>
    %538 = arith.addf %531, %537 : vector<16x8xf32>
    %cst_188 = arith.constant 0.797884583 : f32
    %539 = vector.broadcast %cst_188 : f32 to vector<16x8xf32>
    %540 = arith.mulf %539, %538 : vector<16x8xf32>
    %541 = math.tanh %540 : vector<16x8xf32>
    %cst_189 = arith.constant 1.000000e+00 : f32
    %542 = vector.broadcast %cst_189 : f32 to vector<16x8xf32>
    %543 = arith.addf %542, %541 : vector<16x8xf32>
    %544 = arith.mulf %533, %543 : vector<16x8xf32>
    %545 = arith.mulf %528, %544 : vector<16x8xf32>
    %546 = arith.truncf %545 : vector<16x8xf32> to vector<16x8xbf16>
    %cst_190 = arith.constant dense<0.000000e+00> : vector<8x8xf32>
    %547 = tpu.matmul %403, %546, %cst_190 {dimension_numbers = #tpu.dot_dimension_numbers<[1], [0], [0], [1], [0, 0, 1, 1], [], []>} : vector<8x16xbf16>, vector<16x8xbf16>, vector<8x8xf32> -> vector<8x8xf32>
    %c0_191 = arith.constant 0 : index
    %c0_192 = arith.constant 0 : index
    %c24 = arith.constant 24 : index
    %548 = vector.load %arg2[%c0_191, %c0_192, %c24] : memref<1x8x64xbf16, #tpu.memory_space<vmem>>, vector<1x8x8xbf16>
    %549 = vector.shape_cast %548 : vector<1x8x8xbf16> to vector<8x8xbf16>
    %550 = arith.extf %549 : vector<8x8xbf16> to vector<8x8xf32>
    %c0_193 = arith.constant 0 : index
    %c0_194 = arith.constant 0 : index
    %c56 = arith.constant 56 : index
    %551 = vector.load %arg2[%c0_193, %c0_194, %c56] : memref<1x8x64xbf16, #tpu.memory_space<vmem>>, vector<1x8x8xbf16>
    %552 = vector.shape_cast %551 : vector<1x8x8xbf16> to vector<8x8xbf16>
    %c3 = arith.constant 3 : index
    %c0_195 = arith.constant 0 : index
    %c0_196 = arith.constant 0 : index
    %553 = vector.load %arg3[%c3, %c0_195, %c0_196] : memref<4x8x16xbf16, #tpu.memory_space<vmem>>, vector<1x8x16xbf16>
    %554 = vector.shape_cast %553 : vector<1x8x16xbf16> to vector<8x16xbf16>
    %cst_197 = arith.constant 0.594603539 : f32
    %555 = vector.broadcast %cst_197 : f32 to vector<8x8xf32>
    %556 = arith.mulf %550, %555 : vector<8x8xf32>
    %557 = arith.mulf %556, %556 : vector<8x8xf32>
    %cst_198 = arith.constant dense<0.000000e+00> : vector<8xf32>
    %558 = vector.multi_reduction <add>, %557, %cst_198 [1] : vector<8x8xf32> to vector<8xf32>
    %559 = vector.shape_cast %558 : vector<8xf32> to vector<8x1xf32>
    %cst_199 = arith.constant 1.000000e-24 : f32
    %560 = vector.broadcast %cst_199 : f32 to vector<8x1xf32>
    %561 = arith.maximumf %559, %560 : vector<8x1xf32>
    %562 = math.rsqrt %561 : vector<8x1xf32>
    %563 = vector.broadcast %562 : vector<8x1xf32> to vector<8x8xf32>
    %564 = arith.mulf %556, %563 : vector<8x8xf32>
    %565 = arith.mulf %562, %562 : vector<8x1xf32>
    %566 = arith.mulf %559, %565 : vector<8x1xf32>
    %567 = arith.truncf %564 : vector<8x8xf32> to vector<8x8xbf16>
    %cst_200 = arith.constant dense<0.000000e+00> : vector<8x16xf32>
    %568 = tpu.matmul %567, %554, %cst_200 {dimension_numbers = #tpu.dot_dimension_numbers<[1], [0], [0], [1], [0, 0, 1, 1], [], []>} : vector<8x8xbf16>, vector<8x16xbf16>, vector<8x16xf32> -> vector<8x16xf32>
    %cst_201 = arith.constant 5.000000e-01 : f32
    %569 = vector.broadcast %cst_201 : f32 to vector<8x1xf32>
    %570 = arith.mulf %566, %569 : vector<8x1xf32>
    %571 = vector.broadcast %570 : vector<8x1xf32> to vector<8x16xf32>
    %572 = arith.subf %568, %571 : vector<8x16xf32>
    %573 = math.exp %572 : vector<8x16xf32>
    %cst_202 = arith.constant 2.500000e-01 : f32
    %574 = vector.broadcast %cst_202 : f32 to vector<8x16xf32>
    %575 = arith.mulf %573, %574 : vector<8x16xf32>
    %576 = arith.mulf %575, %575 : vector<8x16xf32>
    %cst_203 = arith.constant dense<0.000000e+00> : vector<16xf32>
    %577 = vector.multi_reduction <add>, %576, %cst_203 [0] : vector<8x16xf32> to vector<16xf32>
    %578 = vector.shape_cast %577 : vector<16xf32> to vector<1x16xf32>
    %cst_204 = arith.constant 1.000000e-24 : f32
    %579 = vector.broadcast %cst_204 : f32 to vector<1x16xf32>
    %580 = arith.maximumf %578, %579 : vector<1x16xf32>
    %581 = math.rsqrt %580 : vector<1x16xf32>
    %582 = vector.broadcast %581 : vector<1x16xf32> to vector<8x16xf32>
    %583 = arith.mulf %575, %582 : vector<8x16xf32>
    %584 = arith.truncf %583 : vector<8x16xf32> to vector<8x16xbf16>
    %cst_205 = arith.constant dense<0.000000e+00> : vector<16x16xf32>
    %585 = tpu.matmul %584, %584, %cst_205 {dimension_numbers = #tpu.dot_dimension_numbers<[0], [0], [1], [1], [0, 1, 1, 1], [], []>} : vector<8x16xbf16>, vector<8x16xbf16>, vector<16x16xf32> -> vector<16x16xf32>
    %cst_206 = arith.constant dense<0.000000e+00> : vector<16x8xf32>
    %586 = tpu.matmul %584, %552, %cst_206 {dimension_numbers = #tpu.dot_dimension_numbers<[0], [0], [1], [1], [0, 1, 1, 1], [], []>} : vector<8x16xbf16>, vector<8x8xbf16>, vector<16x8xf32> -> vector<16x8xf32>
    %587 = math.absf %585 : vector<16x16xf32>
    %cst_207 = arith.constant dense<0.000000e+00> : vector<16xf32>
    %588 = vector.multi_reduction <add>, %587, %cst_207 [1] : vector<16x16xf32> to vector<16xf32>
    %589 = vector.shape_cast %588 : vector<16xf32> to vector<16x1xf32>
    %590 = vector.shape_cast %589 : vector<16x1xf32> to vector<1x16x1xf32>
    %cst_208 = arith.constant dense<0xFF800000> : vector<1xf32>
    %591 = vector.multi_reduction <maximumf>, %590, %cst_208 [1, 2] : vector<1x16x1xf32> to vector<1xf32>
    %592 = vector.shape_cast %591 : vector<1xf32> to vector<1x1x1xf32>
    %593 = vector.extract %592[0, 0, 0] : f32 from vector<1x1x1xf32>
    %cst_209 = arith.constant 1.000000e+00 : f32
    %594 = arith.addf %593, %cst_209 : f32
    %595 = arith.divf %594, %1 : f32
    %cst_210 = arith.constant 1.000000e+00 : f32
    %596 = arith.divf %cst_210, %595 : f32
    %597 = arith.mulf %3, %596 : f32
    %598 = arith.truncf %585 : vector<16x16xf32> to vector<16x16xbf16>
    %cst_211 = arith.constant dense<0.000000e+00> : vector<16x16xf32>
    %599 = tpu.matmul %4, %598, %cst_211 {dimension_numbers = #tpu.dot_dimension_numbers<[1], [0], [0], [1], [0, 0, 1, 1], [], []>} : vector<16x16xbf16>, vector<16x16xbf16>, vector<16x16xf32> -> vector<16x16xf32>
    %600 = arith.truncf %599 : vector<16x16xf32> to vector<16x16xbf16>
    %cst_212 = arith.constant dense<0.000000e+00> : vector<16x16xf32>
    %601 = tpu.matmul %600, %4, %cst_212 {dimension_numbers = #tpu.dot_dimension_numbers<[1], [0], [0], [1], [0, 0, 1, 1], [], []>} : vector<16x16xbf16>, vector<16x16xbf16>, vector<16x16xf32> -> vector<16x16xf32>
    %602 = vector.broadcast %596 : f32 to vector<16x16xf32>
    %603 = arith.mulf %601, %602 : vector<16x16xf32>
    %604 = arith.truncf %603 : vector<16x16xf32> to vector<16x16xbf16>
    %605 = vector.broadcast %596 : f32 to vector<16x8xf32>
    %606 = arith.mulf %586, %605 : vector<16x8xf32>
    %cst_213 = arith.constant 1.000000e+00 : f32
    %607 = vector.broadcast %cst_213 : f32 to vector<16x8xf32>
    %cst_214 = arith.constant 0.000000e+00 : f32
    %608 = vector.broadcast %cst_214 : f32 to vector<16x8xf32>
    %609 = arith.cmpf ogt, %586, %608 : vector<16x8xf32>
    %cst_215 = arith.constant 0.000000e+00 : f32
    %610 = vector.broadcast %cst_215 : f32 to vector<16x8xf32>
    %611 = arith.cmpf olt, %586, %610 : vector<16x8xf32>
    %cst_216 = arith.constant 0.000000e+00 : f32
    %612 = vector.broadcast %cst_216 : f32 to vector<16x8xf32>
    %613 = arith.subf %612, %607 : vector<16x8xf32>
    %cst_217 = arith.constant 0.000000e+00 : f32
    %614 = vector.broadcast %cst_217 : f32 to vector<16x8xf32>
    %615 = arith.select %611, %613, %614 : vector<16x8xi1>, vector<16x8xf32>
    %616 = arith.select %609, %607, %615 : vector<16x8xi1>, vector<16x8xf32>
    %617 = math.absf %586 : vector<16x8xf32>
    %618 = vector.broadcast %3 : f32 to vector<16x8xf32>
    %619 = arith.subf %617, %618 : vector<16x8xf32>
    %cst_218 = arith.constant 5.000000e-01 : f32
    %620 = vector.broadcast %cst_218 : f32 to vector<16x8xf32>
    %621 = arith.mulf %620, %619 : vector<16x8xf32>
    %cst_219 = arith.constant 4.471500e-02 : f32
    %622 = vector.broadcast %cst_219 : f32 to vector<16x8xf32>
    %623 = arith.mulf %622, %619 : vector<16x8xf32>
    %624 = arith.mulf %623, %619 : vector<16x8xf32>
    %625 = arith.mulf %624, %619 : vector<16x8xf32>
    %626 = arith.addf %619, %625 : vector<16x8xf32>
    %cst_220 = arith.constant 0.797884583 : f32
    %627 = vector.broadcast %cst_220 : f32 to vector<16x8xf32>
    %628 = arith.mulf %627, %626 : vector<16x8xf32>
    %629 = math.tanh %628 : vector<16x8xf32>
    %cst_221 = arith.constant 1.000000e+00 : f32
    %630 = vector.broadcast %cst_221 : f32 to vector<16x8xf32>
    %631 = arith.addf %630, %629 : vector<16x8xf32>
    %632 = arith.mulf %621, %631 : vector<16x8xf32>
    %633 = arith.mulf %616, %632 : vector<16x8xf32>
    %634 = arith.truncf %633 : vector<16x8xf32> to vector<16x8xbf16>
    %cst_222 = arith.constant dense<0.000000e+00> : vector<16x8xf32>
    %635 = tpu.matmul %604, %634, %cst_222 {dimension_numbers = #tpu.dot_dimension_numbers<[1], [0], [0], [1], [0, 0, 1, 1], [], []>} : vector<16x16xbf16>, vector<16x8xbf16>, vector<16x8xf32> -> vector<16x8xf32>
    %636 = arith.subf %633, %635 : vector<16x8xf32>
    %637 = arith.addf %636, %606 : vector<16x8xf32>
    %cst_223 = arith.constant 1.000000e+00 : f32
    %638 = vector.broadcast %cst_223 : f32 to vector<16x8xf32>
    %cst_224 = arith.constant 0.000000e+00 : f32
    %639 = vector.broadcast %cst_224 : f32 to vector<16x8xf32>
    %640 = arith.cmpf ogt, %637, %639 : vector<16x8xf32>
    %cst_225 = arith.constant 0.000000e+00 : f32
    %641 = vector.broadcast %cst_225 : f32 to vector<16x8xf32>
    %642 = arith.cmpf olt, %637, %641 : vector<16x8xf32>
    %cst_226 = arith.constant 0.000000e+00 : f32
    %643 = vector.broadcast %cst_226 : f32 to vector<16x8xf32>
    %644 = arith.subf %643, %638 : vector<16x8xf32>
    %cst_227 = arith.constant 0.000000e+00 : f32
    %645 = vector.broadcast %cst_227 : f32 to vector<16x8xf32>
    %646 = arith.select %642, %644, %645 : vector<16x8xi1>, vector<16x8xf32>
    %647 = arith.select %640, %638, %646 : vector<16x8xi1>, vector<16x8xf32>
    %648 = math.absf %637 : vector<16x8xf32>
    %649 = vector.broadcast %597 : f32 to vector<16x8xf32>
    %650 = arith.subf %648, %649 : vector<16x8xf32>
    %cst_228 = arith.constant 5.000000e-01 : f32
    %651 = vector.broadcast %cst_228 : f32 to vector<16x8xf32>
    %652 = arith.mulf %651, %650 : vector<16x8xf32>
    %cst_229 = arith.constant 4.471500e-02 : f32
    %653 = vector.broadcast %cst_229 : f32 to vector<16x8xf32>
    %654 = arith.mulf %653, %650 : vector<16x8xf32>
    %655 = arith.mulf %654, %650 : vector<16x8xf32>
    %656 = arith.mulf %655, %650 : vector<16x8xf32>
    %657 = arith.addf %650, %656 : vector<16x8xf32>
    %cst_230 = arith.constant 0.797884583 : f32
    %658 = vector.broadcast %cst_230 : f32 to vector<16x8xf32>
    %659 = arith.mulf %658, %657 : vector<16x8xf32>
    %660 = math.tanh %659 : vector<16x8xf32>
    %cst_231 = arith.constant 1.000000e+00 : f32
    %661 = vector.broadcast %cst_231 : f32 to vector<16x8xf32>
    %662 = arith.addf %661, %660 : vector<16x8xf32>
    %663 = arith.mulf %652, %662 : vector<16x8xf32>
    %664 = arith.mulf %647, %663 : vector<16x8xf32>
    %665 = arith.truncf %664 : vector<16x8xf32> to vector<16x8xbf16>
    %cst_232 = arith.constant dense<0.000000e+00> : vector<16x8xf32>
    %666 = tpu.matmul %604, %665, %cst_232 {dimension_numbers = #tpu.dot_dimension_numbers<[1], [0], [0], [1], [0, 0, 1, 1], [], []>} : vector<16x16xbf16>, vector<16x8xbf16>, vector<16x8xf32> -> vector<16x8xf32>
    %667 = arith.subf %664, %666 : vector<16x8xf32>
    %668 = arith.addf %667, %606 : vector<16x8xf32>
    %cst_233 = arith.constant 1.000000e+00 : f32
    %669 = vector.broadcast %cst_233 : f32 to vector<16x8xf32>
    %cst_234 = arith.constant 0.000000e+00 : f32
    %670 = vector.broadcast %cst_234 : f32 to vector<16x8xf32>
    %671 = arith.cmpf ogt, %668, %670 : vector<16x8xf32>
    %cst_235 = arith.constant 0.000000e+00 : f32
    %672 = vector.broadcast %cst_235 : f32 to vector<16x8xf32>
    %673 = arith.cmpf olt, %668, %672 : vector<16x8xf32>
    %cst_236 = arith.constant 0.000000e+00 : f32
    %674 = vector.broadcast %cst_236 : f32 to vector<16x8xf32>
    %675 = arith.subf %674, %669 : vector<16x8xf32>
    %cst_237 = arith.constant 0.000000e+00 : f32
    %676 = vector.broadcast %cst_237 : f32 to vector<16x8xf32>
    %677 = arith.select %673, %675, %676 : vector<16x8xi1>, vector<16x8xf32>
    %678 = arith.select %671, %669, %677 : vector<16x8xi1>, vector<16x8xf32>
    %679 = math.absf %668 : vector<16x8xf32>
    %680 = vector.broadcast %597 : f32 to vector<16x8xf32>
    %681 = arith.subf %679, %680 : vector<16x8xf32>
    %cst_238 = arith.constant 5.000000e-01 : f32
    %682 = vector.broadcast %cst_238 : f32 to vector<16x8xf32>
    %683 = arith.mulf %682, %681 : vector<16x8xf32>
    %cst_239 = arith.constant 4.471500e-02 : f32
    %684 = vector.broadcast %cst_239 : f32 to vector<16x8xf32>
    %685 = arith.mulf %684, %681 : vector<16x8xf32>
    %686 = arith.mulf %685, %681 : vector<16x8xf32>
    %687 = arith.mulf %686, %681 : vector<16x8xf32>
    %688 = arith.addf %681, %687 : vector<16x8xf32>
    %cst_240 = arith.constant 0.797884583 : f32
    %689 = vector.broadcast %cst_240 : f32 to vector<16x8xf32>
    %690 = arith.mulf %689, %688 : vector<16x8xf32>
    %691 = math.tanh %690 : vector<16x8xf32>
    %cst_241 = arith.constant 1.000000e+00 : f32
    %692 = vector.broadcast %cst_241 : f32 to vector<16x8xf32>
    %693 = arith.addf %692, %691 : vector<16x8xf32>
    %694 = arith.mulf %683, %693 : vector<16x8xf32>
    %695 = arith.mulf %678, %694 : vector<16x8xf32>
    %696 = arith.truncf %695 : vector<16x8xf32> to vector<16x8xbf16>
    %cst_242 = arith.constant dense<0.000000e+00> : vector<16x8xf32>
    %697 = tpu.matmul %604, %696, %cst_242 {dimension_numbers = #tpu.dot_dimension_numbers<[1], [0], [0], [1], [0, 0, 1, 1], [], []>} : vector<16x16xbf16>, vector<16x8xbf16>, vector<16x8xf32> -> vector<16x8xf32>
    %698 = arith.subf %695, %697 : vector<16x8xf32>
    %699 = arith.addf %698, %606 : vector<16x8xf32>
    %cst_243 = arith.constant 1.000000e+00 : f32
    %700 = vector.broadcast %cst_243 : f32 to vector<16x8xf32>
    %cst_244 = arith.constant 0.000000e+00 : f32
    %701 = vector.broadcast %cst_244 : f32 to vector<16x8xf32>
    %702 = arith.cmpf ogt, %699, %701 : vector<16x8xf32>
    %cst_245 = arith.constant 0.000000e+00 : f32
    %703 = vector.broadcast %cst_245 : f32 to vector<16x8xf32>
    %704 = arith.cmpf olt, %699, %703 : vector<16x8xf32>
    %cst_246 = arith.constant 0.000000e+00 : f32
    %705 = vector.broadcast %cst_246 : f32 to vector<16x8xf32>
    %706 = arith.subf %705, %700 : vector<16x8xf32>
    %cst_247 = arith.constant 0.000000e+00 : f32
    %707 = vector.broadcast %cst_247 : f32 to vector<16x8xf32>
    %708 = arith.select %704, %706, %707 : vector<16x8xi1>, vector<16x8xf32>
    %709 = arith.select %702, %700, %708 : vector<16x8xi1>, vector<16x8xf32>
    %710 = math.absf %699 : vector<16x8xf32>
    %711 = vector.broadcast %597 : f32 to vector<16x8xf32>
    %712 = arith.subf %710, %711 : vector<16x8xf32>
    %cst_248 = arith.constant 5.000000e-01 : f32
    %713 = vector.broadcast %cst_248 : f32 to vector<16x8xf32>
    %714 = arith.mulf %713, %712 : vector<16x8xf32>
    %cst_249 = arith.constant 4.471500e-02 : f32
    %715 = vector.broadcast %cst_249 : f32 to vector<16x8xf32>
    %716 = arith.mulf %715, %712 : vector<16x8xf32>
    %717 = arith.mulf %716, %712 : vector<16x8xf32>
    %718 = arith.mulf %717, %712 : vector<16x8xf32>
    %719 = arith.addf %712, %718 : vector<16x8xf32>
    %cst_250 = arith.constant 0.797884583 : f32
    %720 = vector.broadcast %cst_250 : f32 to vector<16x8xf32>
    %721 = arith.mulf %720, %719 : vector<16x8xf32>
    %722 = math.tanh %721 : vector<16x8xf32>
    %cst_251 = arith.constant 1.000000e+00 : f32
    %723 = vector.broadcast %cst_251 : f32 to vector<16x8xf32>
    %724 = arith.addf %723, %722 : vector<16x8xf32>
    %725 = arith.mulf %714, %724 : vector<16x8xf32>
    %726 = arith.mulf %709, %725 : vector<16x8xf32>
    %727 = arith.truncf %726 : vector<16x8xf32> to vector<16x8xbf16>
    %cst_252 = arith.constant dense<0.000000e+00> : vector<8x8xf32>
    %728 = tpu.matmul %584, %727, %cst_252 {dimension_numbers = #tpu.dot_dimension_numbers<[1], [0], [0], [1], [0, 0, 1, 1], [], []>} : vector<8x16xbf16>, vector<16x8xbf16>, vector<8x8xf32> -> vector<8x8xf32>
    %729 = tpu.concatenate %185, %366, %547, %728 in 1 : vector<8x8xf32>, vector<8x8xf32>, vector<8x8xf32>, vector<8x8xf32> -> vector<8x32xf32>
    %730 = arith.truncf %729 : vector<8x32xf32> to vector<8x32xbf16>
    %c0_253 = arith.constant 0 : index
    %c0_254 = arith.constant 0 : index
    %c0_255 = arith.constant 0 : index
    %731 = vector.load %arg5[%c0_253, %c0_254, %c0_255] : memref<1x8x32xbf16, #tpu.memory_space<vmem>>, vector<1x8x32xbf16>
    %732 = vector.shape_cast %731 : vector<1x8x32xbf16> to vector<8x32xbf16>
    %733 = vector.shape_cast %730 : vector<8x32xbf16> to vector<1x8x32xbf16>
    tpu.vector_store %arg5[%c0_253, %c0_254, %c0_255], %733 {strides = array<i32>} : memref<1x8x32xbf16, #tpu.memory_space<vmem>>, vector<1x8x32xbf16>,
    return
  }
  func.func @transform_0(%arg0: i32) -> i32 {
    %c0_i32 = arith.constant 0 : i32
    %c0_i32_0 = arith.constant 0 : i32
    return %c0_i32 : i32
  }
  func.func @transform_1(%arg0: i32) -> (i32, i32, i32) {
    %c0_i32 = arith.constant 0 : i32
    %c0_i32_0 = arith.constant 0 : i32
    %c0_i32_1 = arith.constant 0 : i32
    return %arg0, %c0_i32, %c0_i32_0 : i32, i32, i32
  }
  func.func @transform_2(%arg0: i32) -> (i32, i32, i32) {
    %c0_i32 = arith.constant 0 : i32
    %c0_i32_0 = arith.constant 0 : i32
    %c0_i32_1 = arith.constant 0 : i32
    %c0_i32_2 = arith.constant 0 : i32
    return %c0_i32, %c0_i32_0, %c0_i32_1 : i32, i32, i32
  }
  func.func @transform_3(%arg0: i32) -> (i32, i32) {
    %c0_i32 = arith.constant 0 : i32
    %c0_i32_0 = arith.constant 0 : i32
    %c0_i32_1 = arith.constant 0 : i32
    return %c0_i32, %c0_i32_0 : i32, i32
  }
  func.func @transform_4(%arg0: i32) -> (i32, i32, i32) {
    %c0_i32 = arith.constant 0 : i32
    %c0_i32_0 = arith.constant 0 : i32
    %c0_i32_1 = arith.constant 0 : i32
    return %arg0, %c0_i32, %c0_i32_0 : i32, i32, i32
  }
}

</mosaic_0001>

<llo_original>
// kernel: vars_d_forward.3
$region0: #{vars_d_forward.3}
  #allocation0 [shape = 'u32[]', space=smem, size = 0x4, offset = 0x4, fixed_abs, tag = 'smem constant byte address 0x4 - core index']
  #allocation1 [shape = 'u32[72,128]{1,0:T(1,128)}', space=vmem, size = 0x9000, scoped, tag = 'internal scratch']
  #allocation2 [shape = 'f32[16,64]{1,0:T(8,128)}', space=vmem, size = 0x2000, scoped, tag = 'scratch operand']
  %s0 = inlined_call_operand.vmem [shape: bf16[16,32], index: 0, kind: input, shape index: {}]
  %s1 = inlined_call_operand.vmem [shape: bf16[32,64], index: 1, kind: input, shape index: {}]
  %s2 = inlined_call_operand.vmem [shape: bf16[16,64], index: 2, kind: output, shape index: {}]
  %s3 = sld [smem:[#allocation0]]
  $region26: #{vars_d_forward.3} parent=0
    _
  %s5 = ssub.s32 1, %s3
  %s6 = scalar_select 0, %s5, %s3
  // Predicated region
  $region2: #{vars_d_forward.3} parent=0 // pred_check
    _
  $region3: #{vars_d_forward.3} parent=0 // pred_check_branch
    %8 = sbr.rel (0) target = $region5
  $region4: #{vars_d_forward.3} parent=0 // pred_region
    _
  $region5: #{vars_d_forward.3} parent=0 // pred_fallthru
    _
  // Predicated region
  $region6: #{vars_d_forward.3} parent=0 // pred_check
    _
  $region7: #{vars_d_forward.3} parent=0 // pred_check_branch
    %10 = sbr.rel (0) target = $region9
  $region8: #{vars_d_forward.3} parent=0 // pred_region
    _
  $region9: #{vars_d_forward.3} parent=0 // pred_fallthru
    _
  %p12 = scmp.eq.s32.totalorder 0, 0
  // Predicated region
  $region10: #{vars_d_forward.3} parent=0 // pred_check
    %p13 = pneg %p12
  $region11: #{vars_d_forward.3} parent=0 // pred_check_branch
    %15 = sbr.rel (%p13) target = $region13
  $region12: #{vars_d_forward.3} parent=0 // pred_region
    %vm16 = vcmask 523264
    %17 = vst.msk [vmem:[#allocation2] sm:$0xff] %vm16, 0.0
    %18 = vst.msk [vmem:[#allocation2 + $0x8] sm:$0xff] %vm16, 0.0
  $region13: #{vars_d_forward.3} parent=0 // pred_fallthru
    _
  %v19 = vld [vmem:[#allocation2] sm:$0xff]
  %v20 = vld [vmem:[#allocation2 + $0x8] sm:$0xff]
  %v21 = vld [vmem:[%s0] sm:$0xf]
  %v22 = vld [vmem:[%s0 + $0x4] sm:$0xf]
  %v23 = vld [vmem:[%s1] sm:$0xf]
  %v24 = vld [vmem:[%s1 + $0x4] sm:$0xf]
  %v25 = vld [vmem:[%s1 + $0x8] sm:$0xf]
  %v26 = vld [vmem:[%s1 + $0xc] sm:$0xf]
  %v29 = vunpack.c.l.b16 %v21
  %v30 = vunpack.c.l.b16 %v22
  %v31 = vpack.c.b16 %v30, %v29
  %v36 = vunpack.c.l.b16 %v23
  %v37 = vunpack.c.l.b16 %v24
  %v38 = vunpack.c.l.b16 %v25
  %v39 = vunpack.c.l.b16 %v26
  %v40 = vpack.c.b16 %v37, %v36
  %v41 = vpack.c.b16 %v39, %v38
  %vm44 = vcmask 261120
  %v46 = vsel %vm44, %v31, 0
  %48 = vmatpush.bf16.msra.mxu0 0
  %49 = vmatpush.bf16.msra.mxu0 0
  %50 = vmatpush.bf16.msra.mxu0 0
  %51 = vmatpush.bf16.msra.mxu0 0
  %52 = vmatpush.bf16.msra.mxu0 0
  %53 = vmatpush.bf16.msra.mxu0 0
  %54 = vmatpush.bf16.msra.mxu0 %v41
  %55 = vmatpush.bf16.msra.mxu0 %v40
  %56 = vmatmul.bf16.gmra.mxu0 %v46
  %v57 = vpop.f32.mrf.mxu0
  %v58 = vadd.f32 0.0, %v57
  %v59 = vpop.f32.mrf.mxu0
  %v60 = vadd.f32 0.0, %v59
  %61 = vdwg.mxu0
  %v62 = vadd.f32 %v19, %v58
  %v63 = vadd.f32 %v20, %v60
  %vm64 = vcmask 523264
  %65 = vst.msk [vmem:[#allocation2] sm:$0xff] %vm64, %v62
  %66 = vst.msk [vmem:[#allocation2 + $0x8] sm:$0xff] %vm64, %v63
  // Predicated region
  $region14: #{vars_d_forward.3} parent=0 // pred_check
    %p67 = pneg %p12
  $region15: #{vars_d_forward.3} parent=0 // pred_check_branch
    %69 = sbr.rel (%p67) target = $region17
  $region16: #{vars_d_forward.3} parent=0 // pred_region
    %v70 = vld [vmem:[#allocation2] sm:$0xff]
    %v71 = vld [vmem:[#allocation2 + $0x8] sm:$0xff]
    %v72 = vpack.c.bf16 %v70, %v70
    %v73 = vpack.c.bf16 %v71, %v71
    %vm74 = vcmask 519168
    %75 = vst.msk [vmem:[%s2] sm:$0xf] %vm74, %v72
    %76 = vst.msk [vmem:[%s2 + $0x4] sm:$0xf] %vm74, %v73
  $region17: #{vars_d_forward.3} parent=0 // pred_fallthru
    _
  // Predicated region
  $region18: #{vars_d_forward.3} parent=0 // pred_check
    _
  $region19: #{vars_d_forward.3} parent=0 // pred_check_branch
    %78 = sbr.rel (0) target = $region21
  $region20: #{vars_d_forward.3} parent=0 // pred_region
    _
  $region21: #{vars_d_forward.3} parent=0 // pred_fallthru
    _
  // Predicated region
  $region22: #{vars_d_forward.3} parent=0 // pred_check
    _
  $region23: #{vars_d_forward.3} parent=0 // pred_check_branch
    %80 = sbr.rel (0) target = $region25
  $region24: #{vars_d_forward.3} parent=0 // pred_region
    _
  $region25: #{vars_d_forward.3} parent=0 // pred_fallthru
    _

// kernel: vars_d_forward.5
$region0: #{vars_d_forward.5}
  #allocation0 [shape = 'u32[]', space=smem, size = 0x4, offset = 0x4, fixed_abs, tag = 'smem constant byte address 0x4 - core index']
  #allocation1 [shape = 'u32[72,128]{1,0:T(1,128)}', space=vmem, size = 0x9000, scoped, tag = 'internal scratch']
  #allocation2 [shape = 'f32[16,32]{1,0:T(8,128)}', space=vmem, size = 0x2000, scoped, tag = 'scratch operand']
  %s0 = inlined_call_operand.vmem [shape: bf16[16,32], index: 0, kind: input, shape index: {}]
  %s1 = inlined_call_operand.vmem [shape: bf16[32,32], index: 1, kind: input, shape index: {}]
  %s2 = inlined_call_operand.vmem [shape: f32[1,32], index: 2, kind: input, shape index: {}]
  %s3 = inlined_call_operand.hbm [shape: f32[16,32], index: 3, kind: output, shape index: {}]
  %s4 = sld [smem:[#allocation0]]
  $region30: #{vars_d_forward.5} parent=0
    _
  %s6 = ssub.s32 1, %s4
  %s7 = scalar_select 0, %s6, %s4
  $region1: #{vars_d_forward.5} parent=0
    #allocation3 [shape = 'u8[8192]{0}', space=vmem, size = 0x2000, scoped, tag = 'output window, operand 0, single buffered']
    #allocation4 [shape = 's32[1]{0}', space=sflag, size = 0x4, scoped, tag = 'scoped memory for vars_d_forward.5']
    %8 = vsyncpa [#allocation4], 0
    // Predicated region
    $region2: #{vars_d_forward.5} parent=1 // pred_check
      _
    $region3: #{vars_d_forward.5} parent=1 // pred_check_branch
      %10 = sbr.rel (0) target = $region5
    $region4: #{vars_d_forward.5} parent=1 // pred_region
      _
    $region5: #{vars_d_forward.5} parent=1 // pred_fallthru
      _
    // Predicated region
    $region6: #{vars_d_forward.5} parent=1 // pred_check
      _
    $region7: #{vars_d_forward.5} parent=1 // pred_check_branch
      %12 = sbr.rel (0) target = $region9
    $region8: #{vars_d_forward.5} parent=1 // pred_region
      _
    $region9: #{vars_d_forward.5} parent=1 // pred_fallthru
      _
    // Predicated region
    $region10: #{vars_d_forward.5} parent=1 // pred_check
      _
    $region11: #{vars_d_forward.5} parent=1 // pred_check_branch
      %14 = sbr.rel (0) target = $region13
    $region12: #{vars_d_forward.5} parent=1 // pred_region
      _
    $region13: #{vars_d_forward.5} parent=1 // pred_fallthru
      _
    %p16 = scmp.eq.s32.totalorder 0, 0
    // Predicated region
    $region14: #{vars_d_forward.5} parent=1 // pred_check
      %p17 = pneg %p16
    $region15: #{vars_d_forward.5} parent=1 // pred_check_branch
      %19 = sbr.rel (%p17) target = $region17
    $region16: #{vars_d_forward.5} parent=1 // pred_region
      %vm20 = vcmask 261120
      %21 = vst.msk [vmem:[#allocation2] sm:$0xff] %vm20, 0.0
      %22 = vst.msk [vmem:[#allocation2 + $0x8] sm:$0xff] %vm20, 0.0
    $region17: #{vars_d_forward.5} parent=1 // pred_fallthru
      _
    %v23 = vld [vmem:[#allocation2] sm:$0xff]
    %v24 = vld [vmem:[#allocation2 + $0x8] sm:$0xff]
    %v25 = vld [vmem:[%s0] sm:$0xf]
    %v26 = vld [vmem:[%s0 + $0x4] sm:$0xf]
    %v27 = vld [vmem:[%s1] sm:$0xf]
    %v28 = vld [vmem:[%s1 + $0x4] sm:$0xf]
    %v29 = vld [vmem:[%s1 + $0x8] sm:$0xf]
    %v30 = vld [vmem:[%s1 + $0xc] sm:$0xf]
    %v33 = vunpack.c.l.b16 %v25
    %v34 = vunpack.c.l.b16 %v26
    %v35 = vpack.c.b16 %v34, %v33
    %v40 = vunpack.c.l.b16 %v27
    %v41 = vunpack.c.l.b16 %v28
    %v42 = vunpack.c.l.b16 %v29
    %v43 = vunpack.c.l.b16 %v30
    %v44 = vpack.c.b16 %v41, %v40
    %v45 = vpack.c.b16 %v43, %v42
    %vm48 = vcmask 261120
    %v50 = vsel %vm48, %v35, 0
    %52 = vmatpush.bf16.msra.mxu0 0
    %53 = vmatpush.bf16.msra.mxu0 0
    %54 = vmatpush.bf16.msra.mxu0 0
    %55 = vmatpush.bf16.msra.mxu0 0
    %56 = vmatpush.bf16.msra.mxu0 0
    %57 = vmatpush.bf16.msra.mxu0 0
    %58 = vmatpush.bf16.msra.mxu0 %v45
    %59 = vmatpush.bf16.msra.mxu0 %v44
    %60 = vmatmul.bf16.gmra.mxu0 %v50
    %v61 = vpop.f32.mrf.mxu0
    %v62 = vadd.f32 0.0, %v61
    %v63 = vpop.f32.mrf.mxu0
    %v64 = vadd.f32 0.0, %v63
    %65 = vdwg.mxu0
    %v66 = vadd.f32 %v23, %v62
    %v67 = vadd.f32 %v24, %v64
    %68 = vst.msk [vmem:[#allocation2] sm:$0xff] %vm48, %v66
    %69 = vst.msk [vmem:[#allocation2 + $0x8] sm:$0xff] %vm48, %v67
    // Predicated region
    $region18: #{vars_d_forward.5} parent=1 // pred_check
      %p70 = pneg %p16
    $region19: #{vars_d_forward.5} parent=1 // pred_check_branch
      %72 = sbr.rel (%p70) target = $region21
    $region20: #{vars_d_forward.5} parent=1 // pred_region
      %v73 = vld [vmem:[#allocation2] sm:$0xff]
      %v74 = vld [vmem:[#allocation2 + $0x8] sm:$0xff]
      %v75 = vld [vmem:[%s2] sm:$0x1]
      %v77 = vperm.slane %v75, 0
      %v79 = vadd.f32 %v73, %v77
      %v80 = vadd.f32 %v74, %v77
      %81 = vst.msk [vmem:[#allocation3] sm:$0xff] %vm48, %v79
      %82 = vst.msk [vmem:[#allocation3 + $0x8] sm:$0xff] %vm48, %v80
    $region21: #{vars_d_forward.5} parent=1 // pred_fallthru
      _
    // Predicated region
    $region22: #{vars_d_forward.5} parent=1 // pred_check
      _
    $region23: #{vars_d_forward.5} parent=1 // pred_check_branch
      %84 = sbr.rel (0) target = $region25
    $region24: #{vars_d_forward.5} parent=1 // pred_region
      %86 = vsyncadd [#allocation4], 0
      %s87 = sshll.u32 [#allocation3], 4
      %s88 = int_to_ptr.vmem [resolvable:$true] %s87
      %s89 = sshll.u32 %s3, 4
      %s90 = int_to_ptr.hbm [resolvable:$true] %s89
      %95 = dma.vmem_to_hbm [thread:$0]  %s88, 256, %s90, [#allocation4], 128, 128, 8
    $region25: #{vars_d_forward.5} parent=1 // pred_fallthru
      _
    // Predicated region
    $region26: #{vars_d_forward.5} parent=1 // pred_check
      _
    $region27: #{vars_d_forward.5} parent=1 // pred_check_branch
      %97 = sbr.rel (0) target = $region29
    $region28: #{vars_d_forward.5} parent=1 // pred_region
      %99 = dma.done [#allocation4], 256
    $region29: #{vars_d_forward.5} parent=1 // pred_fallthru
      _
    %100 = vsyncpa [#allocation4], 1

// kernel: vars_d_forward.4
$region0: #{vars_d_forward.4}
  #allocation0 [shape = 'u32[]', space=smem, size = 0x4, offset = 0x4, fixed_abs, tag = 'smem constant byte address 0x4 - core index']
  #allocation1 [shape = 'u32[72,128]{1,0:T(1,128)}', space=vmem, size = 0x9000, scoped, tag = 'internal scratch']
  %s0 = inlined_call_operand.vmem [shape: f32[3], index: 0, kind: input, shape index: {}]
  %s1 = inlined_call_operand.vmem [shape: bf16[2,8,64], index: 1, kind: input, shape index: {}]
  %s2 = inlined_call_operand.vmem [shape: bf16[4,8,16], index: 2, kind: input, shape index: {}]
  %s3 = inlined_call_operand.vmem [shape: bf16[16,16], index: 3, kind: input, shape index: {}]
  %s4 = inlined_call_operand.vmem [shape: bf16[2,8,32], index: 4, kind: output, shape index: {}]
  %s5 = sld [smem:[#allocation0]]
  $region53: #{vars_d_forward.4} parent=0
    _
  %s7 = ssub.s32 1, %s5
  %s8 = scalar_select 0, %s7, %s5
  $region1: #{vars_d_forward.4} parent=0
    #allocation2 [shape = 'u8[512]{0}', space=smem, size = 0x200, scoped, tag = 'input window, operand 0, single buffered']
    #allocation3 [shape = 's32[2]{0}', space=sflag, size = 0x8, scoped, tag = 'scoped memory for vars_d_forward.4']
    %9 = vsyncpa [#allocation3], 0
    loop: start=0, step=1, limit=4
    $region2: #{vars_d_forward.4} parent=1 // loop_pre_header
      _
    $region3: #{vars_d_forward.4} parent=1 // loop_header
      %s11 = sphi 0, %s15
      %p12 = scmp.ge.s32.totalorder %s11, 4
      %s19 = sphi 0, %s19
      %s21 = sphi 0, %s19
      %s22 = sphi 0, %s21
      %s36 = sphi 0, %s22
      %s42 = sphi 0, %s44
      %s45 = sphi 0, %s42
      %s46 = sphi 0, %s45
      %s62 = sphi 0, %s46
      %s66 = sphi 0, %s66
      %s68 = sphi 0, %s66
      %s69 = sphi 0, %s68
      %s83 = sphi 0, %s69
      %s87 = sphi 0, %s87
      %s89 = sphi 0, %s87
      %s90 = sphi 0, %s89
      %s104 = sphi 0, %s90
      %s110 = sphi 0, %s112
      %s113 = sphi 0, %s110
      %s114 = sphi 0, %s113
      %s130 = sphi 0, %s114
    $region4: #{vars_d_forward.4} parent=1 // loop_header_branch
      %14 = sbr.rel (%p12) target = $region8
    $region5: #{vars_d_forward.4} parent=1 // loop_body
      %s16 = ssub.s32 %s11, 1
      %s17 = ssub.s32 %s11, 2
      %s18 = sadd.s32 %s11, 1
      %s20 = sadd.s32 %s19, 1
      %p23 = scmp.eq.s32.totalorder %s11, 1
      %p24 = scmp.ne.s32.totalorder %s19, %s21
      %p25 = scmp.eq.s32.totalorder %s11, 0
      %p26 = por %p24, %p25
      %p27 = scmp.ne.s32.totalorder %s19, %s21
      %p28 = scmp.eq.s32.totalorder %s16, 1
      %p29 = por %p27, %p28
      %p30 = scmp.ne.s32.totalorder %s21, %s22
      %p31 = scmp.eq.s32.totalorder %s16, 0
      %p32 = por %p30, %p31
      %p33 = scmp.ne.s32.totalorder %s21, %s22
      %p34 = scmp.eq.s32.totalorder %s17, 1
      %p35 = por %p33, %p34
      %p37 = scmp.ne.s32.totalorder %s22, %s36
      %p38 = scmp.eq.s32.totalorder %s17, 0
      %p39 = por %p37, %p38
      %s40 = ssub.s32 %s11, %s18
      %p41 = scmp.eq.s32.totalorder %s40, 0
      %s43 = sadd.s32 %s42, 1
      %s44 = scalar_select %p41, %s42, %s43
      %p47 = pneg %p41
      %p48 = scmp.eq.s32.totalorder %s11, 1
      %p49 = por %p47, %p48
      %p50 = scmp.ne.s32.totalorder %s42, %s45
      %p51 = scmp.eq.s32.totalorder %s11, 0
      %p52 = por %p50, %p51
      %p53 = scmp.ne.s32.totalorder %s42, %s45
      %p54 = scmp.eq.s32.totalorder %s16, 1
      %p55 = por %p53, %p54
      %p56 = scmp.ne.s32.totalorder %s45, %s46
      %p57 = scmp.eq.s32.totalorder %s16, 0
      %p58 = por %p56, %p57
      %p59 = scmp.ne.s32.totalorder %s45, %s46
      %p60 = scmp.eq.s32.totalorder %s17, 1
      %p61 = por %p59, %p60
      %p63 = scmp.ne.s32.totalorder %s46, %s62
      %p64 = scmp.eq.s32.totalorder %s17, 0
      %p65 = por %p63, %p64
      %s67 = sadd.s32 %s66, 1
      %p70 = scmp.eq.s32.totalorder %s11, 1
      %p71 = scmp.ne.s32.totalorder %s66, %s68
      %p72 = scmp.eq.s32.totalorder %s11, 0
      %p73 = por %p71, %p72
      %p74 = scmp.ne.s32.totalorder %s66, %s68
      %p75 = scmp.eq.s32.totalorder %s16, 1
      %p76 = por %p74, %p75
      %p77 = scmp.ne.s32.totalorder %s68, %s69
      %p78 = scmp.eq.s32.totalorder %s16, 0
      %p79 = por %p77, %p78
      %p80 = scmp.ne.s32.totalorder %s68, %s69
      %p81 = scmp.eq.s32.totalorder %s17, 1
      %p82 = por %p80, %p81
      %p84 = scmp.ne.s32.totalorder %s69, %s83
      %p85 = scmp.eq.s32.totalorder %s17, 0
      %p86 = por %p84, %p85
      %s88 = sadd.s32 %s87, 1
      %p91 = scmp.eq.s32.totalorder %s11, 1
      %p92 = scmp.ne.s32.totalorder %s87, %s89
      %p93 = scmp.eq.s32.totalorder %s11, 0
      %p94 = por %p92, %p93
      %p95 = scmp.ne.s32.totalorder %s87, %s89
      %p96 = scmp.eq.s32.totalorder %s16, 1
      %p97 = por %p95, %p96
      %p98 = scmp.ne.s32.totalorder %s89, %s90
      %p99 = scmp.eq.s32.totalorder %s16, 0
      %p100 = por %p98, %p99
      %p101 = scmp.ne.s32.totalorder %s89, %s90
      %p102 = scmp.eq.s32.totalorder %s17, 1
      %p103 = por %p101, %p102
      %p105 = scmp.ne.s32.totalorder %s90, %s104
      %p106 = scmp.eq.s32.totalorder %s17, 0
      %p107 = por %p105, %p106
      %s108 = ssub.s32 %s11, %s18
      %p109 = scmp.eq.s32.totalorder %s108, 0
      %s111 = sadd.s32 %s110, 1
      %s112 = scalar_select %p109, %s110, %s111
      %p115 = pneg %p109
      %p116 = scmp.eq.s32.totalorder %s11, 1
      %p117 = por %p115, %p116
      %p118 = scmp.ne.s32.totalorder %s110, %s113
      %p119 = scmp.eq.s32.totalorder %s11, 0
      %p120 = por %p118, %p119
      %p121 = scmp.ne.s32.totalorder %s110, %s113
      %p122 = scmp.eq.s32.totalorder %s16, 1
      %p123 = por %p121, %p122
      %p124 = scmp.ne.s32.totalorder %s113, %s114
      %p125 = scmp.eq.s32.totalorder %s16, 0
      %p126 = por %p124, %p125
      %p127 = scmp.ne.s32.totalorder %s113, %s114
      %p128 = scmp.eq.s32.totalorder %s17, 1
      %p129 = por %p127, %p128
      %p131 = scmp.ne.s32.totalorder %s114, %s130
      %p132 = scmp.eq.s32.totalorder %s17, 0
      %p133 = por %p131, %p132
      %p134 = scmp.le.s32.totalorder 1, %s11
      %p135 = scmp.lt.s32.totalorder %s11, 3
      %p136 = pnand %p134, %p135
      %p137 = pneg %p136
      // Predicated region
      $region9: #{vars_d_forward.4} parent=5 // pred_check
        _
      $region10: #{vars_d_forward.4} parent=5 // pred_check_branch
        %139 = sbr.rel (%p136) target = $region12
      $region11: #{vars_d_forward.4} parent=5 // pred_region
        %s140 = ssub.s32 %s11, 1
        // Predicated region
        $region13: #{vars_d_forward.4} parent=11 // pred_check
          %p141 = pneg %p32
        $region14: #{vars_d_forward.4} parent=11 // pred_check_branch
          %143 = sbr.rel (%p141) target = $region16
        $region15: #{vars_d_forward.4} parent=11 // pred_region
          %145 = vsyncadd [#allocation3], 0
          %s147 = sshll.u32 %s0, 4
          %s148 = int_to_ptr.vmem [resolvable:$true] %s147
          %150 = dma.vmem_to_smem %s148, 16, [#allocation2], [#allocation3]
        $region16: #{vars_d_forward.4} parent=11 // pred_fallthru
          _
        // Predicated region
        $region17: #{vars_d_forward.4} parent=11 // pred_check
          %p151 = pneg %p79
        $region18: #{vars_d_forward.4} parent=11 // pred_check_branch
          %153 = sbr.rel (%p151) target = $region20
        $region19: #{vars_d_forward.4} parent=11 // pred_region
          _
        $region20: #{vars_d_forward.4} parent=11 // pred_fallthru
          _
        // Predicated region
        $region21: #{vars_d_forward.4} parent=11 // pred_check
          %p154 = pneg %p100
        $region22: #{vars_d_forward.4} parent=11 // pred_check_branch
          %156 = sbr.rel (%p154) target = $region24
        $region23: #{vars_d_forward.4} parent=11 // pred_region
          _
        $region24: #{vars_d_forward.4} parent=11 // pred_fallthru
          _
      $region12: #{vars_d_forward.4} parent=5 // pred_fallthru
        _
      %p157 = scmp.lt.s32.totalorder %s11, 2
      // Predicated region
      $region25: #{vars_d_forward.4} parent=5 // pred_check
        %p158 = pneg %p157
      $region26: #{vars_d_forward.4} parent=5 // pred_check_branch
        %160 = sbr.rel (%p158) target = $region28
      $region27: #{vars_d_forward.4} parent=5 // pred_region
        // Predicated region
        $region29: #{vars_d_forward.4} parent=27 // pred_check
          %p161 = pneg %p52
        $region30: #{vars_d_forward.4} parent=27 // pred_check_branch
          %163 = sbr.rel (%p161) target = $region32
        $region31: #{vars_d_forward.4} parent=27 // pred_region
          %p164 = scmp.lt.s32.totalorder %s11, 1
          %s165 = scalar_select %p164, %s11, 1
          %s166 = smul.addr %s165, 4
          %s167 = scalar_lea.vmem %s1, %s166
        $region32: #{vars_d_forward.4} parent=27 // pred_fallthru
          _
      $region28: #{vars_d_forward.4} parent=5 // pred_fallthru
        _
      %p168 = scmp.le.s32.totalorder 1, %s11
      %p169 = scmp.lt.s32.totalorder %s11, 3
      %p170 = pnand %p168, %p169
      %p171 = pneg %p170
      // Predicated region
      $region33: #{vars_d_forward.4} parent=5 // pred_check
        _
      $region34: #{vars_d_forward.4} parent=5 // pred_check_branch
        %173 = sbr.rel (%p170) target = $region36
      $region35: #{vars_d_forward.4} parent=5 // pred_region
        %s174 = ssub.s32 %s11, 1
        // Predicated region
        $region37: #{vars_d_forward.4} parent=35 // pred_check
          %p175 = pneg %p32
        $region38: #{vars_d_forward.4} parent=35 // pred_check_branch
          %177 = sbr.rel (%p175) target = $region40
        $region39: #{vars_d_forward.4} parent=35 // pred_region
          %179 = dma.done [#allocation3], 16
        $region40: #{vars_d_forward.4} parent=35 // pred_fallthru
          _
        %180 = sfence
        %p181 = pneg %p32
        %p182 = pneg %p29
        %p183 = scmp.lt.s32.totalorder %s16, 1
        %s184 = scalar_select %p183, %s16, 1
        %s185 = smul.addr %s184, 4
        %s186 = scalar_lea.vmem %s1, %s185
        %p187 = pneg %p58
        %p188 = pneg %p55
        %p189 = pneg %p79
        %p190 = pneg %p76
        %p191 = pneg %p100
        %p192 = pneg %p97
        %p193 = pneg %p126
        %p194 = pneg %p123
        %p195 = scmp.lt.s32.totalorder %s16, 1
        %s196 = scalar_select %p195, %s16, 1
        %s197 = smul.addr %s196, 4
        %s198 = scalar_lea.vmem %s4, %s197
        %p199 = scmp.lt.s32.totalorder %s16, 1
        %s200 = scalar_select %p199, %s16, 1
        %s201 = smul.addr %s200, 4
        %s202 = scalar_lea.vmem %s1, %s201
        %p203 = scmp.lt.s32.totalorder %s16, 1
        %s204 = scalar_select %p203, %s16, 1
        %s205 = smul.addr %s204, 4
        %s206 = scalar_lea.vmem %s4, %s205
        %s208 = sld [smem:[#allocation2]]
        %s209 = sld [smem:[#allocation2 + $0x1]]
        %s210 = sld [smem:[#allocation2 + $0x2]]
        %s211 = smul.f32 %s208, %s210
        %v212 = vld [vmem:[%s3] sm:$0xf]
        %v213 = vld [vmem:[%s3 + $0x4] sm:$0xf]
        %v214 = vld [vmem:[%s202] sm:$0xf]
        %v215 = vunpack.c.l.bf16 %v214
        %v216 = vld [vmem:[%s2] sm:$0xf]
        %v217 = vmul.f32 %v215, 0.59460354
        %v218 = vmul.f32 %v217, %v217
        %vm219 = vcmask 64512
        %v220 = vsel %vm219, %v218, 0.0
        %221 = vadd.xlane.f32.xlu0 %v220
        %v222 = vpop.xlane.xlu0 %221
        %v223 = vmax.f32 %v222, 1e-24
        %v224 = vrsqrt.pop %v223
        %v225 = vmul.f32 %v224, %v223
        %v226 = vmul.f32 %v225, %v224
        %v227 = vmul.f32 0.5, %v226
        %v228 = vsub.f32 1.5, %v227
        %v229 = vmul.f32 %v224, %v228
        %vm230 = vweird.f32 %v223
        %vm231 = vweird.f32 %v224
        %vm232 = vmor %vm230, %vm231
        %v233 = vsel %vm232, %v224, %v229
        %v234 = vmul.f32 %v217, %v233
        %v235 = vmul.f32 %v233, %v233
        %v236 = vmul.f32 %v222, %v235
        %v237 = vpack.c.bf16 %v234, %v234
        %v239 = vsel %vm219, %v237, 0
        %vm241 = vcmask 1043456
        %v243 = vsel %vm241, %v216, 0
        %245 = vmatpush.bf16.msra.mxu0 0
        %246 = vmatpush.bf16.msra.mxu0 0
        %247 = vmatpush.bf16.msra.mxu0 0
        %248 = vmatpush.bf16.msra.mxu0 0
        %249 = vmatpush.bf16.msra.mxu0 0
        %250 = vmatpush.bf16.msra.mxu0 0
        %251 = vmatpush.bf16.msra.mxu0 0
        %252 = vmatpush.bf16.msra.mxu0 %v243
        %253 = vmatmul.bf16.gmra.mxu0 %v239
        %v254 = vpop.f32.mrf.mxu0
        %v255 = vadd.f32 0.0, %v254
        %v256 = vpop.f32.mrf.mxu0
        %257 = vdwg.mxu0
        %v258 = vmul.f32 %v236, 0.5
        %v259 = vsub.f32 %v255, %v258
        %v260 = vmul.f32 %v259, 1.442695
        %v261 = vpow.pop %v260
        %v262 = vmul.f32 %v261, 0.25
        %v263 = vmul.f32 %v262, %v262
        %vm264 = vcmask 130048
        %v265 = vsel %vm264, %v263, 0.0
        %v266 = vrot.slane %v265, 4
        %v267 = vadd.f32 %v265, %v266
        %v268 = vrot.slane %v267, 2
        %v269 = vadd.f32 %v267, %v268
        %v270 = vrot.slane %v269, 1
        %v271 = vadd.f32 %v269, %v270
        %v272 = vmax.f32 %v271, 1e-24
        %v273 = vrsqrt.pop %v272
        %v274 = vmul.f32 %v273, %v272
        %v275 = vmul.f32 %v274, %v273
        %v276 = vmul.f32 0.5, %v275
        %v277 = vsub.f32 1.5, %v276
        %v278 = vmul.f32 %v273, %v277
        %vm279 = vweird.f32 %v272
        %vm280 = vweird.f32 %v273
        %vm281 = vmor %vm279, %vm280
        %v282 = vsel %vm281, %v273, %v278
        %v283 = vmul.f32 %v262, %v282
        %v284 = vpack.c.bf16 %v283, %v283
        %285 = vxpose.xlu0.c.b16.start [1/8] %v284, 128
        %286 = vxpose.xlu0.c.b16.cont [2/8] 0, 128
        %287 = vxpose.xlu0.c.b16.cont [3/8] 0, 128
        %288 = vxpose.xlu0.c.b16.cont [4/8] 0, 128
        %289 = vxpose.xlu0.c.b16.cont [5/8] 0, 128
        %290 = vxpose.xlu0.c.b16.cont [6/8] 0, 128
        %291 = vxpose.xlu0.c.b16.cont [7/8] 0, 128
        %292 = vxpose.xlu0.c.b16.end [8/8] 0, 128
        %v293 = vpop.trf.xlu0
        %v294 = vpop.trf.xlu0
        %v295 = vpop.trf.xlu0
        %v296 = vpop.trf.xlu0
        %v297 = vpop.trf.xlu0
        %v298 = vpop.trf.xlu0
        %v299 = vpop.trf.xlu0
        %v300 = vpop.trf.xlu0
        %v302 = vsel %vm219, %v293, 0
        %v305 = vsel %vm241, %v284, 0
        %307 = vmatpush.bf16.msra.mxu0 0
        %308 = vmatpush.bf16.msra.mxu0 0
        %309 = vmatpush.bf16.msra.mxu0 0
        %310 = vmatpush.bf16.msra.mxu0 0
        %311 = vmatpush.bf16.msra.mxu0 0
        %312 = vmatpush.bf16.msra.mxu0 0
        %313 = vmatpush.bf16.msra.mxu0 0
        %314 = vmatpush.bf16.msra.mxu0 %v305
        %315 = vmatmul.bf16.gmra.mxu0 %v302
        %v316 = vpop.f32.mrf.mxu0
        %v317 = vadd.f32 0.0, %v316
        %v318 = vpop.f32.mrf.mxu0
        %v319 = vadd.f32 0.0, %v318
        %320 = vdwg.mxu0
        %v322 = vunpack.c.l.b16 %v214
        %v323 = vpack.c.b16 %v322, %v322
        %324 = vrot.lane.b32.xlu0 %v323, 96
        %v325 = vpop.permute.xlu0 %324
        %v327 = vsel %vm241, %v325, 0
        %329 = vmatpush.bf16.msra.mxu0 0
        %330 = vmatpush.bf16.msra.mxu0 0
        %331 = vmatpush.bf16.msra.mxu0 0
        %332 = vmatpush.bf16.msra.mxu0 0
        %333 = vmatpush.bf16.msra.mxu0 0
        %334 = vmatpush.bf16.msra.mxu0 0
        %335 = vmatpush.bf16.msra.mxu0 0
        %336 = vmatpush.bf16.msra.mxu0 %v327
        %337 = vmatmul.bf16.gmra.mxu0 %v302
        %v338 = vpop.f32.mrf.mxu0
        %v339 = vadd.f32 0.0, %v338
        %v340 = vpop.f32.mrf.mxu0
        %v341 = vadd.f32 0.0, %v340
        %342 = vdwg.mxu0
        %v343 = vand.u32 2147483647, %v317
        %v344 = vand.u32 2147483647, %v319
        %v345 = vsel %vm264, %v343, 0.0
        %346 = vadd.xlane.f32.xlu0 %v345
        %v347 = vpop.xlane.xlu0 %346
        %v348 = vsel %vm264, %v344, 0.0
        %349 = vadd.xlane.f32.xlu0 %v348
        %v350 = vpop.xlane.xlu0 %349
        %v351 = vmax.f32 %v347, %v350
        %v352 = vrot.slane %v351, 4
        %v353 = vmax.f32 %v351, %v352
        %v354 = vrot.slane %v353, 2
        %v355 = vmax.f32 %v353, %v354
        %v356 = vrot.slane %v355, 1
        %v357 = vmax.f32 %v355, %v356
        %s358 = vtos %v357
        %s359 = sadd.f32 %s358, 1.0
        %v360 = vstv %s209
        %v361 = vrcp.pop %v360
        %v362 = vmul.f32 %v360, %v361
        %v363 = vsub.f32 1.0, %v362
        %v364 = vmul.f32 %v361, %v363
        %v365 = vadd.f32 %v361, %v364
        %vm366 = vweird.f32 %v360
        %vm367 = vweird.f32 %v361
        %vm368 = vmor %vm366, %vm367
        %v369 = vsel %vm368, %v361, %v365
        %v370 = vand.u32 2147483647, %v360
        %vm371 = vcmp.eq.f32.partialorder %v370, 8.507059e+37
        %v372 = vand.u32 %v360, 2147483648
        %v373 = vor.u32 1.1754944e-38, %v372
        %v374 = vsel %vm371, %v373, %v369
        %s375 = vtos %v374
        %s376 = smul.f32 %s359, %s375
        %v377 = vstv %s376
        %v378 = vrcp.pop %v377
        %v379 = vmul.f32 %v377, %v378
        %v380 = vsub.f32 1.0, %v379
        %v381 = vmul.f32 %v378, %v380
        %v382 = vadd.f32 %v378, %v381
        %vm383 = vweird.f32 %v377
        %vm384 = vweird.f32 %v378
        %vm385 = vmor %vm383, %vm384
        %v386 = vsel %vm385, %v378, %v382
        %v387 = vand.u32 2147483647, %v377
        %vm388 = vcmp.eq.f32.partialorder %v387, 8.507059e+37
        %v389 = vand.u32 %v377, 2147483648
        %v390 = vor.u32 1.1754944e-38, %v389
        %v391 = vsel %vm388, %v390, %v386
        %s392 = vtos %v391
        %s393 = smul.f32 %s211, %s392
        %v394 = vpack.c.bf16 %v319, %v317
        %v397 = vunpack.c.l.b16 %v212
        %v398 = vunpack.c.l.b16 %v213
        %v399 = vpack.c.b16 %v398, %v397
        %v401 = vsel %vm264, %v399, 0
        %403 = vmatpush.bf16.msra.mxu0 0
        %404 = vmatpush.bf16.msra.mxu0 0
        %405 = vmatpush.bf16.msra.mxu0 0
        %406 = vmatpush.bf16.msra.mxu0 0
        %407 = vmatpush.bf16.msra.mxu0 0
        %408 = vmatpush.bf16.msra.mxu0 0
        %409 = vmatpush.bf16.msra.mxu0 0
        %410 = vmatpush.bf16.msra.mxu0 %v394
        %411 = vmatmul.bf16.gmra.mxu0 %v401
        %v412 = vpop.f32.mrf.mxu0
        %v413 = vadd.f32 0.0, %v412
        %v414 = vpop.f32.mrf.mxu0
        %v415 = vadd.f32 0.0, %v414
        %416 = vdwg.mxu0
        %v417 = vpack.c.bf16 %v415, %v413
        %v420 = vsel %vm264, %v417, 0
        %422 = vmatpush.bf16.msra.mxu0 0
        %423 = vmatpush.bf16.msra.mxu0 0
        %424 = vmatpush.bf16.msra.mxu0 0
        %425 = vmatpush.bf16.msra.mxu0 0
        %426 = vmatpush.bf16.msra.mxu0 0
        %427 = vmatpush.bf16.msra.mxu0 0
        %428 = vmatpush.bf16.msra.mxu0 0
        %429 = vmatpush.bf16.msra.mxu0 %v399
        %430 = vmatmul.bf16.gmra.mxu0 %v420
        %v431 = vpop.f32.mrf.mxu0
        %v432 = vadd.f32 0.0, %v431
        %v433 = vpop.f32.mrf.mxu0
        %v434 = vadd.f32 0.0, %v433
        %435 = vdwg.mxu0
        %v436 = vstv %s392
        %v437 = vmul.f32 %v432, %v436
        %v438 = vmul.f32 %v434, %v436
        %v439 = vpack.c.bf16 %v438, %v437
        %v440 = vmul.f32 %v339, %v436
        %v441 = vmul.f32 %v341, %v436
        %vm442 = vcmp.gt.f32.partialorder %v339, 0.0
        %vm443 = vcmp.gt.f32.partialorder %v341, 0.0
        %vm444 = vcmp.lt.f32.partialorder %v339, 0.0
        %vm445 = vcmp.lt.f32.partialorder %v341, 0.0
        %v446 = vsel %vm444, -1.0, 0.0
        %v447 = vsel %vm445, -1.0, 0.0
        %v448 = vsel %vm442, 1.0, %v446
        %v449 = vsel %vm443, 1.0, %v447
        %v450 = vand.u32 2147483647, %v339
        %v451 = vand.u32 2147483647, %v341
        %v452 = vstv %s211
        %v453 = vsub.f32 %v450, %v452
        %v454 = vsub.f32 %v451, %v452
        %v455 = vmul.f32 %v453, 0.5
        %v456 = vmul.f32 %v454, 0.5
        %v457 = vmul.f32 %v453, 0.044715
        %v458 = vmul.f32 %v454, 0.044715
        %v459 = vmul.f32 %v457, %v453
        %v460 = vmul.f32 %v458, %v454
        %v461 = vmul.f32 %v459, %v453
        %v462 = vmul.f32 %v460, %v454
        %v463 = vadd.f32 %v453, %v461
        %v464 = vadd.f32 %v454, %v462
        %v465 = vmul.f32 %v463, 0.7978846
        %v466 = vmul.f32 %v464, 0.7978846
        %v467 = vtanh.pop %v465
        %v468 = vtanh.pop %v466
        %v469 = vadd.f32 %v467, 1.0
        %v470 = vadd.f32 %v468, 1.0
        %v471 = vmul.f32 %v455, %v469
        %v472 = vmul.f32 %v456, %v470
        %v473 = vmul.f32 %v448, %v471
        %v474 = vmul.f32 %v449, %v472
        %v475 = vpack.c.bf16 %v474, %v473
        %v477 = vsel %vm264, %v439, 0
        %479 = vmatpush.bf16.msra.mxu0 0
        %480 = vmatpush.bf16.msra.mxu0 0
        %481 = vmatpush.bf16.msra.mxu0 0
        %482 = vmatpush.bf16.msra.mxu0 0
        %483 = vmatpush.bf16.msra.mxu0 0
        %484 = vmatpush.bf16.msra.mxu0 0
        %485 = vmatpush.bf16.msra.mxu0 0
        %486 = vmatpush.bf16.msra.mxu0 %v475
        %487 = vmatmul.bf16.gmra.mxu0 %v477
        %v488 = vpop.f32.mrf.mxu0
        %v489 = vadd.f32 0.0, %v488
        %v490 = vpop.f32.mrf.mxu0
        %v491 = vadd.f32 0.0, %v490
        %492 = vdwg.mxu0
        %v493 = vsub.f32 %v473, %v489
        %v494 = vsub.f32 %v474, %v491
        %v495 = vadd.f32 %v493, %v440
        %v496 = vadd.f32 %v494, %v441
        %vm497 = vcmp.gt.f32.partialorder %v495, 0.0
        %vm498 = vcmp.gt.f32.partialorder %v496, 0.0
        %vm499 = vcmp.lt.f32.partialorder %v495, 0.0
        %vm500 = vcmp.lt.f32.partialorder %v496, 0.0
        %v501 = vsel %vm499, -1.0, 0.0
        %v502 = vsel %vm500, -1.0, 0.0
        %v503 = vsel %vm497, 1.0, %v501
        %v504 = vsel %vm498, 1.0, %v502
        %v505 = vand.u32 2147483647, %v495
        %v506 = vand.u32 2147483647, %v496
        %v507 = vstv %s393
        %v508 = vsub.f32 %v505, %v507
        %v509 = vsub.f32 %v506, %v507
        %v510 = vmul.f32 %v508, 0.5
        %v511 = vmul.f32 %v509, 0.5
        %v512 = vmul.f32 %v508, 0.044715
        %v513 = vmul.f32 %v509, 0.044715
        %v514 = vmul.f32 %v512, %v508
        %v515 = vmul.f32 %v513, %v509
        %v516 = vmul.f32 %v514, %v508
        %v517 = vmul.f32 %v515, %v509
        %v518 = vadd.f32 %v508, %v516
        %v519 = vadd.f32 %v509, %v517
        %v520 = vmul.f32 %v518, 0.7978846
        %v521 = vmul.f32 %v519, 0.7978846
        %v522 = vtanh.pop %v520
        %v523 = vtanh.pop %v521
        %v524 = vadd.f32 %v522, 1.0
        %v525 = vadd.f32 %v523, 1.0
        %v526 = vmul.f32 %v510, %v524
        %v527 = vmul.f32 %v511, %v525
        %v528 = vmul.f32 %v503, %v526
        %v529 = vmul.f32 %v504, %v527
        %v530 = vpack.c.bf16 %v529, %v528
        %531 = vmatpush.bf16.msra.mxu0 0
        %532 = vmatpush.bf16.msra.mxu0 0
        %533 = vmatpush.bf16.msra.mxu0 0
        %534 = vmatpush.bf16.msra.mxu0 0
        %535 = vmatpush.bf16.msra.mxu0 0
        %536 = vmatpush.bf16.msra.mxu0 0
        %537 = vmatpush.bf16.msra.mxu0 0
        %538 = vmatpush.bf16.msra.mxu0 %v530
        %539 = vmatmul.bf16.gmra.mxu0 %v477
        %v540 = vpop.f32.mrf.mxu0
        %v541 = vadd.f32 0.0, %v540
        %v542 = vpop.f32.mrf.mxu0
        %v543 = vadd.f32 0.0, %v542
        %544 = vdwg.mxu0
        %v545 = vsub.f32 %v528, %v541
        %v546 = vsub.f32 %v529, %v543
        %v547 = vadd.f32 %v545, %v440
        %v548 = vadd.f32 %v546, %v441
        %vm549 = vcmp.gt.f32.partialorder %v547, 0.0
        %vm550 = vcmp.gt.f32.partialorder %v548, 0.0
        %vm551 = vcmp.lt.f32.partialorder %v547, 0.0
        %vm552 = vcmp.lt.f32.partialorder %v548, 0.0
        %v553 = vsel %vm551, -1.0, 0.0
        %v554 = vsel %vm552, -1.0, 0.0
        %v555 = vsel %vm549, 1.0, %v553
        %v556 = vsel %vm550, 1.0, %v554
        %v557 = vand.u32 2147483647, %v547
        %v558 = vand.u32 2147483647, %v548
        %v559 = vsub.f32 %v557, %v507
        %v560 = vsub.f32 %v558, %v507
        %v561 = vmul.f32 %v559, 0.5
        %v562 = vmul.f32 %v560, 0.5
        %v563 = vmul.f32 %v559, 0.044715
        %v564 = vmul.f32 %v560, 0.044715
        %v565 = vmul.f32 %v563, %v559
        %v566 = vmul.f32 %v564, %v560
        %v567 = vmul.f32 %v565, %v559
        %v568 = vmul.f32 %v566, %v560
        %v569 = vadd.f32 %v559, %v567
        %v570 = vadd.f32 %v560, %v568
        %v571 = vmul.f32 %v569, 0.7978846
        %v572 = vmul.f32 %v570, 0.7978846
        %v573 = vtanh.pop %v571
        %v574 = vtanh.pop %v572
        %v575 = vadd.f32 %v573, 1.0
        %v576 = vadd.f32 %v574, 1.0
        %v577 = vmul.f32 %v561, %v575
        %v578 = vmul.f32 %v562, %v576
        %v579 = vmul.f32 %v555, %v577
        %v580 = vmul.f32 %v556, %v578
        %v581 = vpack.c.bf16 %v580, %v579
        %582 = vmatpush.bf16.msra.mxu0 0
        %583 = vmatpush.bf16.msra.mxu0 0
        %584 = vmatpush.bf16.msra.mxu0 0
        %585 = vmatpush.bf16.msra.mxu0 0
        %586 = vmatpush.bf16.msra.mxu0 0
        %587 = vmatpush.bf16.msra.mxu0 0
        %588 = vmatpush.bf16.msra.mxu0 0
        %589 = vmatpush.bf16.msra.mxu0 %v581
        %590 = vmatmul.bf16.gmra.mxu0 %v477
        %v591 = vpop.f32.mrf.mxu0
        %v592 = vadd.f32 0.0, %v591
        %v593 = vpop.f32.mrf.mxu0
        %v594 = vadd.f32 0.0, %v593
        %595 = vdwg.mxu0
        %v596 = vsub.f32 %v579, %v592
        %v597 = vsub.f32 %v580, %v594
        %v598 = vadd.f32 %v596, %v440
        %v599 = vadd.f32 %v597, %v441
        %vm600 = vcmp.gt.f32.partialorder %v598, 0.0
        %vm601 = vcmp.gt.f32.partialorder %v599, 0.0
        %vm602 = vcmp.lt.f32.partialorder %v598, 0.0
        %vm603 = vcmp.lt.f32.partialorder %v599, 0.0
        %v604 = vsel %vm602, -1.0, 0.0
        %v605 = vsel %vm603, -1.0, 0.0
        %v606 = vsel %vm600, 1.0, %v604
        %v607 = vsel %vm601, 1.0, %v605
        %v608 = vand.u32 2147483647, %v598
        %v609 = vand.u32 2147483647, %v599
        %v610 = vsub.f32 %v608, %v507
        %v611 = vsub.f32 %v609, %v507
        %v612 = vmul.f32 %v610, 0.5
        %v613 = vmul.f32 %v611, 0.5
        %v614 = vmul.f32 %v610, 0.044715
        %v615 = vmul.f32 %v611, 0.044715
        %v616 = vmul.f32 %v614, %v610
        %v617 = vmul.f32 %v615, %v611
        %v618 = vmul.f32 %v616, %v610
        %v619 = vmul.f32 %v617, %v611
        %v620 = vadd.f32 %v610, %v618
        %v621 = vadd.f32 %v611, %v619
        %v622 = vmul.f32 %v620, 0.7978846
        %v623 = vmul.f32 %v621, 0.7978846
        %v624 = vtanh.pop %v622
        %v625 = vtanh.pop %v623
        %v626 = vadd.f32 %v624, 1.0
        %v627 = vadd.f32 %v625, 1.0
        %v628 = vmul.f32 %v612, %v626
        %v629 = vmul.f32 %v613, %v627
        %v630 = vmul.f32 %v606, %v628
        %v631 = vmul.f32 %v607, %v629
        %v632 = vpack.c.bf16 %v631, %v630
        %v633 = vsel %vm264, %v284, 0
        %635 = vmatpush.bf16.msra.mxu0 0
        %636 = vmatpush.bf16.msra.mxu0 0
        %637 = vmatpush.bf16.msra.mxu0 0
        %638 = vmatpush.bf16.msra.mxu0 0
        %639 = vmatpush.bf16.msra.mxu0 0
        %640 = vmatpush.bf16.msra.mxu0 0
        %641 = vmatpush.bf16.msra.mxu0 0
        %642 = vmatpush.bf16.msra.mxu0 %v632
        %643 = vmatmul.bf16.gmra.mxu0 %v633
        %v644 = vpop.f32.mrf.mxu0
        %v645 = vadd.f32 0.0, %v644
        %v646 = vpop.f32.mrf.mxu0
        %647 = vdwg.mxu0
        %s648 = scalar_lea.vmem %s2, 4
        %v649 = vld [vmem:[%s648] sm:$0xf]
        %651 = vrot.lane.b32.xlu0 %v218, 120
        %v652 = vpop.permute.xlu0 %651
        %v654 = vsel %vm219, %v652, 0.0
        %655 = vadd.xlane.f32.xlu0 %v654
        %v656 = vpop.xlane.xlu0 %655
        %v657 = vmax.f32 %v656, 1e-24
        %v658 = vrsqrt.pop %v657
        %v659 = vmul.f32 %v658, %v657
        %v660 = vmul.f32 %v659, %v658
        %v661 = vmul.f32 0.5, %v660
        %v662 = vsub.f32 1.5, %v661
        %v663 = vmul.f32 %v658, %v662
        %vm664 = vweird.f32 %v657
        %vm665 = vweird.f32 %v658
        %vm666 = vmor %vm664, %vm665
        %v667 = vsel %vm666, %v658, %v663
        %v668 = vmul.f32 %v217, %v667
        %v669 = vmul.f32 %v667, %v667
        %v670 = vmul.f32 %v656, %v669
        %v671 = vpack.c.bf16 %v668, %v668
        %673 = vrot.lane.b32.xlu0 %v671, 120
        %v674 = vpop.permute.xlu0 %673
        %v676 = vsel %vm219, %v674, 0
        %v679 = vsel %vm241, %v649, 0
        %681 = vmatpush.bf16.msra.mxu0 0
        %682 = vmatpush.bf16.msra.mxu0 0
        %683 = vmatpush.bf16.msra.mxu0 0
        %684 = vmatpush.bf16.msra.mxu0 0
        %685 = vmatpush.bf16.msra.mxu0 0
        %686 = vmatpush.bf16.msra.mxu0 0
        %687 = vmatpush.bf16.msra.mxu0 0
        %688 = vmatpush.bf16.msra.mxu0 %v679
        %689 = vmatmul.bf16.gmra.mxu0 %v676
        %v690 = vpop.f32.mrf.mxu0
        %v691 = vadd.f32 0.0, %v690
        %v692 = vpop.f32.mrf.mxu0
        %693 = vdwg.mxu0
        %v694 = vmul.f32 %v670, 0.5
        %v695 = vsub.f32 %v691, %v694
        %v696 = vmul.f32 %v695, 1.442695
        %v697 = vpow.pop %v696
        %v698 = vmul.f32 %v697, 0.25
        %v699 = vmul.f32 %v698, %v698
        %v700 = vsel %vm264, %v699, 0.0
        %v701 = vrot.slane %v700, 4
        %v702 = vadd.f32 %v700, %v701
        %v703 = vrot.slane %v702, 2
        %v704 = vadd.f32 %v702, %v703
        %v705 = vrot.slane %v704, 1
        %v706 = vadd.f32 %v704, %v705
        %v707 = vmax.f32 %v706, 1e-24
        %v708 = vrsqrt.pop %v707
        %v709 = vmul.f32 %v708, %v707
        %v710 = vmul.f32 %v709, %v708
        %v711 = vmul.f32 0.5, %v710
        %v712 = vsub.f32 1.5, %v711
        %v713 = vmul.f32 %v708, %v712
        %vm714 = vweird.f32 %v707
        %vm715 = vweird.f32 %v708
        %vm716 = vmor %vm714, %vm715
        %v717 = vsel %vm716, %v708, %v713
        %v718 = vmul.f32 %v698, %v717
        %v719 = vpack.c.bf16 %v718, %v718
        %720 = vxpose.xlu0.c.b16.start [1/8] %v719, 128
        %721 = vxpose.xlu0.c.b16.cont [2/8] 0, 128
        %722 = vxpose.xlu0.c.b16.cont [3/8] 0, 128
        %723 = vxpose.xlu0.c.b16.cont [4/8] 0, 128
        %724 = vxpose.xlu0.c.b16.cont [5/8] 0, 128
        %725 = vxpose.xlu0.c.b16.cont [6/8] 0, 128
        %726 = vxpose.xlu0.c.b16.cont [7/8] 0, 128
        %727 = vxpose.xlu0.c.b16.end [8/8] 0, 128
        %v728 = vpop.trf.xlu0
        %v729 = vpop.trf.xlu0
        %v730 = vpop.trf.xlu0
        %v731 = vpop.trf.xlu0
        %v732 = vpop.trf.xlu0
        %v733 = vpop.trf.xlu0
        %v734 = vpop.trf.xlu0
        %v735 = vpop.trf.xlu0
        %v737 = vsel %vm219, %v728, 0
        %v740 = vsel %vm241, %v719, 0
        %742 = vmatpush.bf16.msra.mxu0 0
        %743 = vmatpush.bf16.msra.mxu0 0
        %744 = vmatpush.bf16.msra.mxu0 0
        %745 = vmatpush.bf16.msra.mxu0 0
        %746 = vmatpush.bf16.msra.mxu0 0
        %747 = vmatpush.bf16.msra.mxu0 0
        %748 = vmatpush.bf16.msra.mxu0 0
        %749 = vmatpush.bf16.msra.mxu0 %v740
        %750 = vmatmul.bf16.gmra.mxu0 %v737
        %v751 = vpop.f32.mrf.mxu0
        %v752 = vadd.f32 0.0, %v751
        %v753 = vpop.f32.mrf.mxu0
        %v754 = vadd.f32 0.0, %v753
        %755 = vdwg.mxu0
        %756 = vrot.lane.b32.xlu0 %v323, 88
        %v757 = vpop.permute.xlu0 %756
        %v759 = vsel %vm241, %v757, 0
        %761 = vmatpush.bf16.msra.mxu0 0
        %762 = vmatpush.bf16.msra.mxu0 0
        %763 = vmatpush.bf16.msra.mxu0 0
        %764 = vmatpush.bf16.msra.mxu0 0
        %765 = vmatpush.bf16.msra.mxu0 0
        %766 = vmatpush.bf16.msra.mxu0 0
        %767 = vmatpush.bf16.msra.mxu0 0
        %768 = vmatpush.bf16.msra.mxu0 %v759
        %769 = vmatmul.bf16.gmra.mxu0 %v737
        %v770 = vpop.f32.mrf.mxu0
        %v771 = vadd.f32 0.0, %v770
        %v772 = vpop.f32.mrf.mxu0
        %v773 = vadd.f32 0.0, %v772
        %774 = vdwg.mxu0
        %v775 = vand.u32 2147483647, %v752
        %v776 = vand.u32 2147483647, %v754
        %v777 = vsel %vm264, %v775, 0.0
        %778 = vadd.xlane.f32.xlu0 %v777
        %v779 = vpop.xlane.xlu0 %778
        %v780 = vsel %vm264, %v776, 0.0
        %781 = vadd.xlane.f32.xlu0 %v780
        %v782 = vpop.xlane.xlu0 %781
        %v783 = vmax.f32 %v779, %v782
        %v784 = vrot.slane %v783, 4
        %v785 = vmax.f32 %v783, %v784
        %v786 = vrot.slane %v785, 2
        %v787 = vmax.f32 %v785, %v786
        %v788 = vrot.slane %v787, 1
        %v789 = vmax.f32 %v787, %v788
        %s790 = vtos %v789
        %s791 = sadd.f32 %s790, 1.0
        %v792 = vstv %s209
        %v793 = vrcp.pop %v792
        %v794 = vmul.f32 %v792, %v793
        %v795 = vsub.f32 1.0, %v794
        %v796 = vmul.f32 %v793, %v795
        %v797 = vadd.f32 %v793, %v796
        %vm798 = vweird.f32 %v792
        %vm799 = vweird.f32 %v793
        %vm800 = vmor %vm798, %vm799
        %v801 = vsel %vm800, %v793, %v797
        %v802 = vand.u32 2147483647, %v792
        %vm803 = vcmp.eq.f32.partialorder %v802, 8.507059e+37
        %v804 = vand.u32 %v792, 2147483648
        %v805 = vor.u32 1.1754944e-38, %v804
        %v806 = vsel %vm803, %v805, %v801
        %s807 = vtos %v806
        %s808 = smul.f32 %s791, %s807
        %v809 = vstv %s808
        %v810 = vrcp.pop %v809
        %v811 = vmul.f32 %v809, %v810
        %v812 = vsub.f32 1.0, %v811
        %v813 = vmul.f32 %v810, %v812
        %v814 = vadd.f32 %v810, %v813
        %vm815 = vweird.f32 %v809
        %vm816 = vweird.f32 %v810
        %vm817 = vmor %vm815, %vm816
        %v818 = vsel %vm817, %v810, %v814
        %v819 = vand.u32 2147483647, %v809
        %vm820 = vcmp.eq.f32.partialorder %v819, 8.507059e+37
        %v821 = vand.u32 %v809, 2147483648
        %v822 = vor.u32 1.1754944e-38, %v821
        %v823 = vsel %vm820, %v822, %v818
        %s824 = vtos %v823
        %s825 = smul.f32 %s211, %s824
        %v826 = vpack.c.bf16 %v754, %v752
        %827 = vmatpush.bf16.msra.mxu0 0
        %828 = vmatpush.bf16.msra.mxu0 0
        %829 = vmatpush.bf16.msra.mxu0 0
        %830 = vmatpush.bf16.msra.mxu0 0
        %831 = vmatpush.bf16.msra.mxu0 0
        %832 = vmatpush.bf16.msra.mxu0 0
        %833 = vmatpush.bf16.msra.mxu0 0
        %834 = vmatpush.bf16.msra.mxu0 %v826
        %835 = vmatmul.bf16.gmra.mxu0 %v401
        %v836 = vpop.f32.mrf.mxu0
        %v837 = vadd.f32 0.0, %v836
        %v838 = vpop.f32.mrf.mxu0
        %v839 = vadd.f32 0.0, %v838
        %840 = vdwg.mxu0
        %v841 = vpack.c.bf16 %v839, %v837
        %v843 = vsel %vm264, %v841, 0
        %845 = vmatpush.bf16.msra.mxu0 0
        %846 = vmatpush.bf16.msra.mxu0 0
        %847 = vmatpush.bf16.msra.mxu0 0
        %848 = vmatpush.bf16.msra.mxu0 0
        %849 = vmatpush.bf16.msra.mxu0 0
        %850 = vmatpush.bf16.msra.mxu0 0
        %851 = vmatpush.bf16.msra.mxu0 0
        %852 = vmatpush.bf16.msra.mxu0 %v399
        %853 = vmatmul.bf16.gmra.mxu0 %v843
        %v854 = vpop.f32.mrf.mxu0
        %v855 = vadd.f32 0.0, %v854
        %v856 = vpop.f32.mrf.mxu0
        %v857 = vadd.f32 0.0, %v856
        %858 = vdwg.mxu0
        %v859 = vstv %s824
        %v860 = vmul.f32 %v855, %v859
        %v861 = vmul.f32 %v857, %v859
        %v862 = vpack.c.bf16 %v861, %v860
        %v863 = vmul.f32 %v771, %v859
        %v864 = vmul.f32 %v773, %v859
        %vm865 = vcmp.gt.f32.partialorder %v771, 0.0
        %vm866 = vcmp.gt.f32.partialorder %v773, 0.0
        %vm867 = vcmp.lt.f32.partialorder %v771, 0.0
        %vm868 = vcmp.lt.f32.partialorder %v773, 0.0
        %v869 = vsel %vm867, -1.0, 0.0
        %v870 = vsel %vm868, -1.0, 0.0
        %v871 = vsel %vm865, 1.0, %v869
        %v872 = vsel %vm866, 1.0, %v870
        %v873 = vand.u32 2147483647, %v771
        %v874 = vand.u32 2147483647, %v773
        %v875 = vsub.f32 %v873, %v452
        %v876 = vsub.f32 %v874, %v452
        %v877 = vmul.f32 %v875, 0.5
        %v878 = vmul.f32 %v876, 0.5
        %v879 = vmul.f32 %v875, 0.044715
        %v880 = vmul.f32 %v876, 0.044715
        %v881 = vmul.f32 %v879, %v875
        %v882 = vmul.f32 %v880, %v876
        %v883 = vmul.f32 %v881, %v875
        %v884 = vmul.f32 %v882, %v876
        %v885 = vadd.f32 %v875, %v883
        %v886 = vadd.f32 %v876, %v884
        %v887 = vmul.f32 %v885, 0.7978846
        %v888 = vmul.f32 %v886, 0.7978846
        %v889 = vtanh.pop %v887
        %v890 = vtanh.pop %v888
        %v891 = vadd.f32 %v889, 1.0
        %v892 = vadd.f32 %v890, 1.0
        %v893 = vmul.f32 %v877, %v891
        %v894 = vmul.f32 %v878, %v892
        %v895 = vmul.f32 %v871, %v893
        %v896 = vmul.f32 %v872, %v894
        %v897 = vpack.c.bf16 %v896, %v895
        %v899 = vsel %vm264, %v862, 0
        %901 = vmatpush.bf16.msra.mxu0 0
        %902 = vmatpush.bf16.msra.mxu0 0
        %903 = vmatpush.bf16.msra.mxu0 0
        %904 = vmatpush.bf16.msra.mxu0 0
        %905 = vmatpush.bf16.msra.mxu0 0
        %906 = vmatpush.bf16.msra.mxu0 0
        %907 = vmatpush.bf16.msra.mxu0 0
        %908 = vmatpush.bf16.msra.mxu0 %v897
        %909 = vmatmul.bf16.gmra.mxu0 %v899
        %v910 = vpop.f32.mrf.mxu0
        %v911 = vadd.f32 0.0, %v910
        %v912 = vpop.f32.mrf.mxu0
        %v913 = vadd.f32 0.0, %v912
        %914 = vdwg.mxu0
        %v915 = vsub.f32 %v895, %v911
        %v916 = vsub.f32 %v896, %v913
        %v917 = vadd.f32 %v915, %v863
        %v918 = vadd.f32 %v916, %v864
        %vm919 = vcmp.gt.f32.partialorder %v917, 0.0
        %vm920 = vcmp.gt.f32.partialorder %v918, 0.0
        %vm921 = vcmp.lt.f32.partialorder %v917, 0.0
        %vm922 = vcmp.lt.f32.partialorder %v918, 0.0
        %v923 = vsel %vm921, -1.0, 0.0
        %v924 = vsel %vm922, -1.0, 0.0
        %v925 = vsel %vm919, 1.0, %v923
        %v926 = vsel %vm920, 1.0, %v924
        %v927 = vand.u32 2147483647, %v917
        %v928 = vand.u32 2147483647, %v918
        %v929 = vstv %s825
        %v930 = vsub.f32 %v927, %v929
        %v931 = vsub.f32 %v928, %v929
        %v932 = vmul.f32 %v930, 0.5
        %v933 = vmul.f32 %v931, 0.5
        %v934 = vmul.f32 %v930, 0.044715
        %v935 = vmul.f32 %v931, 0.044715
        %v936 = vmul.f32 %v934, %v930
        %v937 = vmul.f32 %v935, %v931
        %v938 = vmul.f32 %v936, %v930
        %v939 = vmul.f32 %v937, %v931
        %v940 = vadd.f32 %v930, %v938
        %v941 = vadd.f32 %v931, %v939
        %v942 = vmul.f32 %v940, 0.7978846
        %v943 = vmul.f32 %v941, 0.7978846
        %v944 = vtanh.pop %v942
        %v945 = vtanh.pop %v943
        %v946 = vadd.f32 %v944, 1.0
        %v947 = vadd.f32 %v945, 1.0
        %v948 = vmul.f32 %v932, %v946
        %v949 = vmul.f32 %v933, %v947
        %v950 = vmul.f32 %v925, %v948
        %v951 = vmul.f32 %v926, %v949
        %v952 = vpack.c.bf16 %v951, %v950
        %953 = vmatpush.bf16.msra.mxu0 0
        %954 = vmatpush.bf16.msra.mxu0 0
        %955 = vmatpush.bf16.msra.mxu0 0
        %956 = vmatpush.bf16.msra.mxu0 0
        %957 = vmatpush.bf16.msra.mxu0 0
        %958 = vmatpush.bf16.msra.mxu0 0
        %959 = vmatpush.bf16.msra.mxu0 0
        %960 = vmatpush.bf16.msra.mxu0 %v952
        %961 = vmatmul.bf16.gmra.mxu0 %v899
        %v962 = vpop.f32.mrf.mxu0
        %v963 = vadd.f32 0.0, %v962
        %v964 = vpop.f32.mrf.mxu0
        %v965 = vadd.f32 0.0, %v964
        %966 = vdwg.mxu0
        %v967 = vsub.f32 %v950, %v963
        %v968 = vsub.f32 %v951, %v965
        %v969 = vadd.f32 %v967, %v863
        %v970 = vadd.f32 %v968, %v864
        %vm971 = vcmp.gt.f32.partialorder %v969, 0.0
        %vm972 = vcmp.gt.f32.partialorder %v970, 0.0
        %vm973 = vcmp.lt.f32.partialorder %v969, 0.0
        %vm974 = vcmp.lt.f32.partialorder %v970, 0.0
        %v975 = vsel %vm973, -1.0, 0.0
        %v976 = vsel %vm974, -1.0, 0.0
        %v977 = vsel %vm971, 1.0, %v975
        %v978 = vsel %vm972, 1.0, %v976
        %v979 = vand.u32 2147483647, %v969
        %v980 = vand.u32 2147483647, %v970
        %v981 = vsub.f32 %v979, %v929
        %v982 = vsub.f32 %v980, %v929
        %v983 = vmul.f32 %v981, 0.5
        %v984 = vmul.f32 %v982, 0.5
        %v985 = vmul.f32 %v981, 0.044715
        %v986 = vmul.f32 %v982, 0.044715
        %v987 = vmul.f32 %v985, %v981
        %v988 = vmul.f32 %v986, %v982
        %v989 = vmul.f32 %v987, %v981
        %v990 = vmul.f32 %v988, %v982
        %v991 = vadd.f32 %v981, %v989
        %v992 = vadd.f32 %v982, %v990
        %v993 = vmul.f32 %v991, 0.7978846
        %v994 = vmul.f32 %v992, 0.7978846
        %v995 = vtanh.pop %v993
        %v996 = vtanh.pop %v994
        %v997 = vadd.f32 %v995, 1.0
        %v998 = vadd.f32 %v996, 1.0
        %v999 = vmul.f32 %v983, %v997
        %v1000 = vmul.f32 %v984, %v998
        %v1001 = vmul.f32 %v977, %v999
        %v1002 = vmul.f32 %v978, %v1000
        %v1003 = vpack.c.bf16 %v1002, %v1001
        %1004 = vmatpush.bf16.msra.mxu0 0
        %1005 = vmatpush.bf16.msra.mxu0 0
        %1006 = vmatpush.bf16.msra.mxu0 0
        %1007 = vmatpush.bf16.msra.mxu0 0
        %1008 = vmatpush.bf16.msra.mxu0 0
        %1009 = vmatpush.bf16.msra.mxu0 0
        %1010 = vmatpush.bf16.msra.mxu0 0
        %1011 = vmatpush.bf16.msra.mxu0 %v1003
        %1012 = vmatmul.bf16.gmra.mxu0 %v899
        %v1013 = vpop.f32.mrf.mxu0
        %v1014 = vadd.f32 0.0, %v1013
        %v1015 = vpop.f32.mrf.mxu0
        %v1016 = vadd.f32 0.0, %v1015
        %1017 = vdwg.mxu0
        %v1018 = vsub.f32 %v1001, %v1014
        %v1019 = vsub.f32 %v1002, %v1016
        %v1020 = vadd.f32 %v1018, %v863
        %v1021 = vadd.f32 %v1019, %v864
        %vm1022 = vcmp.gt.f32.partialorder %v1020, 0.0
        %vm1023 = vcmp.gt.f32.partialorder %v1021, 0.0
        %vm1024 = vcmp.lt.f32.partialorder %v1020, 0.0
        %vm1025 = vcmp.lt.f32.partialorder %v1021, 0.0
        %v1026 = vsel %vm1024, -1.0, 0.0
        %v1027 = vsel %vm1025, -1.0, 0.0
        %v1028 = vsel %vm1022, 1.0, %v1026
        %v1029 = vsel %vm1023, 1.0, %v1027
        %v1030 = vand.u32 2147483647, %v1020
        %v1031 = vand.u32 2147483647, %v1021
        %v1032 = vsub.f32 %v1030, %v929
        %v1033 = vsub.f32 %v1031, %v929
        %v1034 = vmul.f32 %v1032, 0.5
        %v1035 = vmul.f32 %v1033, 0.5
        %v1036 = vmul.f32 %v1032, 0.044715
        %v1037 = vmul.f32 %v1033, 0.044715
        %v1038 = vmul.f32 %v1036, %v1032
        %v1039 = vmul.f32 %v1037, %v1033
        %v1040 = vmul.f32 %v1038, %v1032
        %v1041 = vmul.f32 %v1039, %v1033
        %v1042 = vadd.f32 %v1032, %v1040
        %v1043 = vadd.f32 %v1033, %v1041
        %v1044 = vmul.f32 %v1042, 0.7978846
        %v1045 = vmul.f32 %v1043, 0.7978846
        %v1046 = vtanh.pop %v1044
        %v1047 = vtanh.pop %v1045
        %v1048 = vadd.f32 %v1046, 1.0
        %v1049 = vadd.f32 %v1047, 1.0
        %v1050 = vmul.f32 %v1034, %v1048
        %v1051 = vmul.f32 %v1035, %v1049
        %v1052 = vmul.f32 %v1028, %v1050
        %v1053 = vmul.f32 %v1029, %v1051
        %v1054 = vpack.c.bf16 %v1053, %v1052
        %v1055 = vsel %vm264, %v719, 0
        %1057 = vmatpush.bf16.msra.mxu0 0
        %1058 = vmatpush.bf16.msra.mxu0 0
        %1059 = vmatpush.bf16.msra.mxu0 0
        %1060 = vmatpush.bf16.msra.mxu0 0
        %1061 = vmatpush.bf16.msra.mxu0 0
        %1062 = vmatpush.bf16.msra.mxu0 0
        %1063 = vmatpush.bf16.msra.mxu0 0
        %1064 = vmatpush.bf16.msra.mxu0 %v1054
        %1065 = vmatmul.bf16.gmra.mxu0 %v1055
        %v1066 = vpop.f32.mrf.mxu0
        %v1067 = vadd.f32 0.0, %v1066
        %v1068 = vpop.f32.mrf.mxu0
        %1069 = vdwg.mxu0
        %s1070 = scalar_lea.vmem %s2, 8
        %v1071 = vld [vmem:[%s1070] sm:$0xf]
        %1072 = vrot.lane.b32.xlu0 %v218, 112
        %v1073 = vpop.permute.xlu0 %1072
        %v1075 = vsel %vm219, %v1073, 0.0
        %1076 = vadd.xlane.f32.xlu0 %v1075
        %v1077 = vpop.xlane.xlu0 %1076
        %v1078 = vmax.f32 %v1077, 1e-24
        %v1079 = vrsqrt.pop %v1078
        %v1080 = vmul.f32 %v1079, %v1078
        %v1081 = vmul.f32 %v1080, %v1079
        %v1082 = vmul.f32 0.5, %v1081
        %v1083 = vsub.f32 1.5, %v1082
        %v1084 = vmul.f32 %v1079, %v1083
        %vm1085 = vweird.f32 %v1078
        %vm1086 = vweird.f32 %v1079
        %vm1087 = vmor %vm1085, %vm1086
        %v1088 = vsel %vm1087, %v1079, %v1084
        %v1089 = vmul.f32 %v217, %v1088
        %v1090 = vmul.f32 %v1088, %v1088
        %v1091 = vmul.f32 %v1077, %v1090
        %v1092 = vpack.c.bf16 %v1089, %v1089
        %1094 = vrot.lane.b32.xlu0 %v1092, 112
        %v1095 = vpop.permute.xlu0 %1094
        %v1097 = vsel %vm219, %v1095, 0
        %v1100 = vsel %vm241, %v1071, 0
        %1102 = vmatpush.bf16.msra.mxu0 0
        %1103 = vmatpush.bf16.msra.mxu0 0
        %1104 = vmatpush.bf16.msra.mxu0 0
        %1105 = vmatpush.bf16.msra.mxu0 0
        %1106 = vmatpush.bf16.msra.mxu0 0
        %1107 = vmatpush.bf16.msra.mxu0 0
        %1108 = vmatpush.bf16.msra.mxu0 0
        %1109 = vmatpush.bf16.msra.mxu0 %v1100
        %1110 = vmatmul.bf16.gmra.mxu0 %v1097
        %v1111 = vpop.f32.mrf.mxu0
        %v1112 = vadd.f32 0.0, %v1111
        %v1113 = vpop.f32.mrf.mxu0
        %1114 = vdwg.mxu0
        %v1115 = vmul.f32 %v1091, 0.5
        %v1116 = vsub.f32 %v1112, %v1115
        %v1117 = vmul.f32 %v1116, 1.442695
        %v1118 = vpow.pop %v1117
        %v1119 = vmul.f32 %v1118, 0.25
        %v1120 = vmul.f32 %v1119, %v1119
        %v1121 = vsel %vm264, %v1120, 0.0
        %v1122 = vrot.slane %v1121, 4
        %v1123 = vadd.f32 %v1121, %v1122
        %v1124 = vrot.slane %v1123, 2
        %v1125 = vadd.f32 %v1123, %v1124
        %v1126 = vrot.slane %v1125, 1
        %v1127 = vadd.f32 %v1125, %v1126
        %v1128 = vmax.f32 %v1127, 1e-24
        %v1129 = vrsqrt.pop %v1128
        %v1130 = vmul.f32 %v1129, %v1128
        %v1131 = vmul.f32 %v1130, %v1129
        %v1132 = vmul.f32 0.5, %v1131
        %v1133 = vsub.f32 1.5, %v1132
        %v1134 = vmul.f32 %v1129, %v1133
        %vm1135 = vweird.f32 %v1128
        %vm1136 = vweird.f32 %v1129
        %vm1137 = vmor %vm1135, %vm1136
        %v1138 = vsel %vm1137, %v1129, %v1134
        %v1139 = vmul.f32 %v1119, %v1138
        %v1140 = vpack.c.bf16 %v1139, %v1139
        %1141 = vxpose.xlu0.c.b16.start [1/8] %v1140, 128
        %1142 = vxpose.xlu0.c.b16.cont [2/8] 0, 128
        %1143 = vxpose.xlu0.c.b16.cont [3/8] 0, 128
        %1144 = vxpose.xlu0.c.b16.cont [4/8] 0, 128
        %1145 = vxpose.xlu0.c.b16.cont [5/8] 0, 128
        %1146 = vxpose.xlu0.c.b16.cont [6/8] 0, 128
        %1147 = vxpose.xlu0.c.b16.cont [7/8] 0, 128
        %1148 = vxpose.xlu0.c.b16.end [8/8] 0, 128
        %v1149 = vpop.trf.xlu0
        %v1150 = vpop.trf.xlu0
        %v1151 = vpop.trf.xlu0
        %v1152 = vpop.trf.xlu0
        %v1153 = vpop.trf.xlu0
        %v1154 = vpop.trf.xlu0
        %v1155 = vpop.trf.xlu0
        %v1156 = vpop.trf.xlu0
        %v1158 = vsel %vm219, %v1149, 0
        %v1161 = vsel %vm241, %v1140, 0
        %1163 = vmatpush.bf16.msra.mxu0 0
        %1164 = vmatpush.bf16.msra.mxu0 0
        %1165 = vmatpush.bf16.msra.mxu0 0
        %1166 = vmatpush.bf16.msra.mxu0 0
        %1167 = vmatpush.bf16.msra.mxu0 0
        %1168 = vmatpush.bf16.msra.mxu0 0
        %1169 = vmatpush.bf16.msra.mxu0 0
        %1170 = vmatpush.bf16.msra.mxu0 %v1161
        %1171 = vmatmul.bf16.gmra.mxu0 %v1158
        %v1172 = vpop.f32.mrf.mxu0
        %v1173 = vadd.f32 0.0, %v1172
        %v1174 = vpop.f32.mrf.mxu0
        %v1175 = vadd.f32 0.0, %v1174
        %1176 = vdwg.mxu0
        %1177 = vrot.lane.b32.xlu0 %v323, 80
        %v1178 = vpop.permute.xlu0 %1177
        %v1180 = vsel %vm241, %v1178, 0
        %1182 = vmatpush.bf16.msra.mxu0 0
        %1183 = vmatpush.bf16.msra.mxu0 0
        %1184 = vmatpush.bf16.msra.mxu0 0
        %1185 = vmatpush.bf16.msra.mxu0 0
        %1186 = vmatpush.bf16.msra.mxu0 0
        %1187 = vmatpush.bf16.msra.mxu0 0
        %1188 = vmatpush.bf16.msra.mxu0 0
        %1189 = vmatpush.bf16.msra.mxu0 %v1180
        %1190 = vmatmul.bf16.gmra.mxu0 %v1158
        %v1191 = vpop.f32.mrf.mxu0
        %v1192 = vadd.f32 0.0, %v1191
        %v1193 = vpop.f32.mrf.mxu0
        %v1194 = vadd.f32 0.0, %v1193
        %1195 = vdwg.mxu0
        %v1196 = vand.u32 2147483647, %v1173
        %v1197 = vand.u32 2147483647, %v1175
        %v1198 = vsel %vm264, %v1196, 0.0
        %1199 = vadd.xlane.f32.xlu0 %v1198
        %v1200 = vpop.xlane.xlu0 %1199
        %v1201 = vsel %vm264, %v1197, 0.0
        %1202 = vadd.xlane.f32.xlu0 %v1201
        %v1203 = vpop.xlane.xlu0 %1202
        %v1204 = vmax.f32 %v1200, %v1203
        %v1205 = vrot.slane %v1204, 4
        %v1206 = vmax.f32 %v1204, %v1205
        %v1207 = vrot.slane %v1206, 2
        %v1208 = vmax.f32 %v1206, %v1207
        %v1209 = vrot.slane %v1208, 1
        %v1210 = vmax.f32 %v1208, %v1209
        %s1211 = vtos %v1210
        %s1212 = sadd.f32 %s1211, 1.0
        %v1213 = vstv %s209
        %v1214 = vrcp.pop %v1213
        %v1215 = vmul.f32 %v1213, %v1214
        %v1216 = vsub.f32 1.0, %v1215
        %v1217 = vmul.f32 %v1214, %v1216
        %v1218 = vadd.f32 %v1214, %v1217
        %vm1219 = vweird.f32 %v1213
        %vm1220 = vweird.f32 %v1214
        %vm1221 = vmor %vm1219, %vm1220
        %v1222 = vsel %vm1221, %v1214, %v1218
        %v1223 = vand.u32 2147483647, %v1213
        %vm1224 = vcmp.eq.f32.partialorder %v1223, 8.507059e+37
        %v1225 = vand.u32 %v1213, 2147483648
        %v1226 = vor.u32 1.1754944e-38, %v1225
        %v1227 = vsel %vm1224, %v1226, %v1222
        %s1228 = vtos %v1227
        %s1229 = smul.f32 %s1212, %s1228
        %v1230 = vstv %s1229
        %v1231 = vrcp.pop %v1230
        %v1232 = vmul.f32 %v1230, %v1231
        %v1233 = vsub.f32 1.0, %v1232
        %v1234 = vmul.f32 %v1231, %v1233
        %v1235 = vadd.f32 %v1231, %v1234
        %vm1236 = vweird.f32 %v1230
        %vm1237 = vweird.f32 %v1231
        %vm1238 = vmor %vm1236, %vm1237
        %v1239 = vsel %vm1238, %v1231, %v1235
        %v1240 = vand.u32 2147483647, %v1230
        %vm1241 = vcmp.eq.f32.partialorder %v1240, 8.507059e+37
        %v1242 = vand.u32 %v1230, 2147483648
        %v1243 = vor.u32 1.1754944e-38, %v1242
        %v1244 = vsel %vm1241, %v1243, %v1239
        %s1245 = vtos %v1244
        %s1246 = smul.f32 %s211, %s1245
        %v1247 = vpack.c.bf16 %v1175, %v1173
        %1248 = vmatpush.bf16.msra.mxu0 0
        %1249 = vmatpush.bf16.msra.mxu0 0
        %1250 = vmatpush.bf16.msra.mxu0 0
        %1251 = vmatpush.bf16.msra.mxu0 0
        %1252 = vmatpush.bf16.msra.mxu0 0
        %1253 = vmatpush.bf16.msra.mxu0 0
        %1254 = vmatpush.bf16.msra.mxu0 0
        %1255 = vmatpush.bf16.msra.mxu0 %v1247
        %1256 = vmatmul.bf16.gmra.mxu0 %v401
        %v1257 = vpop.f32.mrf.mxu0
        %v1258 = vadd.f32 0.0, %v1257
        %v1259 = vpop.f32.mrf.mxu0
        %v1260 = vadd.f32 0.0, %v1259
        %1261 = vdwg.mxu0
        %v1262 = vpack.c.bf16 %v1260, %v1258
        %v1264 = vsel %vm264, %v1262, 0
        %1266 = vmatpush.bf16.msra.mxu0 0
        %1267 = vmatpush.bf16.msra.mxu0 0
        %1268 = vmatpush.bf16.msra.mxu0 0
        %1269 = vmatpush.bf16.msra.mxu0 0
        %1270 = vmatpush.bf16.msra.mxu0 0
        %1271 = vmatpush.bf16.msra.mxu0 0
        %1272 = vmatpush.bf16.msra.mxu0 0
        %1273 = vmatpush.bf16.msra.mxu0 %v399
        %1274 = vmatmul.bf16.gmra.mxu0 %v1264
        %v1275 = vpop.f32.mrf.mxu0
        %v1276 = vadd.f32 0.0, %v1275
        %v1277 = vpop.f32.mrf.mxu0
        %v1278 = vadd.f32 0.0, %v1277
        %1279 = vdwg.mxu0
        %v1280 = vstv %s1245
        %v1281 = vmul.f32 %v1276, %v1280
        %v1282 = vmul.f32 %v1278, %v1280
        %v1283 = vpack.c.bf16 %v1282, %v1281
        %v1284 = vmul.f32 %v1192, %v1280
        %v1285 = vmul.f32 %v1194, %v1280
        %vm1286 = vcmp.gt.f32.partialorder %v1192, 0.0
        %vm1287 = vcmp.gt.f32.partialorder %v1194, 0.0
        %vm1288 = vcmp.lt.f32.partialorder %v1192, 0.0
        %vm1289 = vcmp.lt.f32.partialorder %v1194, 0.0
        %v1290 = vsel %vm1288, -1.0, 0.0
        %v1291 = vsel %vm1289, -1.0, 0.0
        %v1292 = vsel %vm1286, 1.0, %v1290
        %v1293 = vsel %vm1287, 1.0, %v1291
        %v1294 = vand.u32 2147483647, %v1192
        %v1295 = vand.u32 2147483647, %v1194
        %v1296 = vsub.f32 %v1294, %v452
        %v1297 = vsub.f32 %v1295, %v452
        %v1298 = vmul.f32 %v1296, 0.5
        %v1299 = vmul.f32 %v1297, 0.5
        %v1300 = vmul.f32 %v1296, 0.044715
        %v1301 = vmul.f32 %v1297, 0.044715
        %v1302 = vmul.f32 %v1300, %v1296
        %v1303 = vmul.f32 %v1301, %v1297
        %v1304 = vmul.f32 %v1302, %v1296
        %v1305 = vmul.f32 %v1303, %v1297
        %v1306 = vadd.f32 %v1296, %v1304
        %v1307 = vadd.f32 %v1297, %v1305
        %v1308 = vmul.f32 %v1306, 0.7978846
        %v1309 = vmul.f32 %v1307, 0.7978846
        %v1310 = vtanh.pop %v1308
        %v1311 = vtanh.pop %v1309
        %v1312 = vadd.f32 %v1310, 1.0
        %v1313 = vadd.f32 %v1311, 1.0
        %v1314 = vmul.f32 %v1298, %v1312
        %v1315 = vmul.f32 %v1299, %v1313
        %v1316 = vmul.f32 %v1292, %v1314
        %v1317 = vmul.f32 %v1293, %v1315
        %v1318 = vpack.c.bf16 %v1317, %v1316
        %v1320 = vsel %vm264, %v1283, 0
        %1322 = vmatpush.bf16.msra.mxu0 0
        %1323 = vmatpush.bf16.msra.mxu0 0
        %1324 = vmatpush.bf16.msra.mxu0 0
        %1325 = vmatpush.bf16.msra.mxu0 0
        %1326 = vmatpush.bf16.msra.mxu0 0
        %1327 = vmatpush.bf16.msra.mxu0 0
        %1328 = vmatpush.bf16.msra.mxu0 0
        %1329 = vmatpush.bf16.msra.mxu0 %v1318
        %1330 = vmatmul.bf16.gmra.mxu0 %v1320
        %v1331 = vpop.f32.mrf.mxu0
        %v1332 = vadd.f32 0.0, %v1331
        %v1333 = vpop.f32.mrf.mxu0
        %v1334 = vadd.f32 0.0, %v1333
        %1335 = vdwg.mxu0
        %v1336 = vsub.f32 %v1316, %v1332
        %v1337 = vsub.f32 %v1317, %v1334
        %v1338 = vadd.f32 %v1336, %v1284
        %v1339 = vadd.f32 %v1337, %v1285
        %vm1340 = vcmp.gt.f32.partialorder %v1338, 0.0
        %vm1341 = vcmp.gt.f32.partialorder %v1339, 0.0
        %vm1342 = vcmp.lt.f32.partialorder %v1338, 0.0
        %vm1343 = vcmp.lt.f32.partialorder %v1339, 0.0
        %v1344 = vsel %vm1342, -1.0, 0.0
        %v1345 = vsel %vm1343, -1.0, 0.0
        %v1346 = vsel %vm1340, 1.0, %v1344
        %v1347 = vsel %vm1341, 1.0, %v1345
        %v1348 = vand.u32 2147483647, %v1338
        %v1349 = vand.u32 2147483647, %v1339
        %v1350 = vstv %s1246
        %v1351 = vsub.f32 %v1348, %v1350
        %v1352 = vsub.f32 %v1349, %v1350
        %v1353 = vmul.f32 %v1351, 0.5
        %v1354 = vmul.f32 %v1352, 0.5
        %v1355 = vmul.f32 %v1351, 0.044715
        %v1356 = vmul.f32 %v1352, 0.044715
        %v1357 = vmul.f32 %v1355, %v1351
        %v1358 = vmul.f32 %v1356, %v1352
        %v1359 = vmul.f32 %v1357, %v1351
        %v1360 = vmul.f32 %v1358, %v1352
        %v1361 = vadd.f32 %v1351, %v1359
        %v1362 = vadd.f32 %v1352, %v1360
        %v1363 = vmul.f32 %v1361, 0.7978846
        %v1364 = vmul.f32 %v1362, 0.7978846
        %v1365 = vtanh.pop %v1363
        %v1366 = vtanh.pop %v1364
        %v1367 = vadd.f32 %v1365, 1.0
        %v1368 = vadd.f32 %v1366, 1.0
        %v1369 = vmul.f32 %v1353, %v1367
        %v1370 = vmul.f32 %v1354, %v1368
        %v1371 = vmul.f32 %v1346, %v1369
        %v1372 = vmul.f32 %v1347, %v1370
        %v1373 = vpack.c.bf16 %v1372, %v1371
        %1374 = vmatpush.bf16.msra.mxu0 0
        %1375 = vmatpush.bf16.msra.mxu0 0
        %1376 = vmatpush.bf16.msra.mxu0 0
        %1377 = vmatpush.bf16.msra.mxu0 0
        %1378 = vmatpush.bf16.msra.mxu0 0
        %1379 = vmatpush.bf16.msra.mxu0 0
        %1380 = vmatpush.bf16.msra.mxu0 0
        %1381 = vmatpush.bf16.msra.mxu0 %v1373
        %1382 = vmatmul.bf16.gmra.mxu0 %v1320
        %v1383 = vpop.f32.mrf.mxu0
        %v1384 = vadd.f32 0.0, %v1383
        %v1385 = vpop.f32.mrf.mxu0
        %v1386 = vadd.f32 0.0, %v1385
        %1387 = vdwg.mxu0
        %v1388 = vsub.f32 %v1371, %v1384
        %v1389 = vsub.f32 %v1372, %v1386
        %v1390 = vadd.f32 %v1388, %v1284
        %v1391 = vadd.f32 %v1389, %v1285
        %vm1392 = vcmp.gt.f32.partialorder %v1390, 0.0
        %vm1393 = vcmp.gt.f32.partialorder %v1391, 0.0
        %vm1394 = vcmp.lt.f32.partialorder %v1390, 0.0
        %vm1395 = vcmp.lt.f32.partialorder %v1391, 0.0
        %v1396 = vsel %vm1394, -1.0, 0.0
        %v1397 = vsel %vm1395, -1.0, 0.0
        %v1398 = vsel %vm1392, 1.0, %v1396
        %v1399 = vsel %vm1393, 1.0, %v1397
        %v1400 = vand.u32 2147483647, %v1390
        %v1401 = vand.u32 2147483647, %v1391
        %v1402 = vsub.f32 %v1400, %v1350
        %v1403 = vsub.f32 %v1401, %v1350
        %v1404 = vmul.f32 %v1402, 0.5
        %v1405 = vmul.f32 %v1403, 0.5
        %v1406 = vmul.f32 %v1402, 0.044715
        %v1407 = vmul.f32 %v1403, 0.044715
        %v1408 = vmul.f32 %v1406, %v1402
        %v1409 = vmul.f32 %v1407, %v1403
        %v1410 = vmul.f32 %v1408, %v1402
        %v1411 = vmul.f32 %v1409, %v1403
        %v1412 = vadd.f32 %v1402, %v1410
        %v1413 = vadd.f32 %v1403, %v1411
        %v1414 = vmul.f32 %v1412, 0.7978846
        %v1415 = vmul.f32 %v1413, 0.7978846
        %v1416 = vtanh.pop %v1414
        %v1417 = vtanh.pop %v1415
        %v1418 = vadd.f32 %v1416, 1.0
        %v1419 = vadd.f32 %v1417, 1.0
        %v1420 = vmul.f32 %v1404, %v1418
        %v1421 = vmul.f32 %v1405, %v1419
        %v1422 = vmul.f32 %v1398, %v1420
        %v1423 = vmul.f32 %v1399, %v1421
        %v1424 = vpack.c.bf16 %v1423, %v1422
        %1425 = vmatpush.bf16.msra.mxu0 0
        %1426 = vmatpush.bf16.msra.mxu0 0
        %1427 = vmatpush.bf16.msra.mxu0 0
        %1428 = vmatpush.bf16.msra.mxu0 0
        %1429 = vmatpush.bf16.msra.mxu0 0
        %1430 = vmatpush.bf16.msra.mxu0 0
        %1431 = vmatpush.bf16.msra.mxu0 0
        %1432 = vmatpush.bf16.msra.mxu0 %v1424
        %1433 = vmatmul.bf16.gmra.mxu0 %v1320
        %v1434 = vpop.f32.mrf.mxu0
        %v1435 = vadd.f32 0.0, %v1434
        %v1436 = vpop.f32.mrf.mxu0
        %v1437 = vadd.f32 0.0, %v1436
        %1438 = vdwg.mxu0
        %v1439 = vsub.f32 %v1422, %v1435
        %v1440 = vsub.f32 %v1423, %v1437
        %v1441 = vadd.f32 %v1439, %v1284
        %v1442 = vadd.f32 %v1440, %v1285
        %vm1443 = vcmp.gt.f32.partialorder %v1441, 0.0
        %vm1444 = vcmp.gt.f32.partialorder %v1442, 0.0
        %vm1445 = vcmp.lt.f32.partialorder %v1441, 0.0
        %vm1446 = vcmp.lt.f32.partialorder %v1442, 0.0
        %v1447 = vsel %vm1445, -1.0, 0.0
        %v1448 = vsel %vm1446, -1.0, 0.0
        %v1449 = vsel %vm1443, 1.0, %v1447
        %v1450 = vsel %vm1444, 1.0, %v1448
        %v1451 = vand.u32 2147483647, %v1441
        %v1452 = vand.u32 2147483647, %v1442
        %v1453 = vsub.f32 %v1451, %v1350
        %v1454 = vsub.f32 %v1452, %v1350
        %v1455 = vmul.f32 %v1453, 0.5
        %v1456 = vmul.f32 %v1454, 0.5
        %v1457 = vmul.f32 %v1453, 0.044715
        %v1458 = vmul.f32 %v1454, 0.044715
        %v1459 = vmul.f32 %v1457, %v1453
        %v1460 = vmul.f32 %v1458, %v1454
        %v1461 = vmul.f32 %v1459, %v1453
        %v1462 = vmul.f32 %v1460, %v1454
        %v1463 = vadd.f32 %v1453, %v1461
        %v1464 = vadd.f32 %v1454, %v1462
        %v1465 = vmul.f32 %v1463, 0.7978846
        %v1466 = vmul.f32 %v1464, 0.7978846
        %v1467 = vtanh.pop %v1465
        %v1468 = vtanh.pop %v1466
        %v1469 = vadd.f32 %v1467, 1.0
        %v1470 = vadd.f32 %v1468, 1.0
        %v1471 = vmul.f32 %v1455, %v1469
        %v1472 = vmul.f32 %v1456, %v1470
        %v1473 = vmul.f32 %v1449, %v1471
        %v1474 = vmul.f32 %v1450, %v1472
        %v1475 = vpack.c.bf16 %v1474, %v1473
        %v1476 = vsel %vm264, %v1140, 0
        %1478 = vmatpush.bf16.msra.mxu0 0
        %1479 = vmatpush.bf16.msra.mxu0 0
        %1480 = vmatpush.bf16.msra.mxu0 0
        %1481 = vmatpush.bf16.msra.mxu0 0
        %1482 = vmatpush.bf16.msra.mxu0 0
        %1483 = vmatpush.bf16.msra.mxu0 0
        %1484 = vmatpush.bf16.msra.mxu0 0
        %1485 = vmatpush.bf16.msra.mxu0 %v1475
        %1486 = vmatmul.bf16.gmra.mxu0 %v1476
        %v1487 = vpop.f32.mrf.mxu0
        %v1488 = vadd.f32 0.0, %v1487
        %v1489 = vpop.f32.mrf.mxu0
        %1490 = vdwg.mxu0
        %s1491 = scalar_lea.vmem %s2, 12
        %v1492 = vld [vmem:[%s1491] sm:$0xf]
        %1493 = vrot.lane.b32.xlu0 %v218, 104
        %v1494 = vpop.permute.xlu0 %1493
        %v1496 = vsel %vm219, %v1494, 0.0
        %1497 = vadd.xlane.f32.xlu0 %v1496
        %v1498 = vpop.xlane.xlu0 %1497
        %v1499 = vmax.f32 %v1498, 1e-24
        %v1500 = vrsqrt.pop %v1499
        %v1501 = vmul.f32 %v1500, %v1499
        %v1502 = vmul.f32 %v1501, %v1500
        %v1503 = vmul.f32 0.5, %v1502
        %v1504 = vsub.f32 1.5, %v1503
        %v1505 = vmul.f32 %v1500, %v1504
        %vm1506 = vweird.f32 %v1499
        %vm1507 = vweird.f32 %v1500
        %vm1508 = vmor %vm1506, %vm1507
        %v1509 = vsel %vm1508, %v1500, %v1505
        %v1510 = vmul.f32 %v217, %v1509
        %v1511 = vmul.f32 %v1509, %v1509
        %v1512 = vmul.f32 %v1498, %v1511
        %v1513 = vpack.c.bf16 %v1510, %v1510
        %1515 = vrot.lane.b32.xlu0 %v1513, 104
        %v1516 = vpop.permute.xlu0 %1515
        %v1518 = vsel %vm219, %v1516, 0
        %v1521 = vsel %vm241, %v1492, 0
        %1523 = vmatpush.bf16.msra.mxu0 0
        %1524 = vmatpush.bf16.msra.mxu0 0
        %1525 = vmatpush.bf16.msra.mxu0 0
        %1526 = vmatpush.bf16.msra.mxu0 0
        %1527 = vmatpush.bf16.msra.mxu0 0
        %1528 = vmatpush.bf16.msra.mxu0 0
        %1529 = vmatpush.bf16.msra.mxu0 0
        %1530 = vmatpush.bf16.msra.mxu0 %v1521
        %1531 = vmatmul.bf16.gmra.mxu0 %v1518
        %v1532 = vpop.f32.mrf.mxu0
        %v1533 = vadd.f32 0.0, %v1532
        %v1534 = vpop.f32.mrf.mxu0
        %1535 = vdwg.mxu0
        %v1536 = vmul.f32 %v1512, 0.5
        %v1537 = vsub.f32 %v1533, %v1536
        %v1538 = vmul.f32 %v1537, 1.442695
        %v1539 = vpow.pop %v1538
        %v1540 = vmul.f32 %v1539, 0.25
        %v1541 = vmul.f32 %v1540, %v1540
        %v1542 = vsel %vm264, %v1541, 0.0
        %v1543 = vrot.slane %v1542, 4
        %v1544 = vadd.f32 %v1542, %v1543
        %v1545 = vrot.slane %v1544, 2
        %v1546 = vadd.f32 %v1544, %v1545
        %v1547 = vrot.slane %v1546, 1
        %v1548 = vadd.f32 %v1546, %v1547
        %v1549 = vmax.f32 %v1548, 1e-24
        %v1550 = vrsqrt.pop %v1549
        %v1551 = vmul.f32 %v1550, %v1549
        %v1552 = vmul.f32 %v1551, %v1550
        %v1553 = vmul.f32 0.5, %v1552
        %v1554 = vsub.f32 1.5, %v1553
        %v1555 = vmul.f32 %v1550, %v1554
        %vm1556 = vweird.f32 %v1549
        %vm1557 = vweird.f32 %v1550
        %vm1558 = vmor %vm1556, %vm1557
        %v1559 = vsel %vm1558, %v1550, %v1555
        %v1560 = vmul.f32 %v1540, %v1559
        %v1561 = vpack.c.bf16 %v1560, %v1560
        %1562 = vxpose.xlu0.c.b16.start [1/8] %v1561, 128
        %1563 = vxpose.xlu0.c.b16.cont [2/8] 0, 128
        %1564 = vxpose.xlu0.c.b16.cont [3/8] 0, 128
        %1565 = vxpose.xlu0.c.b16.cont [4/8] 0, 128
        %1566 = vxpose.xlu0.c.b16.cont [5/8] 0, 128
        %1567 = vxpose.xlu0.c.b16.cont [6/8] 0, 128
        %1568 = vxpose.xlu0.c.b16.cont [7/8] 0, 128
        %1569 = vxpose.xlu0.c.b16.end [8/8] 0, 128
        %v1570 = vpop.trf.xlu0
        %v1571 = vpop.trf.xlu0
        %v1572 = vpop.trf.xlu0
        %v1573 = vpop.trf.xlu0
        %v1574 = vpop.trf.xlu0
        %v1575 = vpop.trf.xlu0
        %v1576 = vpop.trf.xlu0
        %v1577 = vpop.trf.xlu0
        %v1579 = vsel %vm219, %v1570, 0
        %v1582 = vsel %vm241, %v1561, 0
        %1584 = vmatpush.bf16.msra.mxu0 0
        %1585 = vmatpush.bf16.msra.mxu0 0
        %1586 = vmatpush.bf16.msra.mxu0 0
        %1587 = vmatpush.bf16.msra.mxu0 0
        %1588 = vmatpush.bf16.msra.mxu0 0
        %1589 = vmatpush.bf16.msra.mxu0 0
        %1590 = vmatpush.bf16.msra.mxu0 0
        %1591 = vmatpush.bf16.msra.mxu0 %v1582
        %1592 = vmatmul.bf16.gmra.mxu0 %v1579
        %v1593 = vpop.f32.mrf.mxu0
        %v1594 = vadd.f32 0.0, %v1593
        %v1595 = vpop.f32.mrf.mxu0
        %v1596 = vadd.f32 0.0, %v1595
        %1597 = vdwg.mxu0
        %1598 = vrot.lane.b32.xlu0 %v323, 72
        %v1599 = vpop.permute.xlu0 %1598
        %v1601 = vsel %vm241, %v1599, 0
        %1603 = vmatpush.bf16.msra.mxu0 0
        %1604 = vmatpush.bf16.msra.mxu0 0
        %1605 = vmatpush.bf16.msra.mxu0 0
        %1606 = vmatpush.bf16.msra.mxu0 0
        %1607 = vmatpush.bf16.msra.mxu0 0
        %1608 = vmatpush.bf16.msra.mxu0 0
        %1609 = vmatpush.bf16.msra.mxu0 0
        %1610 = vmatpush.bf16.msra.mxu0 %v1601
        %1611 = vmatmul.bf16.gmra.mxu0 %v1579
        %v1612 = vpop.f32.mrf.mxu0
        %v1613 = vadd.f32 0.0, %v1612
        %v1614 = vpop.f32.mrf.mxu0
        %v1615 = vadd.f32 0.0, %v1614
        %1616 = vdwg.mxu0
        %v1617 = vand.u32 2147483647, %v1594
        %v1618 = vand.u32 2147483647, %v1596
        %v1619 = vsel %vm264, %v1617, 0.0
        %1620 = vadd.xlane.f32.xlu0 %v1619
        %v1621 = vpop.xlane.xlu0 %1620
        %v1622 = vsel %vm264, %v1618, 0.0
        %1623 = vadd.xlane.f32.xlu0 %v1622
        %v1624 = vpop.xlane.xlu0 %1623
        %v1625 = vmax.f32 %v1621, %v1624
        %v1626 = vrot.slane %v1625, 4
        %v1627 = vmax.f32 %v1625, %v1626
        %v1628 = vrot.slane %v1627, 2
        %v1629 = vmax.f32 %v1627, %v1628
        %v1630 = vrot.slane %v1629, 1
        %v1631 = vmax.f32 %v1629, %v1630
        %s1632 = vtos %v1631
        %s1633 = sadd.f32 %s1632, 1.0
        %v1634 = vstv %s209
        %v1635 = vrcp.pop %v1634
        %v1636 = vmul.f32 %v1634, %v1635
        %v1637 = vsub.f32 1.0, %v1636
        %v1638 = vmul.f32 %v1635, %v1637
        %v1639 = vadd.f32 %v1635, %v1638
        %vm1640 = vweird.f32 %v1634
        %vm1641 = vweird.f32 %v1635
        %vm1642 = vmor %vm1640, %vm1641
        %v1643 = vsel %vm1642, %v1635, %v1639
        %v1644 = vand.u32 2147483647, %v1634
        %vm1645 = vcmp.eq.f32.partialorder %v1644, 8.507059e+37
        %v1646 = vand.u32 %v1634, 2147483648
        %v1647 = vor.u32 1.1754944e-38, %v1646
        %v1648 = vsel %vm1645, %v1647, %v1643
        %s1649 = vtos %v1648
        %s1650 = smul.f32 %s1633, %s1649
        %v1651 = vstv %s1650
        %v1652 = vrcp.pop %v1651
        %v1653 = vmul.f32 %v1651, %v1652
        %v1654 = vsub.f32 1.0, %v1653
        %v1655 = vmul.f32 %v1652, %v1654
        %v1656 = vadd.f32 %v1652, %v1655
        %vm1657 = vweird.f32 %v1651
        %vm1658 = vweird.f32 %v1652
        %vm1659 = vmor %vm1657, %vm1658
        %v1660 = vsel %vm1659, %v1652, %v1656
        %v1661 = vand.u32 2147483647, %v1651
        %vm1662 = vcmp.eq.f32.partialorder %v1661, 8.507059e+37
        %v1663 = vand.u32 %v1651, 2147483648
        %v1664 = vor.u32 1.1754944e-38, %v1663
        %v1665 = vsel %vm1662, %v1664, %v1660
        %s1666 = vtos %v1665
        %s1667 = smul.f32 %s211, %s1666
        %v1668 = vpack.c.bf16 %v1596, %v1594
        %1669 = vmatpush.bf16.msra.mxu0 0
        %1670 = vmatpush.bf16.msra.mxu0 0
        %1671 = vmatpush.bf16.msra.mxu0 0
        %1672 = vmatpush.bf16.msra.mxu0 0
        %1673 = vmatpush.bf16.msra.mxu0 0
        %1674 = vmatpush.bf16.msra.mxu0 0
        %1675 = vmatpush.bf16.msra.mxu0 0
        %1676 = vmatpush.bf16.msra.mxu0 %v1668
        %1677 = vmatmul.bf16.gmra.mxu0 %v401
        %v1678 = vpop.f32.mrf.mxu0
        %v1679 = vadd.f32 0.0, %v1678
        %v1680 = vpop.f32.mrf.mxu0
        %v1681 = vadd.f32 0.0, %v1680
        %1682 = vdwg.mxu0
        %v1683 = vpack.c.bf16 %v1681, %v1679
        %v1685 = vsel %vm264, %v1683, 0
        %1687 = vmatpush.bf16.msra.mxu0 0
        %1688 = vmatpush.bf16.msra.mxu0 0
        %1689 = vmatpush.bf16.msra.mxu0 0
        %1690 = vmatpush.bf16.msra.mxu0 0
        %1691 = vmatpush.bf16.msra.mxu0 0
        %1692 = vmatpush.bf16.msra.mxu0 0
        %1693 = vmatpush.bf16.msra.mxu0 0
        %1694 = vmatpush.bf16.msra.mxu0 %v399
        %1695 = vmatmul.bf16.gmra.mxu0 %v1685
        %v1696 = vpop.f32.mrf.mxu0
        %v1697 = vadd.f32 0.0, %v1696
        %v1698 = vpop.f32.mrf.mxu0
        %v1699 = vadd.f32 0.0, %v1698
        %1700 = vdwg.mxu0
        %v1701 = vstv %s1666
        %v1702 = vmul.f32 %v1697, %v1701
        %v1703 = vmul.f32 %v1699, %v1701
        %v1704 = vpack.c.bf16 %v1703, %v1702
        %v1705 = vmul.f32 %v1613, %v1701
        %v1706 = vmul.f32 %v1615, %v1701
        %vm1707 = vcmp.gt.f32.partialorder %v1613, 0.0
        %vm1708 = vcmp.gt.f32.partialorder %v1615, 0.0
        %vm1709 = vcmp.lt.f32.partialorder %v1613, 0.0
        %vm1710 = vcmp.lt.f32.partialorder %v1615, 0.0
        %v1711 = vsel %vm1709, -1.0, 0.0
        %v1712 = vsel %vm1710, -1.0, 0.0
        %v1713 = vsel %vm1707, 1.0, %v1711
        %v1714 = vsel %vm1708, 1.0, %v1712
        %v1715 = vand.u32 2147483647, %v1613
        %v1716 = vand.u32 2147483647, %v1615
        %v1717 = vsub.f32 %v1715, %v452
        %v1718 = vsub.f32 %v1716, %v452
        %v1719 = vmul.f32 %v1717, 0.5
        %v1720 = vmul.f32 %v1718, 0.5
        %v1721 = vmul.f32 %v1717, 0.044715
        %v1722 = vmul.f32 %v1718, 0.044715
        %v1723 = vmul.f32 %v1721, %v1717
        %v1724 = vmul.f32 %v1722, %v1718
        %v1725 = vmul.f32 %v1723, %v1717
        %v1726 = vmul.f32 %v1724, %v1718
        %v1727 = vadd.f32 %v1717, %v1725
        %v1728 = vadd.f32 %v1718, %v1726
        %v1729 = vmul.f32 %v1727, 0.7978846
        %v1730 = vmul.f32 %v1728, 0.7978846
        %v1731 = vtanh.pop %v1729
        %v1732 = vtanh.pop %v1730
        %v1733 = vadd.f32 %v1731, 1.0
        %v1734 = vadd.f32 %v1732, 1.0
        %v1735 = vmul.f32 %v1719, %v1733
        %v1736 = vmul.f32 %v1720, %v1734
        %v1737 = vmul.f32 %v1713, %v1735
        %v1738 = vmul.f32 %v1714, %v1736
        %v1739 = vpack.c.bf16 %v1738, %v1737
        %v1741 = vsel %vm264, %v1704, 0
        %1743 = vmatpush.bf16.msra.mxu0 0
        %1744 = vmatpush.bf16.msra.mxu0 0
        %1745 = vmatpush.bf16.msra.mxu0 0
        %1746 = vmatpush.bf16.msra.mxu0 0
        %1747 = vmatpush.bf16.msra.mxu0 0
        %1748 = vmatpush.bf16.msra.mxu0 0
        %1749 = vmatpush.bf16.msra.mxu0 0
        %1750 = vmatpush.bf16.msra.mxu0 %v1739
        %1751 = vmatmul.bf16.gmra.mxu0 %v1741
        %v1752 = vpop.f32.mrf.mxu0
        %v1753 = vadd.f32 0.0, %v1752
        %v1754 = vpop.f32.mrf.mxu0
        %v1755 = vadd.f32 0.0, %v1754
        %1756 = vdwg.mxu0
        %v1757 = vsub.f32 %v1737, %v1753
        %v1758 = vsub.f32 %v1738, %v1755
        %v1759 = vadd.f32 %v1757, %v1705
        %v1760 = vadd.f32 %v1758, %v1706
        %vm1761 = vcmp.gt.f32.partialorder %v1759, 0.0
        %vm1762 = vcmp.gt.f32.partialorder %v1760, 0.0
        %vm1763 = vcmp.lt.f32.partialorder %v1759, 0.0
        %vm1764 = vcmp.lt.f32.partialorder %v1760, 0.0
        %v1765 = vsel %vm1763, -1.0, 0.0
        %v1766 = vsel %vm1764, -1.0, 0.0
        %v1767 = vsel %vm1761, 1.0, %v1765
        %v1768 = vsel %vm1762, 1.0, %v1766
        %v1769 = vand.u32 2147483647, %v1759
        %v1770 = vand.u32 2147483647, %v1760
        %v1771 = vstv %s1667
        %v1772 = vsub.f32 %v1769, %v1771
        %v1773 = vsub.f32 %v1770, %v1771
        %v1774 = vmul.f32 %v1772, 0.5
        %v1775 = vmul.f32 %v1773, 0.5
        %v1776 = vmul.f32 %v1772, 0.044715
        %v1777 = vmul.f32 %v1773, 0.044715
        %v1778 = vmul.f32 %v1776, %v1772
        %v1779 = vmul.f32 %v1777, %v1773
        %v1780 = vmul.f32 %v1778, %v1772
        %v1781 = vmul.f32 %v1779, %v1773
        %v1782 = vadd.f32 %v1772, %v1780
        %v1783 = vadd.f32 %v1773, %v1781
        %v1784 = vmul.f32 %v1782, 0.7978846
        %v1785 = vmul.f32 %v1783, 0.7978846
        %v1786 = vtanh.pop %v1784
        %v1787 = vtanh.pop %v1785
        %v1788 = vadd.f32 %v1786, 1.0
        %v1789 = vadd.f32 %v1787, 1.0
        %v1790 = vmul.f32 %v1774, %v1788
        %v1791 = vmul.f32 %v1775, %v1789
        %v1792 = vmul.f32 %v1767, %v1790
        %v1793 = vmul.f32 %v1768, %v1791
        %v1794 = vpack.c.bf16 %v1793, %v1792
        %1795 = vmatpush.bf16.msra.mxu0 0
        %1796 = vmatpush.bf16.msra.mxu0 0
        %1797 = vmatpush.bf16.msra.mxu0 0
        %1798 = vmatpush.bf16.msra.mxu0 0
        %1799 = vmatpush.bf16.msra.mxu0 0
        %1800 = vmatpush.bf16.msra.mxu0 0
        %1801 = vmatpush.bf16.msra.mxu0 0
        %1802 = vmatpush.bf16.msra.mxu0 %v1794
        %1803 = vmatmul.bf16.gmra.mxu0 %v1741
        %v1804 = vpop.f32.mrf.mxu0
        %v1805 = vadd.f32 0.0, %v1804
        %v1806 = vpop.f32.mrf.mxu0
        %v1807 = vadd.f32 0.0, %v1806
        %1808 = vdwg.mxu0
        %v1809 = vsub.f32 %v1792, %v1805
        %v1810 = vsub.f32 %v1793, %v1807
        %v1811 = vadd.f32 %v1809, %v1705
        %v1812 = vadd.f32 %v1810, %v1706
        %vm1813 = vcmp.gt.f32.partialorder %v1811, 0.0
        %vm1814 = vcmp.gt.f32.partialorder %v1812, 0.0
        %vm1815 = vcmp.lt.f32.partialorder %v1811, 0.0
        %vm1816 = vcmp.lt.f32.partialorder %v1812, 0.0
        %v1817 = vsel %vm1815, -1.0, 0.0
        %v1818 = vsel %vm1816, -1.0, 0.0
        %v1819 = vsel %vm1813, 1.0, %v1817
        %v1820 = vsel %vm1814, 1.0, %v1818
        %v1821 = vand.u32 2147483647, %v1811
        %v1822 = vand.u32 2147483647, %v1812
        %v1823 = vsub.f32 %v1821, %v1771
        %v1824 = vsub.f32 %v1822, %v1771
        %v1825 = vmul.f32 %v1823, 0.5
        %v1826 = vmul.f32 %v1824, 0.5
        %v1827 = vmul.f32 %v1823, 0.044715
        %v1828 = vmul.f32 %v1824, 0.044715
        %v1829 = vmul.f32 %v1827, %v1823
        %v1830 = vmul.f32 %v1828, %v1824
        %v1831 = vmul.f32 %v1829, %v1823
        %v1832 = vmul.f32 %v1830, %v1824
        %v1833 = vadd.f32 %v1823, %v1831
        %v1834 = vadd.f32 %v1824, %v1832
        %v1835 = vmul.f32 %v1833, 0.7978846
        %v1836 = vmul.f32 %v1834, 0.7978846
        %v1837 = vtanh.pop %v1835
        %v1838 = vtanh.pop %v1836
        %v1839 = vadd.f32 %v1837, 1.0
        %v1840 = vadd.f32 %v1838, 1.0
        %v1841 = vmul.f32 %v1825, %v1839
        %v1842 = vmul.f32 %v1826, %v1840
        %v1843 = vmul.f32 %v1819, %v1841
        %v1844 = vmul.f32 %v1820, %v1842
        %v1845 = vpack.c.bf16 %v1844, %v1843
        %1846 = vmatpush.bf16.msra.mxu0 0
        %1847 = vmatpush.bf16.msra.mxu0 0
        %1848 = vmatpush.bf16.msra.mxu0 0
        %1849 = vmatpush.bf16.msra.mxu0 0
        %1850 = vmatpush.bf16.msra.mxu0 0
        %1851 = vmatpush.bf16.msra.mxu0 0
        %1852 = vmatpush.bf16.msra.mxu0 0
        %1853 = vmatpush.bf16.msra.mxu0 %v1845
        %1854 = vmatmul.bf16.gmra.mxu0 %v1741
        %v1855 = vpop.f32.mrf.mxu0
        %v1856 = vadd.f32 0.0, %v1855
        %v1857 = vpop.f32.mrf.mxu0
        %v1858 = vadd.f32 0.0, %v1857
        %1859 = vdwg.mxu0
        %v1860 = vsub.f32 %v1843, %v1856
        %v1861 = vsub.f32 %v1844, %v1858
        %v1862 = vadd.f32 %v1860, %v1705
        %v1863 = vadd.f32 %v1861, %v1706
        %vm1864 = vcmp.gt.f32.partialorder %v1862, 0.0
        %vm1865 = vcmp.gt.f32.partialorder %v1863, 0.0
        %vm1866 = vcmp.lt.f32.partialorder %v1862, 0.0
        %vm1867 = vcmp.lt.f32.partialorder %v1863, 0.0
        %v1868 = vsel %vm1866, -1.0, 0.0
        %v1869 = vsel %vm1867, -1.0, 0.0
        %v1870 = vsel %vm1864, 1.0, %v1868
        %v1871 = vsel %vm1865, 1.0, %v1869
        %v1872 = vand.u32 2147483647, %v1862
        %v1873 = vand.u32 2147483647, %v1863
        %v1874 = vsub.f32 %v1872, %v1771
        %v1875 = vsub.f32 %v1873, %v1771
        %v1876 = vmul.f32 %v1874, 0.5
        %v1877 = vmul.f32 %v1875, 0.5
        %v1878 = vmul.f32 %v1874, 0.044715
        %v1879 = vmul.f32 %v1875, 0.044715
        %v1880 = vmul.f32 %v1878, %v1874
        %v1881 = vmul.f32 %v1879, %v1875
        %v1882 = vmul.f32 %v1880, %v1874
        %v1883 = vmul.f32 %v1881, %v1875
        %v1884 = vadd.f32 %v1874, %v1882
        %v1885 = vadd.f32 %v1875, %v1883
        %v1886 = vmul.f32 %v1884, 0.7978846
        %v1887 = vmul.f32 %v1885, 0.7978846
        %v1888 = vtanh.pop %v1886
        %v1889 = vtanh.pop %v1887
        %v1890 = vadd.f32 %v1888, 1.0
        %v1891 = vadd.f32 %v1889, 1.0
        %v1892 = vmul.f32 %v1876, %v1890
        %v1893 = vmul.f32 %v1877, %v1891
        %v1894 = vmul.f32 %v1870, %v1892
        %v1895 = vmul.f32 %v1871, %v1893
        %v1896 = vpack.c.bf16 %v1895, %v1894
        %v1897 = vsel %vm264, %v1561, 0
        %1899 = vmatpush.bf16.msra.mxu0 0
        %1900 = vmatpush.bf16.msra.mxu0 0
        %1901 = vmatpush.bf16.msra.mxu0 0
        %1902 = vmatpush.bf16.msra.mxu0 0
        %1903 = vmatpush.bf16.msra.mxu0 0
        %1904 = vmatpush.bf16.msra.mxu0 0
        %1905 = vmatpush.bf16.msra.mxu0 0
        %1906 = vmatpush.bf16.msra.mxu0 %v1896
        %1907 = vmatmul.bf16.gmra.mxu0 %v1897
        %v1908 = vpop.f32.mrf.mxu0
        %v1909 = vadd.f32 0.0, %v1908
        %v1910 = vpop.f32.mrf.mxu0
        %1911 = vdwg.mxu0
        %1913 = vrot.lane.b32.xlu0 %v1067, 8
        %v1914 = vpop.permute.xlu0 %1913
        %1917 = vrot.lane.b32.xlu0 %v1488, 16
        %v1918 = vpop.permute.xlu0 %1917
        %1921 = vrot.lane.b32.xlu0 %v1909, 24
        %v1922 = vpop.permute.xlu0 %1921
        %v1924 = vsel %vm219, %v645, %v1914
        %v1925 = vsel %vm264, %v1924, %v1918
        %vm1926 = vcmask 195584
        %v1927 = vsel %vm1926, %v1925, %v1922
        %v1928 = vpack.c.bf16 %v1927, %v1927
        %vm1929 = vcmask 257024
        %1930 = vst.msk [vmem:[%s206] sm:$0xf] %vm1929, %v1928
        %p1931 = scmp.lt.s32.totalorder %s16, 1
        %s1932 = scalar_select %p1931, %s16, 1
        %s1933 = smul.addr %s1932, 4
        %s1934 = scalar_lea.vmem %s4, %s1933
        // Predicated region
        $region41: #{vars_d_forward.4} parent=35 // pred_check
          %p1935 = pneg %p123
        $region42: #{vars_d_forward.4} parent=35 // pred_check_branch
          %1937 = sbr.rel (%p1935) target = $region44
        $region43: #{vars_d_forward.4} parent=35 // pred_region
          _
        $region44: #{vars_d_forward.4} parent=35 // pred_fallthru
          _
      $region36: #{vars_d_forward.4} parent=5 // pred_fallthru
        _
      %p1938 = scmp.le.s32.totalorder 2, %s11
      // Predicated region
      $region45: #{vars_d_forward.4} parent=5 // pred_check
        %p1939 = pneg %p1938
      $region46: #{vars_d_forward.4} parent=5 // pred_check_branch
        %1941 = sbr.rel (%p1939) target = $region48
      $region47: #{vars_d_forward.4} parent=5 // pred_region
        %s1942 = ssub.s32 %s11, 2
        // Predicated region
        $region49: #{vars_d_forward.4} parent=47 // pred_check
          %p1943 = pneg %p129
        $region50: #{vars_d_forward.4} parent=47 // pred_check_branch
          %1945 = sbr.rel (%p1943) target = $region52
        $region51: #{vars_d_forward.4} parent=47 // pred_region
          %p1946 = scmp.lt.s32.totalorder %s17, 1
          %s1947 = scalar_select %p1946, %s17, 1
          %s1948 = smul.addr %s1947, 4
          %s1949 = scalar_lea.vmem %s4, %s1948
        $region52: #{vars_d_forward.4} parent=47 // pred_fallthru
          _
      $region48: #{vars_d_forward.4} parent=5 // pred_fallthru
        _
    $region6: #{vars_d_forward.4} parent=1 // loop_footer
      %s15 = sadd.s32 1, %s11
    $region7: #{vars_d_forward.4} parent=1 // loop_footer_branch
      %10 = sbr.rel target = $region3
    $region8: #{vars_d_forward.4} parent=1 // loop_exit
      _
    %1950 = vsyncpa [#allocation3], 1
    %s1951 = scalar_lea.sflag [#allocation3], 1
    %1952 = vsyncpa %s1951, 1

</llo_original>
